<compile_context>
chip_gen: v7x
topology: tpu7x:2x2x1
jax: 0.10.0
libtpu: 0.0.40
codegen_flags: <defaults>
</compile_context>

<pallas_src>
import functools

import jax
import jax.numpy as jnp
from jax.experimental import pallas as pl
from jax.experimental.pallas import tpu as pltpu

NUM_HEADS = 8
LANE = 128


def _largest_divisor_leq(n, cap):
    for d in range(max(1, min(n, cap)), 0, -1):
        if n % d == 0:
            return d
    return 1


def _pick_query_tile(nx, cap=512):
    if nx <= cap:
        return nx
    for d in range(cap, 0, -1):
        if nx % d == 0 and d % 8 == 0:
            return d
    return nx


def _attention_kernel(x_ref, kv_ref, wq_ref, wk_ref, wv_ref, wproj_ref,
                      bproj_ref, o_ref, *, num_heads, head_dim):
    # x_ref:     (bblk, tq, cp)   query-token block (cp = lane-padded channels)
    # kv_ref:    (bblk, nk, cp)   key/value token block
    # wq/wk/wv:  (cp, cp)         projection weights (zero padded)
    # wproj_ref: (cp, cp)         output projection weight (zero padded)
    # bproj_ref: (1, cp)          output projection bias  (zero padded)
    # o_ref:     (bblk, tq, cp)
    bblk, tq, cp = x_ref.shape
    nk = kv_ref.shape[1]
    mq = bblk * tq
    mk = bblk * nk
    scale = float(head_dim) ** -0.5
    cdt = x_ref.dtype                      # MXU operand dtype = input dtype

    # Flatten batch block into rows: tall-M, lane-aligned projection matmuls.
    x2 = x_ref[...].reshape(mq, cp)
    kv2 = kv_ref[...].reshape(mk, cp)

    q2 = jnp.dot(x2, wq_ref[...], preferred_element_type=jnp.float32).astype(cdt)
    k2 = jnp.dot(kv2, wk_ref[...], preferred_element_type=jnp.float32).astype(cdt)
    v2 = jnp.dot(kv2, wv_ref[...], preferred_element_type=jnp.float32).astype(cdt)

    # Per-head attention; head output feeds straight into the matching
    # sublane row-block of Wproj (no concatenate of head outputs).
    acc = jnp.zeros((mq, cp), jnp.float32)
    for h in range(num_heads):
        lo = h * head_dim
        hi = lo + head_dim
        qh = q2[:, lo:hi].reshape(bblk, tq, head_dim)
        kh = k2[:, lo:hi].reshape(bblk, nk, head_dim)
        vh = v2[:, lo:hi].reshape(bblk, nk, head_dim)

        # scores (f32) + numerically stable softmax over the key axis.
        s = jnp.einsum('bqd,bkd->bqk', qh, kh,
                       preferred_element_type=jnp.float32) * scale
        s = s - jnp.max(s, axis=-1, keepdims=True)
        p = jnp.exp(s)
        p = p * pl.reciprocal(jnp.sum(p, axis=-1, keepdims=True), approx=True)

        oh = jnp.einsum('bqk,bkd->bqd', p.astype(cdt), vh,
                        preferred_element_type=jnp.float32)      # (bblk,tq,hd)
        acc = acc + jnp.dot(oh.reshape(mq, head_dim).astype(cdt),
                            wproj_ref[lo:hi, :],                 # sublane slice
                            preferred_element_type=jnp.float32)

    out = acc + bproj_ref[...].astype(jnp.float32)
    o_ref[...] = out.reshape(bblk, tq, cp).astype(o_ref.dtype)


def attention_pallas(x, kv, wq, wkv, wproj, bproj, *, num_heads=NUM_HEADS):
    Bx, Nx, Cx = x.shape
    B, N, C = kv.shape
    assert Bx == B and Cx == C
    assert C % num_heads == 0
    head_dim = C // num_heads

    dt = x.dtype
    cp = -(-C // LANE) * LANE          # channel dim padded to a lane multiple
    pad_c = cp - C

    # Split the fused kv weight and cast all params to the activation dtype so
    # the MXU sees bf16 (or f32) operands directly — no in-kernel upcasts.
    wk = wkv[:, :C]
    wv = wkv[:, C:]

    def pad_mat(w):
        w = w.astype(dt)
        return jnp.pad(w, ((0, pad_c), (0, pad_c))) if pad_c else w

    wq_p, wk_p, wv_p, wproj_p = (pad_mat(w) for w in (wq, wk, wv, wproj))
    bproj_p = bproj.astype(dt)
    if pad_c:
        bproj_p = jnp.pad(bproj_p, (0, pad_c))
    bproj_p = bproj_p.reshape(1, cp)

    def pad_act(a):
        a = a.astype(dt)
        return jnp.pad(a, ((0, 0), (0, 0), (0, pad_c))) if pad_c else a

    x_p, kv_p = pad_act(x), pad_act(kv)

    # Query tile + batch block: several batch elements per grid step (tall M
    # for the MXU) while keeping the resident K/V block within a conservative
    # VMEM budget.  Query-tile axis gives a second parallel grid dimension.
    tq = _pick_query_tile(Nx)
    itemsize = jnp.dtype(dt).itemsize
    per_batch_bytes = (N + tq) * cp * itemsize
    cap = max(1, min(max(1, 512 // max(tq, 1)),
                     (8 * 1024 * 1024) // max(per_batch_bytes, 1)))
    if Nx % 8 != 0 or N % 8 != 0:
        cap = 1                         # keep in-kernel reshapes tile-aligned
    bblk = _largest_divisor_leq(B, cap)

    kernel = functools.partial(_attention_kernel,
                               num_heads=num_heads, head_dim=head_dim)
    out_p = pl.pallas_call(
        kernel,
        out_shape=jax.ShapeDtypeStruct((B, Nx, cp), dt),
        grid_spec=pltpu.PrefetchScalarGridSpec(
            num_scalar_prefetch=0,
            grid=(B // bblk, Nx // tq),
            in_specs=[
                pl.BlockSpec((bblk, tq, cp), lambda b, qi: (b, qi, 0)),   # x
                pl.BlockSpec((bblk, N, cp), lambda b, qi: (b, 0, 0)),     # kv
                pl.BlockSpec((cp, cp), lambda b, qi: (0, 0)),             # wq
                pl.BlockSpec((cp, cp), lambda b, qi: (0, 0)),             # wk
                pl.BlockSpec((cp, cp), lambda b, qi: (0, 0)),             # wv
                pl.BlockSpec((cp, cp), lambda b, qi: (0, 0)),             # wproj
                pl.BlockSpec((1, cp), lambda b, qi: (0, 0)),              # bias
            ],
            out_specs=pl.BlockSpec((bblk, tq, cp), lambda b, qi: (b, qi, 0)),
        ),
        compiler_params=pltpu.CompilerParams(
            dimension_semantics=("parallel", "parallel"),
            vmem_limit_bytes=64 * 1024 * 1024),
    )(x_p, kv_p, wq_p, wk_p, wv_p, wproj_p, bproj_p)

    return out_p[:, :, :C] if pad_c else out_p


def attention_reference(x, kv, wq, wkv, wproj, bproj, *, num_heads=NUM_HEADS):
    """Pure-JAX reference mirroring the PyTorch forward pass."""
    Bx, Nx, Cx = x.shape
    B, N, C = kv.shape
    hd = C // num_heads
    scale = float(hd) ** (-0.5)

    q = (x @ wq).reshape(Bx, Nx, num_heads, hd).transpose(0, 2, 1, 3)
    kvp = (kv @ wkv).reshape(B, N, 2, num_heads, hd).transpose(2, 0, 3, 1, 4)
    k, v = kvp[0], kvp[1]

    attn = jnp.einsum('bhqd,bhkd->bhqk', q, k) * scale
    attn = jax.nn.softmax(attn, axis=-1)
    out = jnp.einsum('bhqk,bhkd->bhqd', attn, v)
    out = out.transpose(0, 2, 1, 3).reshape(Bx, Nx, -1)
    return out @ wproj + bproj


if __name__ == "__main__":
    # dim C = 32, num_heads = 8 (head_dim = 4), B = 2, Nx = 8 queries, N = 16 kv.
    B, Nx, N, C = 2, 8, 16, 32

    key = jax.random.PRNGKey(0)
    kx, kkv, kwq, kwkv, kwp, kbp = jax.random.split(key, 6)

    x = jax.random.normal(kx, (B, Nx, C), dtype=jnp.float32)
    kv = jax.random.normal(kkv, (B, N, C), dtype=jnp.float32)

    # qkv_bias=False -> no q/kv bias; proj has bias.  Weights stored as
    # (in_features, out_features) so y = x @ W.
    wq = jax.random.normal(kwq, (C, C), dtype=jnp.float32) * 0.05
    wkv = jax.random.normal(kwkv, (C, 2 * C), dtype=jnp.float32) * 0.05
    wproj = jax.random.normal(kwp, (C, C), dtype=jnp.float32) * 0.05
    bproj = jax.random.normal(kbp, (C,), dtype=jnp.float32) * 0.05

    out = attention_pallas(x, kv, wq, wkv, wproj, bproj)
    out = jax.block_until_ready(out)

    ref = attention_reference(x, kv, wq, wkv, wproj, bproj)
    assert out.shape == (B, Nx, C)
    err = float(jnp.max(jnp.abs(out - ref)))
    # Slightly loosened tolerance: softmax denominator uses the approximate
    # EUP reciprocal (pl.reciprocal(approx=True)).
    assert err < 5e-3, f"max abs err = {err}"

    print("KERNEL_OK")
</pallas_src>

<mosaic_0001>
module attributes {stable_mosaic.version = 11 : i64} {
  func.func @_attention_kernel(%arg0: i32, %arg1: i32, %arg2: memref<2x8x128xf32, #tpu.memory_space<vmem>>, %arg3: memref<2x16x128xf32, #tpu.memory_space<vmem>>, %arg4: memref<128x128xf32, #tpu.memory_space<vmem>>, %arg5: memref<128x128xf32, #tpu.memory_space<vmem>>, %arg6: memref<128x128xf32, #tpu.memory_space<vmem>>, %arg7: memref<128x128xf32, #tpu.memory_space<vmem>>, %arg8: memref<1x128xf32, #tpu.memory_space<vmem>>, %arg9: memref<2x8x128xf32, #tpu.memory_space<vmem>>) attributes {dimension_semantics = [#tpu.dimension_semantics<parallel>, #tpu.dimension_semantics<parallel>], iteration_bounds = array<i64: 1, 1>, scalar_prefetch = 0 : i64, scratch_operands = 0 : i64, tpu.core_type = #tpu.core_type<tc>, window_params = [{transform_indices = @transform_0, window_bounds = array<i64: 2, 8, 128>}, {transform_indices = @transform_1, window_bounds = array<i64: 2, 16, 128>}, {pipeline_mode = #tpu.pipeline_mode<synchronous>, transform_indices = @transform_2, window_bounds = array<i64: 128, 128>}, {pipeline_mode = #tpu.pipeline_mode<synchronous>, transform_indices = @transform_3, window_bounds = array<i64: 128, 128>}, {pipeline_mode = #tpu.pipeline_mode<synchronous>, transform_indices = @transform_4, window_bounds = array<i64: 128, 128>}, {pipeline_mode = #tpu.pipeline_mode<synchronous>, transform_indices = @transform_5, window_bounds = array<i64: 128, 128>}, {pipeline_mode = #tpu.pipeline_mode<synchronous>, transform_indices = @transform_6, window_bounds = array<i64: 1, 128>}, {transform_indices = @transform_7, window_bounds = array<i64: 2, 8, 128>}]} {
    %c0 = arith.constant 0 : index
    %c0_0 = arith.constant 0 : index
    %c0_1 = arith.constant 0 : index
    %0 = vector.load %arg2[%c0, %c0_0, %c0_1] : memref<2x8x128xf32, #tpu.memory_space<vmem>>, vector<2x8x128xf32>
    %1 = vector.shape_cast %0 : vector<2x8x128xf32> to vector<16x128xf32>
    %c0_2 = arith.constant 0 : index
    %c0_3 = arith.constant 0 : index
    %c0_4 = arith.constant 0 : index
    %2 = vector.load %arg3[%c0_2, %c0_3, %c0_4] : memref<2x16x128xf32, #tpu.memory_space<vmem>>, vector<2x16x128xf32>
    %3 = vector.shape_cast %2 : vector<2x16x128xf32> to vector<32x128xf32>
    %c0_5 = arith.constant 0 : index
    %c0_6 = arith.constant 0 : index
    %4 = vector.load %arg4[%c0_5, %c0_6] : memref<128x128xf32, #tpu.memory_space<vmem>>, vector<128x128xf32>
    %cst = arith.constant dense<0.000000e+00> : vector<16x128xf32>
    %5 = tpu.matmul %1, %4, %cst {dimension_numbers = #tpu.dot_dimension_numbers<[1], [0], [0], [1], [0, 0, 1, 1], [], []>} : vector<16x128xf32>, vector<128x128xf32>, vector<16x128xf32> -> vector<16x128xf32>
    %c0_7 = arith.constant 0 : index
    %c0_8 = arith.constant 0 : index
    %6 = vector.load %arg5[%c0_7, %c0_8] : memref<128x128xf32, #tpu.memory_space<vmem>>, vector<128x128xf32>
    %cst_9 = arith.constant dense<0.000000e+00> : vector<32x128xf32>
    %7 = tpu.matmul %3, %6, %cst_9 {dimension_numbers = #tpu.dot_dimension_numbers<[1], [0], [0], [1], [0, 0, 1, 1], [], []>} : vector<32x128xf32>, vector<128x128xf32>, vector<32x128xf32> -> vector<32x128xf32>
    %c0_10 = arith.constant 0 : index
    %c0_11 = arith.constant 0 : index
    %8 = vector.load %arg6[%c0_10, %c0_11] : memref<128x128xf32, #tpu.memory_space<vmem>>, vector<128x128xf32>
    %cst_12 = arith.constant dense<0.000000e+00> : vector<32x128xf32>
    %9 = tpu.matmul %3, %8, %cst_12 {dimension_numbers = #tpu.dot_dimension_numbers<[1], [0], [0], [1], [0, 0, 1, 1], [], []>} : vector<32x128xf32>, vector<128x128xf32>, vector<32x128xf32> -> vector<32x128xf32>
    %cst_13 = arith.constant 0.000000e+00 : f32
    %10 = vector.broadcast %cst_13 : f32 to vector<16x128xf32>
    %11 = vector.extract_strided_slice %5 {offsets = [0, 0], sizes = [16, 4], strides = [1, 1]} : vector<16x128xf32> to vector<16x4xf32>
    %12 = vector.shape_cast %11 : vector<16x4xf32> to vector<2x8x4xf32>
    %13 = vector.extract_strided_slice %7 {offsets = [0, 0], sizes = [32, 4], strides = [1, 1]} : vector<32x128xf32> to vector<32x4xf32>
    %14 = vector.shape_cast %13 : vector<32x4xf32> to vector<2x16x4xf32>
    %15 = vector.extract_strided_slice %9 {offsets = [0, 0], sizes = [32, 4], strides = [1, 1]} : vector<32x128xf32> to vector<32x4xf32>
    %16 = vector.shape_cast %15 : vector<32x4xf32> to vector<2x16x4xf32>
    "tpu.trace_start"() <{level = 10 : i32, message = "bqd,bkd->bqk"}> : () -> ()
    %cst_14 = arith.constant dense<0.000000e+00> : vector<2x8x16xf32>
    %17 = tpu.matmul %12, %14, %cst_14 {dimension_numbers = #tpu.dot_dimension_numbers<[2], [2], [1], [1], [0, 0, 0, 1, 1, 1], [0], [0]>} : vector<2x8x4xf32>, vector<2x16x4xf32>, vector<2x8x16xf32> -> vector<2x8x16xf32>
    "tpu.trace_stop"() : () -> ()
    %cst_15 = arith.constant 5.000000e-01 : f32
    %18 = vector.broadcast %cst_15 : f32 to vector<2x8x16xf32>
    %19 = arith.mulf %17, %18 : vector<2x8x16xf32>
    %cst_16 = arith.constant dense<0xFF800000> : vector<2x8xf32>
    %20 = vector.multi_reduction <maximumf>, %19, %cst_16 [2] : vector<2x8x16xf32> to vector<2x8xf32>
    %21 = vector.shape_cast %20 : vector<2x8xf32> to vector<2x8x1xf32>
    %22 = vector.broadcast %21 : vector<2x8x1xf32> to vector<2x8x16xf32>
    %23 = arith.subf %19, %22 : vector<2x8x16xf32>
    %24 = math.exp %23 : vector<2x8x16xf32>
    %cst_17 = arith.constant dense<0.000000e+00> : vector<2x8xf32>
    %25 = vector.multi_reduction <add>, %24, %cst_17 [2] : vector<2x8x16xf32> to vector<2x8xf32>
    %26 = vector.shape_cast %25 : vector<2x8xf32> to vector<2x8x1xf32>
    %27 = tpu.reciprocal %26 {approx = true} : vector<2x8x1xf32> -> vector<2x8x1xf32>
    %28 = vector.broadcast %27 : vector<2x8x1xf32> to vector<2x8x16xf32>
    %29 = arith.mulf %24, %28 : vector<2x8x16xf32>
    "tpu.trace_start"() <{level = 10 : i32, message = "bqk,bkd->bqd"}> : () -> ()
    %cst_18 = arith.constant dense<0.000000e+00> : vector<2x8x4xf32>
    %30 = tpu.matmul %29, %16, %cst_18 {dimension_numbers = #tpu.dot_dimension_numbers<[2], [1], [1], [2], [0, 0, 0, 1, 1, 2], [0], [0]>} : vector<2x8x16xf32>, vector<2x16x4xf32>, vector<2x8x4xf32> -> vector<2x8x4xf32>
    "tpu.trace_stop"() : () -> ()
    %31 = vector.shape_cast %30 : vector<2x8x4xf32> to vector<16x4xf32>
    %c0_19 = arith.constant 0 : index
    %c0_20 = arith.constant 0 : index
    %32 = vector.load %arg7[%c0_19, %c0_20] : memref<128x128xf32, #tpu.memory_space<vmem>>, vector<4x128xf32>
    %cst_21 = arith.constant dense<0.000000e+00> : vector<16x128xf32>
    %33 = tpu.matmul %31, %32, %cst_21 {dimension_numbers = #tpu.dot_dimension_numbers<[1], [0], [0], [1], [0, 0, 1, 1], [], []>} : vector<16x4xf32>, vector<4x128xf32>, vector<16x128xf32> -> vector<16x128xf32>
    %34 = arith.addf %10, %33 : vector<16x128xf32>
    %35 = vector.extract_strided_slice %5 {offsets = [0, 4], sizes = [16, 4], strides = [1, 1]} : vector<16x128xf32> to vector<16x4xf32>
    %36 = vector.shape_cast %35 : vector<16x4xf32> to vector<2x8x4xf32>
    %37 = vector.extract_strided_slice %7 {offsets = [0, 4], sizes = [32, 4], strides = [1, 1]} : vector<32x128xf32> to vector<32x4xf32>
    %38 = vector.shape_cast %37 : vector<32x4xf32> to vector<2x16x4xf32>
    %39 = vector.extract_strided_slice %9 {offsets = [0, 4], sizes = [32, 4], strides = [1, 1]} : vector<32x128xf32> to vector<32x4xf32>
    %40 = vector.shape_cast %39 : vector<32x4xf32> to vector<2x16x4xf32>
    "tpu.trace_start"() <{level = 10 : i32, message = "bqd,bkd->bqk"}> : () -> ()
    %cst_22 = arith.constant dense<0.000000e+00> : vector<2x8x16xf32>
    %41 = tpu.matmul %36, %38, %cst_22 {dimension_numbers = #tpu.dot_dimension_numbers<[2], [2], [1], [1], [0, 0, 0, 1, 1, 1], [0], [0]>} : vector<2x8x4xf32>, vector<2x16x4xf32>, vector<2x8x16xf32> -> vector<2x8x16xf32>
    "tpu.trace_stop"() : () -> ()
    %cst_23 = arith.constant 5.000000e-01 : f32
    %42 = vector.broadcast %cst_23 : f32 to vector<2x8x16xf32>
    %43 = arith.mulf %41, %42 : vector<2x8x16xf32>
    %cst_24 = arith.constant dense<0xFF800000> : vector<2x8xf32>
    %44 = vector.multi_reduction <maximumf>, %43, %cst_24 [2] : vector<2x8x16xf32> to vector<2x8xf32>
    %45 = vector.shape_cast %44 : vector<2x8xf32> to vector<2x8x1xf32>
    %46 = vector.broadcast %45 : vector<2x8x1xf32> to vector<2x8x16xf32>
    %47 = arith.subf %43, %46 : vector<2x8x16xf32>
    %48 = math.exp %47 : vector<2x8x16xf32>
    %cst_25 = arith.constant dense<0.000000e+00> : vector<2x8xf32>
    %49 = vector.multi_reduction <add>, %48, %cst_25 [2] : vector<2x8x16xf32> to vector<2x8xf32>
    %50 = vector.shape_cast %49 : vector<2x8xf32> to vector<2x8x1xf32>
    %51 = tpu.reciprocal %50 {approx = true} : vector<2x8x1xf32> -> vector<2x8x1xf32>
    %52 = vector.broadcast %51 : vector<2x8x1xf32> to vector<2x8x16xf32>
    %53 = arith.mulf %48, %52 : vector<2x8x16xf32>
    "tpu.trace_start"() <{level = 10 : i32, message = "bqk,bkd->bqd"}> : () -> ()
    %cst_26 = arith.constant dense<0.000000e+00> : vector<2x8x4xf32>
    %54 = tpu.matmul %53, %40, %cst_26 {dimension_numbers = #tpu.dot_dimension_numbers<[2], [1], [1], [2], [0, 0, 0, 1, 1, 2], [0], [0]>} : vector<2x8x16xf32>, vector<2x16x4xf32>, vector<2x8x4xf32> -> vector<2x8x4xf32>
    "tpu.trace_stop"() : () -> ()
    %55 = vector.shape_cast %54 : vector<2x8x4xf32> to vector<16x4xf32>
    %c4 = arith.constant 4 : index
    %c0_27 = arith.constant 0 : index
    %56 = vector.load %arg7[%c4, %c0_27] : memref<128x128xf32, #tpu.memory_space<vmem>>, vector<4x128xf32>
    %cst_28 = arith.constant dense<0.000000e+00> : vector<16x128xf32>
    %57 = tpu.matmul %55, %56, %cst_28 {dimension_numbers = #tpu.dot_dimension_numbers<[1], [0], [0], [1], [0, 0, 1, 1], [], []>} : vector<16x4xf32>, vector<4x128xf32>, vector<16x128xf32> -> vector<16x128xf32>
    %58 = arith.addf %34, %57 : vector<16x128xf32>
    %59 = vector.extract_strided_slice %5 {offsets = [0, 8], sizes = [16, 4], strides = [1, 1]} : vector<16x128xf32> to vector<16x4xf32>
    %60 = vector.shape_cast %59 : vector<16x4xf32> to vector<2x8x4xf32>
    %61 = vector.extract_strided_slice %7 {offsets = [0, 8], sizes = [32, 4], strides = [1, 1]} : vector<32x128xf32> to vector<32x4xf32>
    %62 = vector.shape_cast %61 : vector<32x4xf32> to vector<2x16x4xf32>
    %63 = vector.extract_strided_slice %9 {offsets = [0, 8], sizes = [32, 4], strides = [1, 1]} : vector<32x128xf32> to vector<32x4xf32>
    %64 = vector.shape_cast %63 : vector<32x4xf32> to vector<2x16x4xf32>
    "tpu.trace_start"() <{level = 10 : i32, message = "bqd,bkd->bqk"}> : () -> ()
    %cst_29 = arith.constant dense<0.000000e+00> : vector<2x8x16xf32>
    %65 = tpu.matmul %60, %62, %cst_29 {dimension_numbers = #tpu.dot_dimension_numbers<[2], [2], [1], [1], [0, 0, 0, 1, 1, 1], [0], [0]>} : vector<2x8x4xf32>, vector<2x16x4xf32>, vector<2x8x16xf32> -> vector<2x8x16xf32>
    "tpu.trace_stop"() : () -> ()
    %cst_30 = arith.constant 5.000000e-01 : f32
    %66 = vector.broadcast %cst_30 : f32 to vector<2x8x16xf32>
    %67 = arith.mulf %65, %66 : vector<2x8x16xf32>
    %cst_31 = arith.constant dense<0xFF800000> : vector<2x8xf32>
    %68 = vector.multi_reduction <maximumf>, %67, %cst_31 [2] : vector<2x8x16xf32> to vector<2x8xf32>
    %69 = vector.shape_cast %68 : vector<2x8xf32> to vector<2x8x1xf32>
    %70 = vector.broadcast %69 : vector<2x8x1xf32> to vector<2x8x16xf32>
    %71 = arith.subf %67, %70 : vector<2x8x16xf32>
    %72 = math.exp %71 : vector<2x8x16xf32>
    %cst_32 = arith.constant dense<0.000000e+00> : vector<2x8xf32>
    %73 = vector.multi_reduction <add>, %72, %cst_32 [2] : vector<2x8x16xf32> to vector<2x8xf32>
    %74 = vector.shape_cast %73 : vector<2x8xf32> to vector<2x8x1xf32>
    %75 = tpu.reciprocal %74 {approx = true} : vector<2x8x1xf32> -> vector<2x8x1xf32>
    %76 = vector.broadcast %75 : vector<2x8x1xf32> to vector<2x8x16xf32>
    %77 = arith.mulf %72, %76 : vector<2x8x16xf32>
    "tpu.trace_start"() <{level = 10 : i32, message = "bqk,bkd->bqd"}> : () -> ()
    %cst_33 = arith.constant dense<0.000000e+00> : vector<2x8x4xf32>
    %78 = tpu.matmul %77, %64, %cst_33 {dimension_numbers = #tpu.dot_dimension_numbers<[2], [1], [1], [2], [0, 0, 0, 1, 1, 2], [0], [0]>} : vector<2x8x16xf32>, vector<2x16x4xf32>, vector<2x8x4xf32> -> vector<2x8x4xf32>
    "tpu.trace_stop"() : () -> ()
    %79 = vector.shape_cast %78 : vector<2x8x4xf32> to vector<16x4xf32>
    %c8 = arith.constant 8 : index
    %c0_34 = arith.constant 0 : index
    %80 = vector.load %arg7[%c8, %c0_34] : memref<128x128xf32, #tpu.memory_space<vmem>>, vector<4x128xf32>
    %cst_35 = arith.constant dense<0.000000e+00> : vector<16x128xf32>
    %81 = tpu.matmul %79, %80, %cst_35 {dimension_numbers = #tpu.dot_dimension_numbers<[1], [0], [0], [1], [0, 0, 1, 1], [], []>} : vector<16x4xf32>, vector<4x128xf32>, vector<16x128xf32> -> vector<16x128xf32>
    %82 = arith.addf %58, %81 : vector<16x128xf32>
    %83 = vector.extract_strided_slice %5 {offsets = [0, 12], sizes = [16, 4], strides = [1, 1]} : vector<16x128xf32> to vector<16x4xf32>
    %84 = vector.shape_cast %83 : vector<16x4xf32> to vector<2x8x4xf32>
    %85 = vector.extract_strided_slice %7 {offsets = [0, 12], sizes = [32, 4], strides = [1, 1]} : vector<32x128xf32> to vector<32x4xf32>
    %86 = vector.shape_cast %85 : vector<32x4xf32> to vector<2x16x4xf32>
    %87 = vector.extract_strided_slice %9 {offsets = [0, 12], sizes = [32, 4], strides = [1, 1]} : vector<32x128xf32> to vector<32x4xf32>
    %88 = vector.shape_cast %87 : vector<32x4xf32> to vector<2x16x4xf32>
    "tpu.trace_start"() <{level = 10 : i32, message = "bqd,bkd->bqk"}> : () -> ()
    %cst_36 = arith.constant dense<0.000000e+00> : vector<2x8x16xf32>
    %89 = tpu.matmul %84, %86, %cst_36 {dimension_numbers = #tpu.dot_dimension_numbers<[2], [2], [1], [1], [0, 0, 0, 1, 1, 1], [0], [0]>} : vector<2x8x4xf32>, vector<2x16x4xf32>, vector<2x8x16xf32> -> vector<2x8x16xf32>
    "tpu.trace_stop"() : () -> ()
    %cst_37 = arith.constant 5.000000e-01 : f32
    %90 = vector.broadcast %cst_37 : f32 to vector<2x8x16xf32>
    %91 = arith.mulf %89, %90 : vector<2x8x16xf32>
    %cst_38 = arith.constant dense<0xFF800000> : vector<2x8xf32>
    %92 = vector.multi_reduction <maximumf>, %91, %cst_38 [2] : vector<2x8x16xf32> to vector<2x8xf32>
    %93 = vector.shape_cast %92 : vector<2x8xf32> to vector<2x8x1xf32>
    %94 = vector.broadcast %93 : vector<2x8x1xf32> to vector<2x8x16xf32>
    %95 = arith.subf %91, %94 : vector<2x8x16xf32>
    %96 = math.exp %95 : vector<2x8x16xf32>
    %cst_39 = arith.constant dense<0.000000e+00> : vector<2x8xf32>
    %97 = vector.multi_reduction <add>, %96, %cst_39 [2] : vector<2x8x16xf32> to vector<2x8xf32>
    %98 = vector.shape_cast %97 : vector<2x8xf32> to vector<2x8x1xf32>
    %99 = tpu.reciprocal %98 {approx = true} : vector<2x8x1xf32> -> vector<2x8x1xf32>
    %100 = vector.broadcast %99 : vector<2x8x1xf32> to vector<2x8x16xf32>
    %101 = arith.mulf %96, %100 : vector<2x8x16xf32>
    "tpu.trace_start"() <{level = 10 : i32, message = "bqk,bkd->bqd"}> : () -> ()
    %cst_40 = arith.constant dense<0.000000e+00> : vector<2x8x4xf32>
    %102 = tpu.matmul %101, %88, %cst_40 {dimension_numbers = #tpu.dot_dimension_numbers<[2], [1], [1], [2], [0, 0, 0, 1, 1, 2], [0], [0]>} : vector<2x8x16xf32>, vector<2x16x4xf32>, vector<2x8x4xf32> -> vector<2x8x4xf32>
    "tpu.trace_stop"() : () -> ()
    %103 = vector.shape_cast %102 : vector<2x8x4xf32> to vector<16x4xf32>
    %c12 = arith.constant 12 : index
    %c0_41 = arith.constant 0 : index
    %104 = vector.load %arg7[%c12, %c0_41] : memref<128x128xf32, #tpu.memory_space<vmem>>, vector<4x128xf32>
    %cst_42 = arith.constant dense<0.000000e+00> : vector<16x128xf32>
    %105 = tpu.matmul %103, %104, %cst_42 {dimension_numbers = #tpu.dot_dimension_numbers<[1], [0], [0], [1], [0, 0, 1, 1], [], []>} : vector<16x4xf32>, vector<4x128xf32>, vector<16x128xf32> -> vector<16x128xf32>
    %106 = arith.addf %82, %105 : vector<16x128xf32>
    %107 = vector.extract_strided_slice %5 {offsets = [0, 16], sizes = [16, 4], strides = [1, 1]} : vector<16x128xf32> to vector<16x4xf32>
    %108 = vector.shape_cast %107 : vector<16x4xf32> to vector<2x8x4xf32>
    %109 = vector.extract_strided_slice %7 {offsets = [0, 16], sizes = [32, 4], strides = [1, 1]} : vector<32x128xf32> to vector<32x4xf32>
    %110 = vector.shape_cast %109 : vector<32x4xf32> to vector<2x16x4xf32>
    %111 = vector.extract_strided_slice %9 {offsets = [0, 16], sizes = [32, 4], strides = [1, 1]} : vector<32x128xf32> to vector<32x4xf32>
    %112 = vector.shape_cast %111 : vector<32x4xf32> to vector<2x16x4xf32>
    "tpu.trace_start"() <{level = 10 : i32, message = "bqd,bkd->bqk"}> : () -> ()
    %cst_43 = arith.constant dense<0.000000e+00> : vector<2x8x16xf32>
    %113 = tpu.matmul %108, %110, %cst_43 {dimension_numbers = #tpu.dot_dimension_numbers<[2], [2], [1], [1], [0, 0, 0, 1, 1, 1], [0], [0]>} : vector<2x8x4xf32>, vector<2x16x4xf32>, vector<2x8x16xf32> -> vector<2x8x16xf32>
    "tpu.trace_stop"() : () -> ()
    %cst_44 = arith.constant 5.000000e-01 : f32
    %114 = vector.broadcast %cst_44 : f32 to vector<2x8x16xf32>
    %115 = arith.mulf %113, %114 : vector<2x8x16xf32>
    %cst_45 = arith.constant dense<0xFF800000> : vector<2x8xf32>
    %116 = vector.multi_reduction <maximumf>, %115, %cst_45 [2] : vector<2x8x16xf32> to vector<2x8xf32>
    %117 = vector.shape_cast %116 : vector<2x8xf32> to vector<2x8x1xf32>
    %118 = vector.broadcast %117 : vector<2x8x1xf32> to vector<2x8x16xf32>
    %119 = arith.subf %115, %118 : vector<2x8x16xf32>
    %120 = math.exp %119 : vector<2x8x16xf32>
    %cst_46 = arith.constant dense<0.000000e+00> : vector<2x8xf32>
    %121 = vector.multi_reduction <add>, %120, %cst_46 [2] : vector<2x8x16xf32> to vector<2x8xf32>
    %122 = vector.shape_cast %121 : vector<2x8xf32> to vector<2x8x1xf32>
    %123 = tpu.reciprocal %122 {approx = true} : vector<2x8x1xf32> -> vector<2x8x1xf32>
    %124 = vector.broadcast %123 : vector<2x8x1xf32> to vector<2x8x16xf32>
    %125 = arith.mulf %120, %124 : vector<2x8x16xf32>
    "tpu.trace_start"() <{level = 10 : i32, message = "bqk,bkd->bqd"}> : () -> ()
    %cst_47 = arith.constant dense<0.000000e+00> : vector<2x8x4xf32>
    %126 = tpu.matmul %125, %112, %cst_47 {dimension_numbers = #tpu.dot_dimension_numbers<[2], [1], [1], [2], [0, 0, 0, 1, 1, 2], [0], [0]>} : vector<2x8x16xf32>, vector<2x16x4xf32>, vector<2x8x4xf32> -> vector<2x8x4xf32>
    "tpu.trace_stop"() : () -> ()
    %127 = vector.shape_cast %126 : vector<2x8x4xf32> to vector<16x4xf32>
    %c16 = arith.constant 16 : index
    %c0_48 = arith.constant 0 : index
    %128 = vector.load %arg7[%c16, %c0_48] : memref<128x128xf32, #tpu.memory_space<vmem>>, vector<4x128xf32>
    %cst_49 = arith.constant dense<0.000000e+00> : vector<16x128xf32>
    %129 = tpu.matmul %127, %128, %cst_49 {dimension_numbers = #tpu.dot_dimension_numbers<[1], [0], [0], [1], [0, 0, 1, 1], [], []>} : vector<16x4xf32>, vector<4x128xf32>, vector<16x128xf32> -> vector<16x128xf32>
    %130 = arith.addf %106, %129 : vector<16x128xf32>
    %131 = vector.extract_strided_slice %5 {offsets = [0, 20], sizes = [16, 4], strides = [1, 1]} : vector<16x128xf32> to vector<16x4xf32>
    %132 = vector.shape_cast %131 : vector<16x4xf32> to vector<2x8x4xf32>
    %133 = vector.extract_strided_slice %7 {offsets = [0, 20], sizes = [32, 4], strides = [1, 1]} : vector<32x128xf32> to vector<32x4xf32>
    %134 = vector.shape_cast %133 : vector<32x4xf32> to vector<2x16x4xf32>
    %135 = vector.extract_strided_slice %9 {offsets = [0, 20], sizes = [32, 4], strides = [1, 1]} : vector<32x128xf32> to vector<32x4xf32>
    %136 = vector.shape_cast %135 : vector<32x4xf32> to vector<2x16x4xf32>
    "tpu.trace_start"() <{level = 10 : i32, message = "bqd,bkd->bqk"}> : () -> ()
    %cst_50 = arith.constant dense<0.000000e+00> : vector<2x8x16xf32>
    %137 = tpu.matmul %132, %134, %cst_50 {dimension_numbers = #tpu.dot_dimension_numbers<[2], [2], [1], [1], [0, 0, 0, 1, 1, 1], [0], [0]>} : vector<2x8x4xf32>, vector<2x16x4xf32>, vector<2x8x16xf32> -> vector<2x8x16xf32>
    "tpu.trace_stop"() : () -> ()
    %cst_51 = arith.constant 5.000000e-01 : f32
    %138 = vector.broadcast %cst_51 : f32 to vector<2x8x16xf32>
    %139 = arith.mulf %137, %138 : vector<2x8x16xf32>
    %cst_52 = arith.constant dense<0xFF800000> : vector<2x8xf32>
    %140 = vector.multi_reduction <maximumf>, %139, %cst_52 [2] : vector<2x8x16xf32> to vector<2x8xf32>
    %141 = vector.shape_cast %140 : vector<2x8xf32> to vector<2x8x1xf32>
    %142 = vector.broadcast %141 : vector<2x8x1xf32> to vector<2x8x16xf32>
    %143 = arith.subf %139, %142 : vector<2x8x16xf32>
    %144 = math.exp %143 : vector<2x8x16xf32>
    %cst_53 = arith.constant dense<0.000000e+00> : vector<2x8xf32>
    %145 = vector.multi_reduction <add>, %144, %cst_53 [2] : vector<2x8x16xf32> to vector<2x8xf32>
    %146 = vector.shape_cast %145 : vector<2x8xf32> to vector<2x8x1xf32>
    %147 = tpu.reciprocal %146 {approx = true} : vector<2x8x1xf32> -> vector<2x8x1xf32>
    %148 = vector.broadcast %147 : vector<2x8x1xf32> to vector<2x8x16xf32>
    %149 = arith.mulf %144, %148 : vector<2x8x16xf32>
    "tpu.trace_start"() <{level = 10 : i32, message = "bqk,bkd->bqd"}> : () -> ()
    %cst_54 = arith.constant dense<0.000000e+00> : vector<2x8x4xf32>
    %150 = tpu.matmul %149, %136, %cst_54 {dimension_numbers = #tpu.dot_dimension_numbers<[2], [1], [1], [2], [0, 0, 0, 1, 1, 2], [0], [0]>} : vector<2x8x16xf32>, vector<2x16x4xf32>, vector<2x8x4xf32> -> vector<2x8x4xf32>
    "tpu.trace_stop"() : () -> ()
    %151 = vector.shape_cast %150 : vector<2x8x4xf32> to vector<16x4xf32>
    %c20 = arith.constant 20 : index
    %c0_55 = arith.constant 0 : index
    %152 = vector.load %arg7[%c20, %c0_55] : memref<128x128xf32, #tpu.memory_space<vmem>>, vector<4x128xf32>
    %cst_56 = arith.constant dense<0.000000e+00> : vector<16x128xf32>
    %153 = tpu.matmul %151, %152, %cst_56 {dimension_numbers = #tpu.dot_dimension_numbers<[1], [0], [0], [1], [0, 0, 1, 1], [], []>} : vector<16x4xf32>, vector<4x128xf32>, vector<16x128xf32> -> vector<16x128xf32>
    %154 = arith.addf %130, %153 : vector<16x128xf32>
    %155 = vector.extract_strided_slice %5 {offsets = [0, 24], sizes = [16, 4], strides = [1, 1]} : vector<16x128xf32> to vector<16x4xf32>
    %156 = vector.shape_cast %155 : vector<16x4xf32> to vector<2x8x4xf32>
    %157 = vector.extract_strided_slice %7 {offsets = [0, 24], sizes = [32, 4], strides = [1, 1]} : vector<32x128xf32> to vector<32x4xf32>
    %158 = vector.shape_cast %157 : vector<32x4xf32> to vector<2x16x4xf32>
    %159 = vector.extract_strided_slice %9 {offsets = [0, 24], sizes = [32, 4], strides = [1, 1]} : vector<32x128xf32> to vector<32x4xf32>
    %160 = vector.shape_cast %159 : vector<32x4xf32> to vector<2x16x4xf32>
    "tpu.trace_start"() <{level = 10 : i32, message = "bqd,bkd->bqk"}> : () -> ()
    %cst_57 = arith.constant dense<0.000000e+00> : vector<2x8x16xf32>
    %161 = tpu.matmul %156, %158, %cst_57 {dimension_numbers = #tpu.dot_dimension_numbers<[2], [2], [1], [1], [0, 0, 0, 1, 1, 1], [0], [0]>} : vector<2x8x4xf32>, vector<2x16x4xf32>, vector<2x8x16xf32> -> vector<2x8x16xf32>
    "tpu.trace_stop"() : () -> ()
    %cst_58 = arith.constant 5.000000e-01 : f32
    %162 = vector.broadcast %cst_58 : f32 to vector<2x8x16xf32>
    %163 = arith.mulf %161, %162 : vector<2x8x16xf32>
    %cst_59 = arith.constant dense<0xFF800000> : vector<2x8xf32>
    %164 = vector.multi_reduction <maximumf>, %163, %cst_59 [2] : vector<2x8x16xf32> to vector<2x8xf32>
    %165 = vector.shape_cast %164 : vector<2x8xf32> to vector<2x8x1xf32>
    %166 = vector.broadcast %165 : vector<2x8x1xf32> to vector<2x8x16xf32>
    %167 = arith.subf %163, %166 : vector<2x8x16xf32>
    %168 = math.exp %167 : vector<2x8x16xf32>
    %cst_60 = arith.constant dense<0.000000e+00> : vector<2x8xf32>
    %169 = vector.multi_reduction <add>, %168, %cst_60 [2] : vector<2x8x16xf32> to vector<2x8xf32>
    %170 = vector.shape_cast %169 : vector<2x8xf32> to vector<2x8x1xf32>
    %171 = tpu.reciprocal %170 {approx = true} : vector<2x8x1xf32> -> vector<2x8x1xf32>
    %172 = vector.broadcast %171 : vector<2x8x1xf32> to vector<2x8x16xf32>
    %173 = arith.mulf %168, %172 : vector<2x8x16xf32>
    "tpu.trace_start"() <{level = 10 : i32, message = "bqk,bkd->bqd"}> : () -> ()
    %cst_61 = arith.constant dense<0.000000e+00> : vector<2x8x4xf32>
    %174 = tpu.matmul %173, %160, %cst_61 {dimension_numbers = #tpu.dot_dimension_numbers<[2], [1], [1], [2], [0, 0, 0, 1, 1, 2], [0], [0]>} : vector<2x8x16xf32>, vector<2x16x4xf32>, vector<2x8x4xf32> -> vector<2x8x4xf32>
    "tpu.trace_stop"() : () -> ()
    %175 = vector.shape_cast %174 : vector<2x8x4xf32> to vector<16x4xf32>
    %c24 = arith.constant 24 : index
    %c0_62 = arith.constant 0 : index
    %176 = vector.load %arg7[%c24, %c0_62] : memref<128x128xf32, #tpu.memory_space<vmem>>, vector<4x128xf32>
    %cst_63 = arith.constant dense<0.000000e+00> : vector<16x128xf32>
    %177 = tpu.matmul %175, %176, %cst_63 {dimension_numbers = #tpu.dot_dimension_numbers<[1], [0], [0], [1], [0, 0, 1, 1], [], []>} : vector<16x4xf32>, vector<4x128xf32>, vector<16x128xf32> -> vector<16x128xf32>
    %178 = arith.addf %154, %177 : vector<16x128xf32>
    %179 = vector.extract_strided_slice %5 {offsets = [0, 28], sizes = [16, 4], strides = [1, 1]} : vector<16x128xf32> to vector<16x4xf32>
    %180 = vector.shape_cast %179 : vector<16x4xf32> to vector<2x8x4xf32>
    %181 = vector.extract_strided_slice %7 {offsets = [0, 28], sizes = [32, 4], strides = [1, 1]} : vector<32x128xf32> to vector<32x4xf32>
    %182 = vector.shape_cast %181 : vector<32x4xf32> to vector<2x16x4xf32>
    %183 = vector.extract_strided_slice %9 {offsets = [0, 28], sizes = [32, 4], strides = [1, 1]} : vector<32x128xf32> to vector<32x4xf32>
    %184 = vector.shape_cast %183 : vector<32x4xf32> to vector<2x16x4xf32>
    "tpu.trace_start"() <{level = 10 : i32, message = "bqd,bkd->bqk"}> : () -> ()
    %cst_64 = arith.constant dense<0.000000e+00> : vector<2x8x16xf32>
    %185 = tpu.matmul %180, %182, %cst_64 {dimension_numbers = #tpu.dot_dimension_numbers<[2], [2], [1], [1], [0, 0, 0, 1, 1, 1], [0], [0]>} : vector<2x8x4xf32>, vector<2x16x4xf32>, vector<2x8x16xf32> -> vector<2x8x16xf32>
    "tpu.trace_stop"() : () -> ()
    %cst_65 = arith.constant 5.000000e-01 : f32
    %186 = vector.broadcast %cst_65 : f32 to vector<2x8x16xf32>
    %187 = arith.mulf %185, %186 : vector<2x8x16xf32>
    %cst_66 = arith.constant dense<0xFF800000> : vector<2x8xf32>
    %188 = vector.multi_reduction <maximumf>, %187, %cst_66 [2] : vector<2x8x16xf32> to vector<2x8xf32>
    %189 = vector.shape_cast %188 : vector<2x8xf32> to vector<2x8x1xf32>
    %190 = vector.broadcast %189 : vector<2x8x1xf32> to vector<2x8x16xf32>
    %191 = arith.subf %187, %190 : vector<2x8x16xf32>
    %192 = math.exp %191 : vector<2x8x16xf32>
    %cst_67 = arith.constant dense<0.000000e+00> : vector<2x8xf32>
    %193 = vector.multi_reduction <add>, %192, %cst_67 [2] : vector<2x8x16xf32> to vector<2x8xf32>
    %194 = vector.shape_cast %193 : vector<2x8xf32> to vector<2x8x1xf32>
    %195 = tpu.reciprocal %194 {approx = true} : vector<2x8x1xf32> -> vector<2x8x1xf32>
    %196 = vector.broadcast %195 : vector<2x8x1xf32> to vector<2x8x16xf32>
    %197 = arith.mulf %192, %196 : vector<2x8x16xf32>
    "tpu.trace_start"() <{level = 10 : i32, message = "bqk,bkd->bqd"}> : () -> ()
    %cst_68 = arith.constant dense<0.000000e+00> : vector<2x8x4xf32>
    %198 = tpu.matmul %197, %184, %cst_68 {dimension_numbers = #tpu.dot_dimension_numbers<[2], [1], [1], [2], [0, 0, 0, 1, 1, 2], [0], [0]>} : vector<2x8x16xf32>, vector<2x16x4xf32>, vector<2x8x4xf32> -> vector<2x8x4xf32>
    "tpu.trace_stop"() : () -> ()
    %199 = vector.shape_cast %198 : vector<2x8x4xf32> to vector<16x4xf32>
    %c28 = arith.constant 28 : index
    %c0_69 = arith.constant 0 : index
    %200 = vector.load %arg7[%c28, %c0_69] : memref<128x128xf32, #tpu.memory_space<vmem>>, vector<4x128xf32>
    %cst_70 = arith.constant dense<0.000000e+00> : vector<16x128xf32>
    %201 = tpu.matmul %199, %200, %cst_70 {dimension_numbers = #tpu.dot_dimension_numbers<[1], [0], [0], [1], [0, 0, 1, 1], [], []>} : vector<16x4xf32>, vector<4x128xf32>, vector<16x128xf32> -> vector<16x128xf32>
    %202 = arith.addf %178, %201 : vector<16x128xf32>
    %c0_71 = arith.constant 0 : index
    %c0_72 = arith.constant 0 : index
    %203 = vector.load %arg8[%c0_71, %c0_72] : memref<1x128xf32, #tpu.memory_space<vmem>>, vector<1x128xf32>
    %204 = vector.broadcast %203 : vector<1x128xf32> to vector<16x128xf32>
    %205 = arith.addf %202, %204 : vector<16x128xf32>
    %206 = vector.shape_cast %205 : vector<16x128xf32> to vector<2x8x128xf32>
    %c0_73 = arith.constant 0 : index
    %c0_74 = arith.constant 0 : index
    %c0_75 = arith.constant 0 : index
    %207 = vector.load %arg9[%c0_73, %c0_74, %c0_75] : memref<2x8x128xf32, #tpu.memory_space<vmem>>, vector<2x8x128xf32>
    tpu.vector_store %arg9[%c0_73, %c0_74, %c0_75], %206 {strides = array<i32>} : memref<2x8x128xf32, #tpu.memory_space<vmem>>, vector<2x8x128xf32>,
    return
  }
  func.func @transform_0(%arg0: i32, %arg1: i32) -> (i32, i32, i32) {
    %c0_i32 = arith.constant 0 : i32
    %c0_i32_0 = arith.constant 0 : i32
    return %arg0, %arg1, %c0_i32 : i32, i32, i32
  }
  func.func @transform_1(%arg0: i32, %arg1: i32) -> (i32, i32, i32) {
    %c0_i32 = arith.constant 0 : i32
    %c0_i32_0 = arith.constant 0 : i32
    %c0_i32_1 = arith.constant 0 : i32
    return %arg0, %c0_i32, %c0_i32_0 : i32, i32, i32
  }
  func.func @transform_2(%arg0: i32, %arg1: i32) -> (i32, i32) {
    %c0_i32 = arith.constant 0 : i32
    %c0_i32_0 = arith.constant 0 : i32
    %c0_i32_1 = arith.constant 0 : i32
    return %c0_i32, %c0_i32_0 : i32, i32
  }
  func.func @transform_3(%arg0: i32, %arg1: i32) -> (i32, i32) {
    %c0_i32 = arith.constant 0 : i32
    %c0_i32_0 = arith.constant 0 : i32
    %c0_i32_1 = arith.constant 0 : i32
    return %c0_i32, %c0_i32_0 : i32, i32
  }
  func.func @transform_4(%arg0: i32, %arg1: i32) -> (i32, i32) {
    %c0_i32 = arith.constant 0 : i32
    %c0_i32_0 = arith.constant 0 : i32
    %c0_i32_1 = arith.constant 0 : i32
    return %c0_i32, %c0_i32_0 : i32, i32
  }
  func.func @transform_5(%arg0: i32, %arg1: i32) -> (i32, i32) {
    %c0_i32 = arith.constant 0 : i32
    %c0_i32_0 = arith.constant 0 : i32
    %c0_i32_1 = arith.constant 0 : i32
    return %c0_i32, %c0_i32_0 : i32, i32
  }
  func.func @transform_6(%arg0: i32, %arg1: i32) -> (i32, i32) {
    %c0_i32 = arith.constant 0 : i32
    %c0_i32_0 = arith.constant 0 : i32
    %c0_i32_1 = arith.constant 0 : i32
    return %c0_i32, %c0_i32_0 : i32, i32
  }
  func.func @transform_7(%arg0: i32, %arg1: i32) -> (i32, i32, i32) {
    %c0_i32 = arith.constant 0 : i32
    %c0_i32_0 = arith.constant 0 : i32
    return %arg0, %arg1, %c0_i32 : i32, i32, i32
  }
}

</mosaic_0001>

<llo_original>
// kernel: tpu_custom_call.1
$region0: #{tpu_custom_call.1}
  #allocation0 [shape = 'u32[]', space=smem, size = 0x4, offset = 0x4, fixed_abs, tag = 'smem constant byte address 0x4 - core index']
  #allocation1 [shape = 'u32[144,128]{1,0:T(1,128)}', space=vmem, size = 0x12000, scoped, tag = 'internal scratch']
  %s0 = inlined_call_operand.hbm [shape: f32[2,8,128], index: 0, kind: input, shape index: {}]
  %s1 = inlined_call_operand.hbm [shape: f32[2,16,128], index: 1, kind: input, shape index: {}]
  %s2 = inlined_call_operand.hbm [shape: f32[128,128], index: 2, kind: input, shape index: {}]
  %s3 = inlined_call_operand.hbm [shape: f32[128,128], index: 3, kind: input, shape index: {}]
  %s4 = inlined_call_operand.hbm [shape: f32[128,128], index: 4, kind: input, shape index: {}]
  %s5 = inlined_call_operand.hbm [shape: f32[128,128], index: 5, kind: input, shape index: {}]
  %s6 = inlined_call_operand.hbm [shape: f32[1,128], index: 6, kind: input, shape index: {}]
  %s7 = inlined_call_operand.hbm [shape: f32[2,8,128], index: 7, kind: output, shape index: {}]
  %s8 = sld [smem:[#allocation0]]
  $region66: #{tpu_custom_call.1} parent=0
    _
  %s10 = ssub.s32 1, %s8
  %s11 = scalar_select 0, %s10, %s8
  $region1: #{tpu_custom_call.1} parent=0
    #allocation2 [shape = 'u8[8192]{0}', space=vmem, size = 0x2000, scoped, tag = 'input window, operand 0, single buffered']
    #allocation3 [shape = 's32[1]{0}', space=sflag, size = 0x4, scoped, tag = 'scoped memory for tpu_custom_call.1']
    #allocation4 [shape = 's32[1]{0}', space=sflag, size = 0x4, scoped, tag = 'scoped memory for tpu_custom_call.1']
    #allocation5 [shape = 'u8[16384]{0}', space=vmem, size = 0x4000, scoped, tag = 'input window, operand 1, single buffered']
    #allocation6 [shape = 's32[1]{0}', space=sflag, size = 0x4, scoped, tag = 'scoped memory for tpu_custom_call.1']
    #allocation7 [shape = 'u8[65536]{0}', space=vmem, size = 0x10000, scoped, tag = 'input window, operand 2, single buffered']
    #allocation8 [shape = 'u8[65536]{0}', space=vmem, size = 0x10000, scoped, tag = 'input window, operand 3, single buffered']
    #allocation9 [shape = 's32[1]{0}', space=sflag, size = 0x4, scoped, tag = 'scoped memory for tpu_custom_call.1']
    #allocation10 [shape = 'u8[65536]{0}', space=vmem, size = 0x10000, scoped, tag = 'input window, operand 4, single buffered']
    #allocation11 [shape = 'u8[65536]{0}', space=vmem, size = 0x10000, scoped, tag = 'input window, operand 5, single buffered']
    #allocation12 [shape = 's32[1]{0}', space=sflag, size = 0x4, scoped, tag = 'scoped memory for tpu_custom_call.1']
    #allocation13 [shape = 'u8[512]{0}', space=vmem, size = 0x400, scoped, tag = 'input window, operand 6, single buffered']
    #allocation14 [shape = 'u8[8192]{0}', space=vmem, size = 0x2000, scoped, tag = 'output window, operand 0, single buffered']
    %12 = vsyncpa [#allocation3], 0
    %13 = vsyncpa [#allocation6], 0
    %14 = vsyncpa [#allocation9], 0
    %15 = vsyncpa [#allocation12], 0
    %16 = vsyncpa [#allocation4], 0
    // Predicated region
    $region2: #{tpu_custom_call.1} parent=1 // pred_check
      _
    $region3: #{tpu_custom_call.1} parent=1 // pred_check_branch
      %18 = sbr.rel (0) target = $region5
    $region4: #{tpu_custom_call.1} parent=1 // pred_region
      %s20 = ssub.s32 256, 256
      %21 = vsyncadd [#allocation3], %s20
      %s22 = sshll.u32 [#allocation2], 4
      %s23 = int_to_ptr.vmem [resolvable:$true] %s22
      %28 = dma.hbm_to_vmem [thread:$0]  %s0, 256, %s23, [#allocation3], 128, 128, 8
    $region5: #{tpu_custom_call.1} parent=1 // pred_fallthru
      _
    // Predicated region
    $region6: #{tpu_custom_call.1} parent=1 // pred_check
      _
    $region7: #{tpu_custom_call.1} parent=1 // pred_check_branch
      %30 = sbr.rel (0) target = $region9
    $region8: #{tpu_custom_call.1} parent=1 // pred_region
      %s32 = ssub.s32 512, 512
      %33 = vsyncadd [#allocation6], %s32
      %s34 = sshll.u32 [#allocation5], 4
      %s35 = int_to_ptr.vmem [resolvable:$true] %s34
      %40 = dma.hbm_to_vmem [thread:$0]  %s1, 512, %s35, [#allocation6], 128, 128, 8
    $region9: #{tpu_custom_call.1} parent=1 // pred_fallthru
      _
    // Predicated region
    $region10: #{tpu_custom_call.1} parent=1 // pred_check
      _
    $region11: #{tpu_custom_call.1} parent=1 // pred_check_branch
      %42 = sbr.rel (0) target = $region13
    $region12: #{tpu_custom_call.1} parent=1 // pred_region
      %s44 = ssub.s32 2048, 2048
      %45 = vsyncadd [#allocation6], %s44
      %s46 = sshll.u32 [#allocation7], 4
      %s47 = int_to_ptr.vmem [resolvable:$true] %s46
      %52 = dma.hbm_to_vmem [thread:$0]  %s2, 2048, %s47, [#allocation6], 128, 128, 8
    $region13: #{tpu_custom_call.1} parent=1 // pred_fallthru
      _
    // Predicated region
    $region14: #{tpu_custom_call.1} parent=1 // pred_check
      _
    $region15: #{tpu_custom_call.1} parent=1 // pred_check_branch
      %54 = sbr.rel (0) target = $region17
    $region16: #{tpu_custom_call.1} parent=1 // pred_region
      %s56 = ssub.s32 2048, 2048
      %57 = vsyncadd [#allocation9], %s56
      %s58 = sshll.u32 [#allocation8], 4
      %s59 = int_to_ptr.vmem [resolvable:$true] %s58
      %64 = dma.hbm_to_vmem [thread:$0]  %s3, 2048, %s59, [#allocation9], 128, 128, 8
    $region17: #{tpu_custom_call.1} parent=1 // pred_fallthru
      _
    // Predicated region
    $region18: #{tpu_custom_call.1} parent=1 // pred_check
      _
    $region19: #{tpu_custom_call.1} parent=1 // pred_check_branch
      %66 = sbr.rel (0) target = $region21
    $region20: #{tpu_custom_call.1} parent=1 // pred_region
      %s68 = ssub.s32 2048, 2048
      %69 = vsyncadd [#allocation9], %s68
      %s70 = sshll.u32 [#allocation10], 4
      %s71 = int_to_ptr.vmem [resolvable:$true] %s70
      %76 = dma.hbm_to_vmem [thread:$0]  %s4, 2048, %s71, [#allocation9], 128, 128, 8
    $region21: #{tpu_custom_call.1} parent=1 // pred_fallthru
      _
    // Predicated region
    $region22: #{tpu_custom_call.1} parent=1 // pred_check
      _
    $region23: #{tpu_custom_call.1} parent=1 // pred_check_branch
      %78 = sbr.rel (0) target = $region25
    $region24: #{tpu_custom_call.1} parent=1 // pred_region
      %s80 = ssub.s32 2048, 2048
      %81 = vsyncadd [#allocation12], %s80
      %s82 = sshll.u32 [#allocation11], 4
      %s83 = int_to_ptr.vmem [resolvable:$true] %s82
      %88 = dma.hbm_to_vmem [thread:$0]  %s5, 2048, %s83, [#allocation12], 128, 128, 8
    $region25: #{tpu_custom_call.1} parent=1 // pred_fallthru
      _
    // Predicated region
    $region26: #{tpu_custom_call.1} parent=1 // pred_check
      _
    $region27: #{tpu_custom_call.1} parent=1 // pred_check_branch
      %90 = sbr.rel (0) target = $region29
    $region28: #{tpu_custom_call.1} parent=1 // pred_region
      %s92 = ssub.s32 16, 16
      %93 = vsyncadd [#allocation12], %s92
      %s95 = sshll.u32 [#allocation13], 4
      %s96 = int_to_ptr.vmem [resolvable:$true] %s95
      %98 = dma.hbm_to_vmem [thread:$0]  %s6, 16, %s96, [#allocation12]
    $region29: #{tpu_custom_call.1} parent=1 // pred_fallthru
      _
    // Predicated region
    $region30: #{tpu_custom_call.1} parent=1 // pred_check
      _
    $region31: #{tpu_custom_call.1} parent=1 // pred_check_branch
      %100 = sbr.rel (0) target = $region33
    $region32: #{tpu_custom_call.1} parent=1 // pred_region
      %101 = dma.done [#allocation3], 256
    $region33: #{tpu_custom_call.1} parent=1 // pred_fallthru
      _
    // Predicated region
    $region34: #{tpu_custom_call.1} parent=1 // pred_check
      _
    $region35: #{tpu_custom_call.1} parent=1 // pred_check_branch
      %103 = sbr.rel (0) target = $region37
    $region36: #{tpu_custom_call.1} parent=1 // pred_region
      %104 = dma.done [#allocation6], 512
    $region37: #{tpu_custom_call.1} parent=1 // pred_fallthru
      _
    // Predicated region
    $region38: #{tpu_custom_call.1} parent=1 // pred_check
      _
    $region39: #{tpu_custom_call.1} parent=1 // pred_check_branch
      %106 = sbr.rel (0) target = $region41
    $region40: #{tpu_custom_call.1} parent=1 // pred_region
      %107 = dma.done [#allocation6], 2048
    $region41: #{tpu_custom_call.1} parent=1 // pred_fallthru
      _
    // Predicated region
    $region42: #{tpu_custom_call.1} parent=1 // pred_check
      _
    $region43: #{tpu_custom_call.1} parent=1 // pred_check_branch
      %109 = sbr.rel (0) target = $region45
    $region44: #{tpu_custom_call.1} parent=1 // pred_region
      %110 = dma.done [#allocation9], 2048
    $region45: #{tpu_custom_call.1} parent=1 // pred_fallthru
      _
    // Predicated region
    $region46: #{tpu_custom_call.1} parent=1 // pred_check
      _
    $region47: #{tpu_custom_call.1} parent=1 // pred_check_branch
      %112 = sbr.rel (0) target = $region49
    $region48: #{tpu_custom_call.1} parent=1 // pred_region
      %113 = dma.done [#allocation9], 2048
    $region49: #{tpu_custom_call.1} parent=1 // pred_fallthru
      _
    // Predicated region
    $region50: #{tpu_custom_call.1} parent=1 // pred_check
      _
    $region51: #{tpu_custom_call.1} parent=1 // pred_check_branch
      %115 = sbr.rel (0) target = $region53
    $region52: #{tpu_custom_call.1} parent=1 // pred_region
      %116 = dma.done [#allocation12], 2048
    $region53: #{tpu_custom_call.1} parent=1 // pred_fallthru
      _
    // Predicated region
    $region54: #{tpu_custom_call.1} parent=1 // pred_check
      _
    $region55: #{tpu_custom_call.1} parent=1 // pred_check_branch
      %118 = sbr.rel (0) target = $region57
    $region56: #{tpu_custom_call.1} parent=1 // pred_region
      %119 = dma.done [#allocation12], 16
    $region57: #{tpu_custom_call.1} parent=1 // pred_fallthru
      _
    %v120 = vld [vmem:[#allocation2] sm:$0xff]
    %v121 = vld [vmem:[#allocation2 + $0x8] sm:$0xff]
    %v122 = vld [vmem:[#allocation5] sm:$0xff]
    %v123 = vld [vmem:[#allocation5 + $0x8] sm:$0xff]
    %v124 = vld [vmem:[#allocation5 + $0x10] sm:$0xff]
    %v125 = vld [vmem:[#allocation5 + $0x18] sm:$0xff]
    %v126 = vld [vmem:[#allocation7] sm:$0xff]
    %v127 = vld [vmem:[#allocation7 + $0x8] sm:$0xff]
    %v128 = vld [vmem:[#allocation7 + $0x10] sm:$0xff]
    %v129 = vld [vmem:[#allocation7 + $0x18] sm:$0xff]
    %v130 = vld [vmem:[#allocation7 + $0x20] sm:$0xff]
    %v131 = vld [vmem:[#allocation7 + $0x28] sm:$0xff]
    %v132 = vld [vmem:[#allocation7 + $0x30] sm:$0xff]
    %v133 = vld [vmem:[#allocation7 + $0x38] sm:$0xff]
    %v134 = vld [vmem:[#allocation7 + $0x40] sm:$0xff]
    %v135 = vld [vmem:[#allocation7 + $0x48] sm:$0xff]
    %v136 = vld [vmem:[#allocation7 + $0x50] sm:$0xff]
    %v137 = vld [vmem:[#allocation7 + $0x58] sm:$0xff]
    %v138 = vld [vmem:[#allocation7 + $0x60] sm:$0xff]
    %v139 = vld [vmem:[#allocation7 + $0x68] sm:$0xff]
    %v140 = vld [vmem:[#allocation7 + $0x70] sm:$0xff]
    %v141 = vld [vmem:[#allocation7 + $0x78] sm:$0xff]
    %142 = vmatprep.subr.mxu0 0.0
    %143 = vmatpush1.msra.mxu0 %v126
    %144 = vmatprep.subr.mxu0 0.0
    %145 = vmatpush1.msra.mxu0 %v127
    %146 = vmatprep.subr.mxu0 0.0
    %147 = vmatpush1.msra.mxu0 %v128
    %148 = vmatprep.subr.mxu0 0.0
    %149 = vmatpush1.msra.mxu0 %v129
    %150 = vmatprep.subr.mxu0 0.0
    %151 = vmatpush1.msra.mxu0 %v130
    %152 = vmatprep.subr.mxu0 0.0
    %153 = vmatpush1.msra.mxu0 %v131
    %154 = vmatprep.subr.mxu0 0.0
    %155 = vmatpush1.msra.mxu0 %v132
    %156 = vmatprep.subr.mxu0 0.0
    %157 = vmatpush1.msra.mxu0 %v133
    %158 = vmatprep.subr.mxu0 0.0
    %159 = vmatpush1.msra.mxu0 %v134
    %160 = vmatprep.subr.mxu0 0.0
    %161 = vmatpush1.msra.mxu0 %v135
    %162 = vmatprep.subr.mxu0 0.0
    %163 = vmatpush1.msra.mxu0 %v136
    %164 = vmatprep.subr.mxu0 0.0
    %165 = vmatpush1.msra.mxu0 %v137
    %166 = vmatprep.subr.mxu0 0.0
    %167 = vmatpush1.msra.mxu0 %v138
    %168 = vmatprep.subr.mxu0 0.0
    %169 = vmatpush1.msra.mxu0 %v139
    %170 = vmatprep.subr.mxu0 0.0
    %171 = vmatpush1.msra.mxu0 %v140
    %172 = vmatprep.subr.mxu0 0.0
    %173 = vmatpush1.msra.mxu0 %v141
    %174 = vmatprep.subr.mxu0 0.0
    %175 = vmatpush1.msra.mxu0 0.0
    %176 = vmatprep.subr.mxu0 0.0
    %177 = vmatpush1.msra.mxu0 0.0
    %178 = vmatprep.subr.mxu0 0.0
    %179 = vmatpush1.msra.mxu0 0.0
    %180 = vmatprep.subr.mxu0 0.0
    %181 = vmatpush1.msra.mxu0 0.0
    %182 = vmatprep.subr.mxu0 0.0
    %183 = vmatpush1.msra.mxu0 0.0
    %184 = vmatprep.subr.mxu0 0.0
    %185 = vmatpush1.msra.mxu0 0.0
    %186 = vmatprep.subr.mxu0 0.0
    %187 = vmatpush1.msra.mxu0 0.0
    %188 = vmatprep.subr.mxu0 0.0
    %189 = vmatpush1.msra.mxu0 0.0
    %190 = vmatprep.subr.mxu0 0.0
    %191 = vmatpush1.msra.mxu0 0.0
    %192 = vmatprep.subr.mxu0 0.0
    %193 = vmatpush1.msra.mxu0 0.0
    %194 = vmatprep.subr.mxu0 0.0
    %195 = vmatpush1.msra.mxu0 0.0
    %196 = vmatprep.subr.mxu0 0.0
    %197 = vmatpush1.msra.mxu0 0.0
    %198 = vmatprep.subr.mxu0 0.0
    %199 = vmatpush1.msra.mxu0 0.0
    %200 = vmatprep.subr.mxu0 0.0
    %201 = vmatpush1.msra.mxu0 0.0
    %202 = vmatprep.subr.mxu0 0.0
    %203 = vmatpush1.msra.mxu0 0.0
    %204 = vmatprep.subr.mxu0 0.0
    %205 = vmatpush1.msra.mxu0 0.0
    %206 = vmatprep.mubr.f32.mxu0 0.0
    %207 = vmatmul.mubr.f32.gmra.mrb[0].mxu0 %v120
    %v208 = vpop.f32.mrb[0].mxu0
    %v209 = vadd.f32 0.0, %v208
    %v210 = vpop.f32.mrb[0].mxu0
    %211 = vmatprep.mubr.f32.mxu0 0.0
    %212 = vmatmul.mubr.f32.gmra.mrb[0].mxu0 %v121
    %v213 = vpop.f32.mrb[0].mxu0
    %v214 = vadd.f32 0.0, %v213
    %v215 = vpop.f32.mrb[0].mxu0
    %216 = vdwg.mxu0
    %v217 = vld [vmem:[#allocation8] sm:$0xff]
    %v218 = vld [vmem:[#allocation8 + $0x8] sm:$0xff]
    %v219 = vld [vmem:[#allocation8 + $0x10] sm:$0xff]
    %v220 = vld [vmem:[#allocation8 + $0x18] sm:$0xff]
    %v221 = vld [vmem:[#allocation8 + $0x20] sm:$0xff]
    %v222 = vld [vmem:[#allocation8 + $0x28] sm:$0xff]
    %v223 = vld [vmem:[#allocation8 + $0x30] sm:$0xff]
    %v224 = vld [vmem:[#allocation8 + $0x38] sm:$0xff]
    %v225 = vld [vmem:[#allocation8 + $0x40] sm:$0xff]
    %v226 = vld [vmem:[#allocation8 + $0x48] sm:$0xff]
    %v227 = vld [vmem:[#allocation8 + $0x50] sm:$0xff]
    %v228 = vld [vmem:[#allocation8 + $0x58] sm:$0xff]
    %v229 = vld [vmem:[#allocation8 + $0x60] sm:$0xff]
    %v230 = vld [vmem:[#allocation8 + $0x68] sm:$0xff]
    %v231 = vld [vmem:[#allocation8 + $0x70] sm:$0xff]
    %v232 = vld [vmem:[#allocation8 + $0x78] sm:$0xff]
    %233 = vmatprep.subr.mxu0 0.0
    %234 = vmatpush1.msra.mxu0 %v217
    %235 = vmatprep.subr.mxu0 0.0
    %236 = vmatpush1.msra.mxu0 %v218
    %237 = vmatprep.subr.mxu0 0.0
    %238 = vmatpush1.msra.mxu0 %v219
    %239 = vmatprep.subr.mxu0 0.0
    %240 = vmatpush1.msra.mxu0 %v220
    %241 = vmatprep.subr.mxu0 0.0
    %242 = vmatpush1.msra.mxu0 %v221
    %243 = vmatprep.subr.mxu0 0.0
    %244 = vmatpush1.msra.mxu0 %v222
    %245 = vmatprep.subr.mxu0 0.0
    %246 = vmatpush1.msra.mxu0 %v223
    %247 = vmatprep.subr.mxu0 0.0
    %248 = vmatpush1.msra.mxu0 %v224
    %249 = vmatprep.subr.mxu0 0.0
    %250 = vmatpush1.msra.mxu0 %v225
    %251 = vmatprep.subr.mxu0 0.0
    %252 = vmatpush1.msra.mxu0 %v226
    %253 = vmatprep.subr.mxu0 0.0
    %254 = vmatpush1.msra.mxu0 %v227
    %255 = vmatprep.subr.mxu0 0.0
    %256 = vmatpush1.msra.mxu0 %v228
    %257 = vmatprep.subr.mxu0 0.0
    %258 = vmatpush1.msra.mxu0 %v229
    %259 = vmatprep.subr.mxu0 0.0
    %260 = vmatpush1.msra.mxu0 %v230
    %261 = vmatprep.subr.mxu0 0.0
    %262 = vmatpush1.msra.mxu0 %v231
    %263 = vmatprep.subr.mxu0 0.0
    %264 = vmatpush1.msra.mxu0 %v232
    %265 = vmatprep.subr.mxu0 0.0
    %266 = vmatpush1.msra.mxu0 0.0
    %267 = vmatprep.subr.mxu0 0.0
    %268 = vmatpush1.msra.mxu0 0.0
    %269 = vmatprep.subr.mxu0 0.0
    %270 = vmatpush1.msra.mxu0 0.0
    %271 = vmatprep.subr.mxu0 0.0
    %272 = vmatpush1.msra.mxu0 0.0
    %273 = vmatprep.subr.mxu0 0.0
    %274 = vmatpush1.msra.mxu0 0.0
    %275 = vmatprep.subr.mxu0 0.0
    %276 = vmatpush1.msra.mxu0 0.0
    %277 = vmatprep.subr.mxu0 0.0
    %278 = vmatpush1.msra.mxu0 0.0
    %279 = vmatprep.subr.mxu0 0.0
    %280 = vmatpush1.msra.mxu0 0.0
    %281 = vmatprep.subr.mxu0 0.0
    %282 = vmatpush1.msra.mxu0 0.0
    %283 = vmatprep.subr.mxu0 0.0
    %284 = vmatpush1.msra.mxu0 0.0
    %285 = vmatprep.subr.mxu0 0.0
    %286 = vmatpush1.msra.mxu0 0.0
    %287 = vmatprep.subr.mxu0 0.0
    %288 = vmatpush1.msra.mxu0 0.0
    %289 = vmatprep.subr.mxu0 0.0
    %290 = vmatpush1.msra.mxu0 0.0
    %291 = vmatprep.subr.mxu0 0.0
    %292 = vmatpush1.msra.mxu0 0.0
    %293 = vmatprep.subr.mxu0 0.0
    %294 = vmatpush1.msra.mxu0 0.0
    %295 = vmatprep.subr.mxu0 0.0
    %296 = vmatpush1.msra.mxu0 0.0
    %297 = vmatprep.mubr.f32.mxu0 0.0
    %298 = vmatmul.mubr.f32.gmra.mrb[0].mxu0 %v122
    %v299 = vpop.f32.mrb[0].mxu0
    %v300 = vadd.f32 0.0, %v299
    %v301 = vpop.f32.mrb[0].mxu0
    %302 = vmatprep.mubr.f32.mxu0 0.0
    %303 = vmatmul.mubr.f32.gmra.mrb[0].mxu0 %v123
    %v304 = vpop.f32.mrb[0].mxu0
    %v305 = vadd.f32 0.0, %v304
    %v306 = vpop.f32.mrb[0].mxu0
    %307 = vmatprep.mubr.f32.mxu0 0.0
    %308 = vmatmul.mubr.f32.gmra.mrb[0].mxu0 %v124
    %v309 = vpop.f32.mrb[0].mxu0
    %v310 = vadd.f32 0.0, %v309
    %v311 = vpop.f32.mrb[0].mxu0
    %312 = vmatprep.mubr.f32.mxu0 0.0
    %313 = vmatmul.mubr.f32.gmra.mrb[0].mxu0 %v125
    %v314 = vpop.f32.mrb[0].mxu0
    %v315 = vadd.f32 0.0, %v314
    %v316 = vpop.f32.mrb[0].mxu0
    %317 = vdwg.mxu0
    %v318 = vld [vmem:[#allocation10] sm:$0xff]
    %v319 = vld [vmem:[#allocation10 + $0x8] sm:$0xff]
    %v320 = vld [vmem:[#allocation10 + $0x10] sm:$0xff]
    %v321 = vld [vmem:[#allocation10 + $0x18] sm:$0xff]
    %v322 = vld [vmem:[#allocation10 + $0x20] sm:$0xff]
    %v323 = vld [vmem:[#allocation10 + $0x28] sm:$0xff]
    %v324 = vld [vmem:[#allocation10 + $0x30] sm:$0xff]
    %v325 = vld [vmem:[#allocation10 + $0x38] sm:$0xff]
    %v326 = vld [vmem:[#allocation10 + $0x40] sm:$0xff]
    %v327 = vld [vmem:[#allocation10 + $0x48] sm:$0xff]
    %v328 = vld [vmem:[#allocation10 + $0x50] sm:$0xff]
    %v329 = vld [vmem:[#allocation10 + $0x58] sm:$0xff]
    %v330 = vld [vmem:[#allocation10 + $0x60] sm:$0xff]
    %v331 = vld [vmem:[#allocation10 + $0x68] sm:$0xff]
    %v332 = vld [vmem:[#allocation10 + $0x70] sm:$0xff]
    %v333 = vld [vmem:[#allocation10 + $0x78] sm:$0xff]
    %334 = vmatprep.subr.mxu0 0.0
    %335 = vmatpush1.msra.mxu0 %v318
    %336 = vmatprep.subr.mxu0 0.0
    %337 = vmatpush1.msra.mxu0 %v319
    %338 = vmatprep.subr.mxu0 0.0
    %339 = vmatpush1.msra.mxu0 %v320
    %340 = vmatprep.subr.mxu0 0.0
    %341 = vmatpush1.msra.mxu0 %v321
    %342 = vmatprep.subr.mxu0 0.0
    %343 = vmatpush1.msra.mxu0 %v322
    %344 = vmatprep.subr.mxu0 0.0
    %345 = vmatpush1.msra.mxu0 %v323
    %346 = vmatprep.subr.mxu0 0.0
    %347 = vmatpush1.msra.mxu0 %v324
    %348 = vmatprep.subr.mxu0 0.0
    %349 = vmatpush1.msra.mxu0 %v325
    %350 = vmatprep.subr.mxu0 0.0
    %351 = vmatpush1.msra.mxu0 %v326
    %352 = vmatprep.subr.mxu0 0.0
    %353 = vmatpush1.msra.mxu0 %v327
    %354 = vmatprep.subr.mxu0 0.0
    %355 = vmatpush1.msra.mxu0 %v328
    %356 = vmatprep.subr.mxu0 0.0
    %357 = vmatpush1.msra.mxu0 %v329
    %358 = vmatprep.subr.mxu0 0.0
    %359 = vmatpush1.msra.mxu0 %v330
    %360 = vmatprep.subr.mxu0 0.0
    %361 = vmatpush1.msra.mxu0 %v331
    %362 = vmatprep.subr.mxu0 0.0
    %363 = vmatpush1.msra.mxu0 %v332
    %364 = vmatprep.subr.mxu0 0.0
    %365 = vmatpush1.msra.mxu0 %v333
    %366 = vmatprep.subr.mxu0 0.0
    %367 = vmatpush1.msra.mxu0 0.0
    %368 = vmatprep.subr.mxu0 0.0
    %369 = vmatpush1.msra.mxu0 0.0
    %370 = vmatprep.subr.mxu0 0.0
    %371 = vmatpush1.msra.mxu0 0.0
    %372 = vmatprep.subr.mxu0 0.0
    %373 = vmatpush1.msra.mxu0 0.0
    %374 = vmatprep.subr.mxu0 0.0
    %375 = vmatpush1.msra.mxu0 0.0
    %376 = vmatprep.subr.mxu0 0.0
    %377 = vmatpush1.msra.mxu0 0.0
    %378 = vmatprep.subr.mxu0 0.0
    %379 = vmatpush1.msra.mxu0 0.0
    %380 = vmatprep.subr.mxu0 0.0
    %381 = vmatpush1.msra.mxu0 0.0
    %382 = vmatprep.subr.mxu0 0.0
    %383 = vmatpush1.msra.mxu0 0.0
    %384 = vmatprep.subr.mxu0 0.0
    %385 = vmatpush1.msra.mxu0 0.0
    %386 = vmatprep.subr.mxu0 0.0
    %387 = vmatpush1.msra.mxu0 0.0
    %388 = vmatprep.subr.mxu0 0.0
    %389 = vmatpush1.msra.mxu0 0.0
    %390 = vmatprep.subr.mxu0 0.0
    %391 = vmatpush1.msra.mxu0 0.0
    %392 = vmatprep.subr.mxu0 0.0
    %393 = vmatpush1.msra.mxu0 0.0
    %394 = vmatprep.subr.mxu0 0.0
    %395 = vmatpush1.msra.mxu0 0.0
    %396 = vmatprep.subr.mxu0 0.0
    %397 = vmatpush1.msra.mxu0 0.0
    %398 = vmatprep.mubr.f32.mxu0 0.0
    %399 = vmatmul.mubr.f32.gmra.mrb[0].mxu0 %v122
    %v400 = vpop.f32.mrb[0].mxu0
    %v401 = vadd.f32 0.0, %v400
    %v402 = vpop.f32.mrb[0].mxu0
    %403 = vmatprep.mubr.f32.mxu0 0.0
    %404 = vmatmul.mubr.f32.gmra.mrb[0].mxu0 %v123
    %v405 = vpop.f32.mrb[0].mxu0
    %v406 = vadd.f32 0.0, %v405
    %v407 = vpop.f32.mrb[0].mxu0
    %408 = vmatprep.mubr.f32.mxu0 0.0
    %409 = vmatmul.mubr.f32.gmra.mrb[0].mxu0 %v124
    %v410 = vpop.f32.mrb[0].mxu0
    %v411 = vadd.f32 0.0, %v410
    %v412 = vpop.f32.mrb[0].mxu0
    %413 = vmatprep.mubr.f32.mxu0 0.0
    %414 = vmatmul.mubr.f32.gmra.mrb[0].mxu0 %v125
    %v415 = vpop.f32.mrb[0].mxu0
    %v416 = vadd.f32 0.0, %v415
    %v417 = vpop.f32.mrb[0].mxu0
    %418 = vdwg.mxu0
    %vm419 = vcmask 31744
    %v421 = vsel %vm419, %v209, 0
    %v424 = vsel %vm419, %v300, 0
    %v427 = vsel %vm419, %v305, 0
    %429 = vmatprep.subr.mxu0 0.0
    %430 = vmatpush1.xpose.msra.mxu0 %v424
    %431 = vmatprep.subr.mxu0 0.0
    %432 = vmatpush1.xpose.msra.mxu0 %v427
    %433 = vmatprep.subr.mxu0 0.0
    %434 = vmatpush1.xpose.msra.mxu0 0.0
    %435 = vmatprep.subr.mxu0 0.0
    %436 = vmatpush1.xpose.msra.mxu0 0.0
    %437 = vmatprep.subr.mxu0 0.0
    %438 = vmatpush1.xpose.msra.mxu0 0.0
    %439 = vmatprep.subr.mxu0 0.0
    %440 = vmatpush1.xpose.msra.mxu0 0.0
    %441 = vmatprep.subr.mxu0 0.0
    %442 = vmatpush1.xpose.msra.mxu0 0.0
    %443 = vmatprep.subr.mxu0 0.0
    %444 = vmatpush1.xpose.msra.mxu0 0.0
    %445 = vmatprep.subr.mxu0 0.0
    %446 = vmatpush1.xpose.msra.mxu0 0.0
    %447 = vmatprep.subr.mxu0 0.0
    %448 = vmatpush1.xpose.msra.mxu0 0.0
    %449 = vmatprep.subr.mxu0 0.0
    %450 = vmatpush1.xpose.msra.mxu0 0.0
    %451 = vmatprep.subr.mxu0 0.0
    %452 = vmatpush1.xpose.msra.mxu0 0.0
    %453 = vmatprep.subr.mxu0 0.0
    %454 = vmatpush1.xpose.msra.mxu0 0.0
    %455 = vmatprep.subr.mxu0 0.0
    %456 = vmatpush1.xpose.msra.mxu0 0.0
    %457 = vmatprep.subr.mxu0 0.0
    %458 = vmatpush1.xpose.msra.mxu0 0.0
    %459 = vmatprep.subr.mxu0 0.0
    %460 = vmatpush1.xpose.msra.mxu0 0.0
    %461 = vmatprep.subr.mxu0 0.0
    %462 = vmatpush1.xpose.msra.mxu0 0.0
    %463 = vmatprep.subr.mxu0 0.0
    %464 = vmatpush1.xpose.msra.mxu0 0.0
    %465 = vmatprep.subr.mxu0 0.0
    %466 = vmatpush1.xpose.msra.mxu0 0.0
    %467 = vmatprep.subr.mxu0 0.0
    %468 = vmatpush1.xpose.msra.mxu0 0.0
    %469 = vmatprep.subr.mxu0 0.0
    %470 = vmatpush1.xpose.msra.mxu0 0.0
    %471 = vmatprep.subr.mxu0 0.0
    %472 = vmatpush1.xpose.msra.mxu0 0.0
    %473 = vmatprep.subr.mxu0 0.0
    %474 = vmatpush1.xpose.msra.mxu0 0.0
    %475 = vmatprep.subr.mxu0 0.0
    %476 = vmatpush1.xpose.msra.mxu0 0.0
    %477 = vmatprep.subr.mxu0 0.0
    %478 = vmatpush1.xpose.msra.mxu0 0.0
    %479 = vmatprep.subr.mxu0 0.0
    %480 = vmatpush1.xpose.msra.mxu0 0.0
    %481 = vmatprep.subr.mxu0 0.0
    %482 = vmatpush1.xpose.msra.mxu0 0.0
    %483 = vmatprep.subr.mxu0 0.0
    %484 = vmatpush1.xpose.msra.mxu0 0.0
    %485 = vmatprep.subr.mxu0 0.0
    %486 = vmatpush1.xpose.msra.mxu0 0.0
    %487 = vmatprep.subr.mxu0 0.0
    %488 = vmatpush1.xpose.msra.mxu0 0.0
    %489 = vmatprep.subr.mxu0 0.0
    %490 = vmatpush1.xpose.msra.mxu0 0.0
    %491 = vmatprep.subr.mxu0 0.0
    %492 = vmatpush1.xpose.msra.mxu0 0.0
    %493 = vmatprep.mubr.f32.mxu0 0.0
    %494 = vmatmul.mubr.f32.gmra.mrb[0].mxu0 %v421
    %v495 = vpop.f32.mrb[0].mxu0
    %v496 = vadd.f32 0.0, %v495
    %v497 = vpop.f32.mrb[0].mxu0
    %498 = vdwg.mxu0
    %v500 = vsel %vm419, %v214, 0
    %v503 = vsel %vm419, %v310, 0
    %v506 = vsel %vm419, %v315, 0
    %508 = vmatprep.subr.mxu0 0.0
    %509 = vmatpush1.xpose.msra.mxu0 %v503
    %510 = vmatprep.subr.mxu0 0.0
    %511 = vmatpush1.xpose.msra.mxu0 %v506
    %512 = vmatprep.subr.mxu0 0.0
    %513 = vmatpush1.xpose.msra.mxu0 0.0
    %514 = vmatprep.subr.mxu0 0.0
    %515 = vmatpush1.xpose.msra.mxu0 0.0
    %516 = vmatprep.subr.mxu0 0.0
    %517 = vmatpush1.xpose.msra.mxu0 0.0
    %518 = vmatprep.subr.mxu0 0.0
    %519 = vmatpush1.xpose.msra.mxu0 0.0
    %520 = vmatprep.subr.mxu0 0.0
    %521 = vmatpush1.xpose.msra.mxu0 0.0
    %522 = vmatprep.subr.mxu0 0.0
    %523 = vmatpush1.xpose.msra.mxu0 0.0
    %524 = vmatprep.subr.mxu0 0.0
    %525 = vmatpush1.xpose.msra.mxu0 0.0
    %526 = vmatprep.subr.mxu0 0.0
    %527 = vmatpush1.xpose.msra.mxu0 0.0
    %528 = vmatprep.subr.mxu0 0.0
    %529 = vmatpush1.xpose.msra.mxu0 0.0
    %530 = vmatprep.subr.mxu0 0.0
    %531 = vmatpush1.xpose.msra.mxu0 0.0
    %532 = vmatprep.subr.mxu0 0.0
    %533 = vmatpush1.xpose.msra.mxu0 0.0
    %534 = vmatprep.subr.mxu0 0.0
    %535 = vmatpush1.xpose.msra.mxu0 0.0
    %536 = vmatprep.subr.mxu0 0.0
    %537 = vmatpush1.xpose.msra.mxu0 0.0
    %538 = vmatprep.subr.mxu0 0.0
    %539 = vmatpush1.xpose.msra.mxu0 0.0
    %540 = vmatprep.subr.mxu0 0.0
    %541 = vmatpush1.xpose.msra.mxu0 0.0
    %542 = vmatprep.subr.mxu0 0.0
    %543 = vmatpush1.xpose.msra.mxu0 0.0
    %544 = vmatprep.subr.mxu0 0.0
    %545 = vmatpush1.xpose.msra.mxu0 0.0
    %546 = vmatprep.subr.mxu0 0.0
    %547 = vmatpush1.xpose.msra.mxu0 0.0
    %548 = vmatprep.subr.mxu0 0.0
    %549 = vmatpush1.xpose.msra.mxu0 0.0
    %550 = vmatprep.subr.mxu0 0.0
    %551 = vmatpush1.xpose.msra.mxu0 0.0
    %552 = vmatprep.subr.mxu0 0.0
    %553 = vmatpush1.xpose.msra.mxu0 0.0
    %554 = vmatprep.subr.mxu0 0.0
    %555 = vmatpush1.xpose.msra.mxu0 0.0
    %556 = vmatprep.subr.mxu0 0.0
    %557 = vmatpush1.xpose.msra.mxu0 0.0
    %558 = vmatprep.subr.mxu0 0.0
    %559 = vmatpush1.xpose.msra.mxu0 0.0
    %560 = vmatprep.subr.mxu0 0.0
    %561 = vmatpush1.xpose.msra.mxu0 0.0
    %562 = vmatprep.subr.mxu0 0.0
    %563 = vmatpush1.xpose.msra.mxu0 0.0
    %564 = vmatprep.subr.mxu0 0.0
    %565 = vmatpush1.xpose.msra.mxu0 0.0
    %566 = vmatprep.subr.mxu0 0.0
    %567 = vmatpush1.xpose.msra.mxu0 0.0
    %568 = vmatprep.subr.mxu0 0.0
    %569 = vmatpush1.xpose.msra.mxu0 0.0
    %570 = vmatprep.subr.mxu0 0.0
    %571 = vmatpush1.xpose.msra.mxu0 0.0
    %572 = vmatprep.mubr.f32.mxu0 0.0
    %573 = vmatmul.mubr.f32.gmra.mrb[0].mxu0 %v500
    %v574 = vpop.f32.mrb[0].mxu0
    %v575 = vadd.f32 0.0, %v574
    %v576 = vpop.f32.mrb[0].mxu0
    %577 = vdwg.mxu0
    %v578 = vmul.f32 %v496, 0.5
    %v579 = vmul.f32 %v575, 0.5
    %vm580 = vcmask 130048
    %v581 = vsel %vm580, %v578, -inf
    %582 = vmax.xlane.f32.xlu0 %v581
    %v583 = vpop.xlane.xlu0 %582
    %v584 = vsel %vm580, %v579, -inf
    %585 = vmax.xlane.f32.xlu0 %v584
    %v586 = vpop.xlane.xlu0 %585
    %v587 = vsub.f32 %v578, %v583
    %v588 = vsub.f32 %v579, %v586
    %v589 = vmul.f32 %v587, 1.442695
    %v590 = vpow.pop %v589
    %v591 = vmul.f32 %v588, 1.442695
    %v592 = vpow.pop %v591
    %v593 = vsel %vm580, %v590, 0.0
    %594 = vadd.xlane.f32.xlu0 %v593
    %v595 = vpop.xlane.xlu0 %594
    %v596 = vsel %vm580, %v592, 0.0
    %597 = vadd.xlane.f32.xlu0 %v596
    %v598 = vpop.xlane.xlu0 %597
    %v599 = vrcp.pop %v595
    %v600 = vrcp.pop %v598
    %v601 = vmul.f32 %v590, %v599
    %v602 = vmul.f32 %v592, %v600
    %v604 = vsel %vm580, %v601, 0
    %606 = vmatprep.subr.mxu0 0.0
    %607 = vmatpush1.msra.mxu0 %v401
    %608 = vmatprep.subr.mxu0 0.0
    %609 = vmatpush1.msra.mxu0 %v406
    %610 = vmatprep.subr.mxu0 0.0
    %611 = vmatpush1.msra.mxu0 0.0
    %612 = vmatprep.subr.mxu0 0.0
    %613 = vmatpush1.msra.mxu0 0.0
    %614 = vmatprep.subr.mxu0 0.0
    %615 = vmatpush1.msra.mxu0 0.0
    %616 = vmatprep.subr.mxu0 0.0
    %617 = vmatpush1.msra.mxu0 0.0
    %618 = vmatprep.subr.mxu0 0.0
    %619 = vmatpush1.msra.mxu0 0.0
    %620 = vmatprep.subr.mxu0 0.0
    %621 = vmatpush1.msra.mxu0 0.0
    %622 = vmatprep.subr.mxu0 0.0
    %623 = vmatpush1.msra.mxu0 0.0
    %624 = vmatprep.subr.mxu0 0.0
    %625 = vmatpush1.msra.mxu0 0.0
    %626 = vmatprep.subr.mxu0 0.0
    %627 = vmatpush1.msra.mxu0 0.0
    %628 = vmatprep.subr.mxu0 0.0
    %629 = vmatpush1.msra.mxu0 0.0
    %630 = vmatprep.subr.mxu0 0.0
    %631 = vmatpush1.msra.mxu0 0.0
    %632 = vmatprep.subr.mxu0 0.0
    %633 = vmatpush1.msra.mxu0 0.0
    %634 = vmatprep.subr.mxu0 0.0
    %635 = vmatpush1.msra.mxu0 0.0
    %636 = vmatprep.subr.mxu0 0.0
    %637 = vmatpush1.msra.mxu0 0.0
    %638 = vmatprep.subr.mxu0 0.0
    %639 = vmatpush1.msra.mxu0 0.0
    %640 = vmatprep.subr.mxu0 0.0
    %641 = vmatpush1.msra.mxu0 0.0
    %642 = vmatprep.subr.mxu0 0.0
    %643 = vmatpush1.msra.mxu0 0.0
    %644 = vmatprep.subr.mxu0 0.0
    %645 = vmatpush1.msra.mxu0 0.0
    %646 = vmatprep.subr.mxu0 0.0
    %647 = vmatpush1.msra.mxu0 0.0
    %648 = vmatprep.subr.mxu0 0.0
    %649 = vmatpush1.msra.mxu0 0.0
    %650 = vmatprep.subr.mxu0 0.0
    %651 = vmatpush1.msra.mxu0 0.0
    %652 = vmatprep.subr.mxu0 0.0
    %653 = vmatpush1.msra.mxu0 0.0
    %654 = vmatprep.subr.mxu0 0.0
    %655 = vmatpush1.msra.mxu0 0.0
    %656 = vmatprep.subr.mxu0 0.0
    %657 = vmatpush1.msra.mxu0 0.0
    %658 = vmatprep.subr.mxu0 0.0
    %659 = vmatpush1.msra.mxu0 0.0
    %660 = vmatprep.subr.mxu0 0.0
    %661 = vmatpush1.msra.mxu0 0.0
    %662 = vmatprep.subr.mxu0 0.0
    %663 = vmatpush1.msra.mxu0 0.0
    %664 = vmatprep.subr.mxu0 0.0
    %665 = vmatpush1.msra.mxu0 0.0
    %666 = vmatprep.subr.mxu0 0.0
    %667 = vmatpush1.msra.mxu0 0.0
    %668 = vmatprep.subr.mxu0 0.0
    %669 = vmatpush1.msra.mxu0 0.0
    %670 = vmatprep.mubr.f32.mxu0 0.0
    %671 = vmatmul.mubr.f32.gmra.mrb[0].mxu0 %v604
    %v672 = vpop.f32.mrb[0].mxu0
    %v673 = vadd.f32 0.0, %v672
    %v674 = vpop.f32.mrb[0].mxu0
    %675 = vdwg.mxu0
    %v677 = vsel %vm580, %v602, 0
    %679 = vmatprep.subr.mxu0 0.0
    %680 = vmatpush1.msra.mxu0 %v411
    %681 = vmatprep.subr.mxu0 0.0
    %682 = vmatpush1.msra.mxu0 %v416
    %683 = vmatprep.subr.mxu0 0.0
    %684 = vmatpush1.msra.mxu0 0.0
    %685 = vmatprep.subr.mxu0 0.0
    %686 = vmatpush1.msra.mxu0 0.0
    %687 = vmatprep.subr.mxu0 0.0
    %688 = vmatpush1.msra.mxu0 0.0
    %689 = vmatprep.subr.mxu0 0.0
    %690 = vmatpush1.msra.mxu0 0.0
    %691 = vmatprep.subr.mxu0 0.0
    %692 = vmatpush1.msra.mxu0 0.0
    %693 = vmatprep.subr.mxu0 0.0
    %694 = vmatpush1.msra.mxu0 0.0
    %695 = vmatprep.subr.mxu0 0.0
    %696 = vmatpush1.msra.mxu0 0.0
    %697 = vmatprep.subr.mxu0 0.0
    %698 = vmatpush1.msra.mxu0 0.0
    %699 = vmatprep.subr.mxu0 0.0
    %700 = vmatpush1.msra.mxu0 0.0
    %701 = vmatprep.subr.mxu0 0.0
    %702 = vmatpush1.msra.mxu0 0.0
    %703 = vmatprep.subr.mxu0 0.0
    %704 = vmatpush1.msra.mxu0 0.0
    %705 = vmatprep.subr.mxu0 0.0
    %706 = vmatpush1.msra.mxu0 0.0
    %707 = vmatprep.subr.mxu0 0.0
    %708 = vmatpush1.msra.mxu0 0.0
    %709 = vmatprep.subr.mxu0 0.0
    %710 = vmatpush1.msra.mxu0 0.0
    %711 = vmatprep.subr.mxu0 0.0
    %712 = vmatpush1.msra.mxu0 0.0
    %713 = vmatprep.subr.mxu0 0.0
    %714 = vmatpush1.msra.mxu0 0.0
    %715 = vmatprep.subr.mxu0 0.0
    %716 = vmatpush1.msra.mxu0 0.0
    %717 = vmatprep.subr.mxu0 0.0
    %718 = vmatpush1.msra.mxu0 0.0
    %719 = vmatprep.subr.mxu0 0.0
    %720 = vmatpush1.msra.mxu0 0.0
    %721 = vmatprep.subr.mxu0 0.0
    %722 = vmatpush1.msra.mxu0 0.0
    %723 = vmatprep.subr.mxu0 0.0
    %724 = vmatpush1.msra.mxu0 0.0
    %725 = vmatprep.subr.mxu0 0.0
    %726 = vmatpush1.msra.mxu0 0.0
    %727 = vmatprep.subr.mxu0 0.0
    %728 = vmatpush1.msra.mxu0 0.0
    %729 = vmatprep.subr.mxu0 0.0
    %730 = vmatpush1.msra.mxu0 0.0
    %731 = vmatprep.subr.mxu0 0.0
    %732 = vmatpush1.msra.mxu0 0.0
    %733 = vmatprep.subr.mxu0 0.0
    %734 = vmatpush1.msra.mxu0 0.0
    %735 = vmatprep.subr.mxu0 0.0
    %736 = vmatpush1.msra.mxu0 0.0
    %737 = vmatprep.subr.mxu0 0.0
    %738 = vmatpush1.msra.mxu0 0.0
    %739 = vmatprep.subr.mxu0 0.0
    %740 = vmatpush1.msra.mxu0 0.0
    %741 = vmatprep.subr.mxu0 0.0
    %742 = vmatpush1.msra.mxu0 0.0
    %743 = vmatprep.mubr.f32.mxu0 0.0
    %744 = vmatmul.mubr.f32.gmra.mrb[0].mxu0 %v677
    %v745 = vpop.f32.mrb[0].mxu0
    %v746 = vadd.f32 0.0, %v745
    %v747 = vpop.f32.mrb[0].mxu0
    %748 = vdwg.mxu0
    %v749 = vld [vmem:[#allocation11] sm:$0xf]
    %750 = vrot.lane.b32.xlu0 %v209, 124
    %v751 = vpop.permute.xlu0 %750
    %752 = vrot.lane.b32.xlu0 %v300, 124
    %v753 = vpop.permute.xlu0 %752
    %754 = vrot.lane.b32.xlu0 %v305, 124
    %v755 = vpop.permute.xlu0 %754
    %v756 = vsel %vm419, %v751, 0
    %v758 = vsel %vm419, %v753, 0
    %v760 = vsel %vm419, %v755, 0
    %762 = vmatprep.subr.mxu0 0.0
    %763 = vmatpush1.xpose.msra.mxu0 %v758
    %764 = vmatprep.subr.mxu0 0.0
    %765 = vmatpush1.xpose.msra.mxu0 %v760
    %766 = vmatprep.subr.mxu0 0.0
    %767 = vmatpush1.xpose.msra.mxu0 0.0
    %768 = vmatprep.subr.mxu0 0.0
    %769 = vmatpush1.xpose.msra.mxu0 0.0
    %770 = vmatprep.subr.mxu0 0.0
    %771 = vmatpush1.xpose.msra.mxu0 0.0
    %772 = vmatprep.subr.mxu0 0.0
    %773 = vmatpush1.xpose.msra.mxu0 0.0
    %774 = vmatprep.subr.mxu0 0.0
    %775 = vmatpush1.xpose.msra.mxu0 0.0
    %776 = vmatprep.subr.mxu0 0.0
    %777 = vmatpush1.xpose.msra.mxu0 0.0
    %778 = vmatprep.subr.mxu0 0.0
    %779 = vmatpush1.xpose.msra.mxu0 0.0
    %780 = vmatprep.subr.mxu0 0.0
    %781 = vmatpush1.xpose.msra.mxu0 0.0
    %782 = vmatprep.subr.mxu0 0.0
    %783 = vmatpush1.xpose.msra.mxu0 0.0
    %784 = vmatprep.subr.mxu0 0.0
    %785 = vmatpush1.xpose.msra.mxu0 0.0
    %786 = vmatprep.subr.mxu0 0.0
    %787 = vmatpush1.xpose.msra.mxu0 0.0
    %788 = vmatprep.subr.mxu0 0.0
    %789 = vmatpush1.xpose.msra.mxu0 0.0
    %790 = vmatprep.subr.mxu0 0.0
    %791 = vmatpush1.xpose.msra.mxu0 0.0
    %792 = vmatprep.subr.mxu0 0.0
    %793 = vmatpush1.xpose.msra.mxu0 0.0
    %794 = vmatprep.subr.mxu0 0.0
    %795 = vmatpush1.xpose.msra.mxu0 0.0
    %796 = vmatprep.subr.mxu0 0.0
    %797 = vmatpush1.xpose.msra.mxu0 0.0
    %798 = vmatprep.subr.mxu0 0.0
    %799 = vmatpush1.xpose.msra.mxu0 0.0
    %800 = vmatprep.subr.mxu0 0.0
    %801 = vmatpush1.xpose.msra.mxu0 0.0
    %802 = vmatprep.subr.mxu0 0.0
    %803 = vmatpush1.xpose.msra.mxu0 0.0
    %804 = vmatprep.subr.mxu0 0.0
    %805 = vmatpush1.xpose.msra.mxu0 0.0
    %806 = vmatprep.subr.mxu0 0.0
    %807 = vmatpush1.xpose.msra.mxu0 0.0
    %808 = vmatprep.subr.mxu0 0.0
    %809 = vmatpush1.xpose.msra.mxu0 0.0
    %810 = vmatprep.subr.mxu0 0.0
    %811 = vmatpush1.xpose.msra.mxu0 0.0
    %812 = vmatprep.subr.mxu0 0.0
    %813 = vmatpush1.xpose.msra.mxu0 0.0
    %814 = vmatprep.subr.mxu0 0.0
    %815 = vmatpush1.xpose.msra.mxu0 0.0
    %816 = vmatprep.subr.mxu0 0.0
    %817 = vmatpush1.xpose.msra.mxu0 0.0
    %818 = vmatprep.subr.mxu0 0.0
    %819 = vmatpush1.xpose.msra.mxu0 0.0
    %820 = vmatprep.subr.mxu0 0.0
    %821 = vmatpush1.xpose.msra.mxu0 0.0
    %822 = vmatprep.subr.mxu0 0.0
    %823 = vmatpush1.xpose.msra.mxu0 0.0
    %824 = vmatprep.subr.mxu0 0.0
    %825 = vmatpush1.xpose.msra.mxu0 0.0
    %826 = vmatprep.mubr.f32.mxu0 0.0
    %827 = vmatmul.mubr.f32.gmra.mrb[0].mxu0 %v756
    %v828 = vpop.f32.mrb[0].mxu0
    %v829 = vadd.f32 0.0, %v828
    %v830 = vpop.f32.mrb[0].mxu0
    %831 = vdwg.mxu0
    %832 = vrot.lane.b32.xlu0 %v214, 124
    %v833 = vpop.permute.xlu0 %832
    %834 = vrot.lane.b32.xlu0 %v310, 124
    %v835 = vpop.permute.xlu0 %834
    %836 = vrot.lane.b32.xlu0 %v315, 124
    %v837 = vpop.permute.xlu0 %836
    %v838 = vsel %vm419, %v833, 0
    %v840 = vsel %vm419, %v835, 0
    %v842 = vsel %vm419, %v837, 0
    %844 = vmatprep.subr.mxu0 0.0
    %845 = vmatpush1.xpose.msra.mxu0 %v840
    %846 = vmatprep.subr.mxu0 0.0
    %847 = vmatpush1.xpose.msra.mxu0 %v842
    %848 = vmatprep.subr.mxu0 0.0
    %849 = vmatpush1.xpose.msra.mxu0 0.0
    %850 = vmatprep.subr.mxu0 0.0
    %851 = vmatpush1.xpose.msra.mxu0 0.0
    %852 = vmatprep.subr.mxu0 0.0
    %853 = vmatpush1.xpose.msra.mxu0 0.0
    %854 = vmatprep.subr.mxu0 0.0
    %855 = vmatpush1.xpose.msra.mxu0 0.0
    %856 = vmatprep.subr.mxu0 0.0
    %857 = vmatpush1.xpose.msra.mxu0 0.0
    %858 = vmatprep.subr.mxu0 0.0
    %859 = vmatpush1.xpose.msra.mxu0 0.0
    %860 = vmatprep.subr.mxu0 0.0
    %861 = vmatpush1.xpose.msra.mxu0 0.0
    %862 = vmatprep.subr.mxu0 0.0
    %863 = vmatpush1.xpose.msra.mxu0 0.0
    %864 = vmatprep.subr.mxu0 0.0
    %865 = vmatpush1.xpose.msra.mxu0 0.0
    %866 = vmatprep.subr.mxu0 0.0
    %867 = vmatpush1.xpose.msra.mxu0 0.0
    %868 = vmatprep.subr.mxu0 0.0
    %869 = vmatpush1.xpose.msra.mxu0 0.0
    %870 = vmatprep.subr.mxu0 0.0
    %871 = vmatpush1.xpose.msra.mxu0 0.0
    %872 = vmatprep.subr.mxu0 0.0
    %873 = vmatpush1.xpose.msra.mxu0 0.0
    %874 = vmatprep.subr.mxu0 0.0
    %875 = vmatpush1.xpose.msra.mxu0 0.0
    %876 = vmatprep.subr.mxu0 0.0
    %877 = vmatpush1.xpose.msra.mxu0 0.0
    %878 = vmatprep.subr.mxu0 0.0
    %879 = vmatpush1.xpose.msra.mxu0 0.0
    %880 = vmatprep.subr.mxu0 0.0
    %881 = vmatpush1.xpose.msra.mxu0 0.0
    %882 = vmatprep.subr.mxu0 0.0
    %883 = vmatpush1.xpose.msra.mxu0 0.0
    %884 = vmatprep.subr.mxu0 0.0
    %885 = vmatpush1.xpose.msra.mxu0 0.0
    %886 = vmatprep.subr.mxu0 0.0
    %887 = vmatpush1.xpose.msra.mxu0 0.0
    %888 = vmatprep.subr.mxu0 0.0
    %889 = vmatpush1.xpose.msra.mxu0 0.0
    %890 = vmatprep.subr.mxu0 0.0
    %891 = vmatpush1.xpose.msra.mxu0 0.0
    %892 = vmatprep.subr.mxu0 0.0
    %893 = vmatpush1.xpose.msra.mxu0 0.0
    %894 = vmatprep.subr.mxu0 0.0
    %895 = vmatpush1.xpose.msra.mxu0 0.0
    %896 = vmatprep.subr.mxu0 0.0
    %897 = vmatpush1.xpose.msra.mxu0 0.0
    %898 = vmatprep.subr.mxu0 0.0
    %899 = vmatpush1.xpose.msra.mxu0 0.0
    %900 = vmatprep.subr.mxu0 0.0
    %901 = vmatpush1.xpose.msra.mxu0 0.0
    %902 = vmatprep.subr.mxu0 0.0
    %903 = vmatpush1.xpose.msra.mxu0 0.0
    %904 = vmatprep.subr.mxu0 0.0
    %905 = vmatpush1.xpose.msra.mxu0 0.0
    %906 = vmatprep.subr.mxu0 0.0
    %907 = vmatpush1.xpose.msra.mxu0 0.0
    %908 = vmatprep.mubr.f32.mxu0 0.0
    %909 = vmatmul.mubr.f32.gmra.mrb[0].mxu0 %v838
    %v910 = vpop.f32.mrb[0].mxu0
    %v911 = vadd.f32 0.0, %v910
    %v912 = vpop.f32.mrb[0].mxu0
    %913 = vdwg.mxu0
    %v914 = vmul.f32 %v829, 0.5
    %v915 = vmul.f32 %v911, 0.5
    %v916 = vsel %vm580, %v914, -inf
    %917 = vmax.xlane.f32.xlu0 %v916
    %v918 = vpop.xlane.xlu0 %917
    %v919 = vsel %vm580, %v915, -inf
    %920 = vmax.xlane.f32.xlu0 %v919
    %v921 = vpop.xlane.xlu0 %920
    %v922 = vsub.f32 %v914, %v918
    %v923 = vsub.f32 %v915, %v921
    %v924 = vmul.f32 %v922, 1.442695
    %v925 = vpow.pop %v924
    %v926 = vmul.f32 %v923, 1.442695
    %v927 = vpow.pop %v926
    %v928 = vsel %vm580, %v925, 0.0
    %929 = vadd.xlane.f32.xlu0 %v928
    %v930 = vpop.xlane.xlu0 %929
    %v931 = vsel %vm580, %v927, 0.0
    %932 = vadd.xlane.f32.xlu0 %v931
    %v933 = vpop.xlane.xlu0 %932
    %v934 = vrcp.pop %v930
    %v935 = vrcp.pop %v933
    %v936 = vmul.f32 %v925, %v934
    %v937 = vmul.f32 %v927, %v935
    %940 = vrot.lane.b32.xlu0 %v401, 124
    %v941 = vpop.permute.xlu0 %940
    %942 = vrot.lane.b32.xlu0 %v406, 124
    %v943 = vpop.permute.xlu0 %942
    %v947 = vsel %vm580, %v936, 0
    %949 = vmatprep.subr.mxu0 0.0
    %950 = vmatpush1.msra.mxu0 %v941
    %951 = vmatprep.subr.mxu0 0.0
    %952 = vmatpush1.msra.mxu0 %v943
    %953 = vmatprep.subr.mxu0 0.0
    %954 = vmatpush1.msra.mxu0 0.0
    %955 = vmatprep.subr.mxu0 0.0
    %956 = vmatpush1.msra.mxu0 0.0
    %957 = vmatprep.subr.mxu0 0.0
    %958 = vmatpush1.msra.mxu0 0.0
    %959 = vmatprep.subr.mxu0 0.0
    %960 = vmatpush1.msra.mxu0 0.0
    %961 = vmatprep.subr.mxu0 0.0
    %962 = vmatpush1.msra.mxu0 0.0
    %963 = vmatprep.subr.mxu0 0.0
    %964 = vmatpush1.msra.mxu0 0.0
    %965 = vmatprep.subr.mxu0 0.0
    %966 = vmatpush1.msra.mxu0 0.0
    %967 = vmatprep.subr.mxu0 0.0
    %968 = vmatpush1.msra.mxu0 0.0
    %969 = vmatprep.subr.mxu0 0.0
    %970 = vmatpush1.msra.mxu0 0.0
    %971 = vmatprep.subr.mxu0 0.0
    %972 = vmatpush1.msra.mxu0 0.0
    %973 = vmatprep.subr.mxu0 0.0
    %974 = vmatpush1.msra.mxu0 0.0
    %975 = vmatprep.subr.mxu0 0.0
    %976 = vmatpush1.msra.mxu0 0.0
    %977 = vmatprep.subr.mxu0 0.0
    %978 = vmatpush1.msra.mxu0 0.0
    %979 = vmatprep.subr.mxu0 0.0
    %980 = vmatpush1.msra.mxu0 0.0
    %981 = vmatprep.subr.mxu0 0.0
    %982 = vmatpush1.msra.mxu0 0.0
    %983 = vmatprep.subr.mxu0 0.0
    %984 = vmatpush1.msra.mxu0 0.0
    %985 = vmatprep.subr.mxu0 0.0
    %986 = vmatpush1.msra.mxu0 0.0
    %987 = vmatprep.subr.mxu0 0.0
    %988 = vmatpush1.msra.mxu0 0.0
    %989 = vmatprep.subr.mxu0 0.0
    %990 = vmatpush1.msra.mxu0 0.0
    %991 = vmatprep.subr.mxu0 0.0
    %992 = vmatpush1.msra.mxu0 0.0
    %993 = vmatprep.subr.mxu0 0.0
    %994 = vmatpush1.msra.mxu0 0.0
    %995 = vmatprep.subr.mxu0 0.0
    %996 = vmatpush1.msra.mxu0 0.0
    %997 = vmatprep.subr.mxu0 0.0
    %998 = vmatpush1.msra.mxu0 0.0
    %999 = vmatprep.subr.mxu0 0.0
    %1000 = vmatpush1.msra.mxu0 0.0
    %1001 = vmatprep.subr.mxu0 0.0
    %1002 = vmatpush1.msra.mxu0 0.0
    %1003 = vmatprep.subr.mxu0 0.0
    %1004 = vmatpush1.msra.mxu0 0.0
    %1005 = vmatprep.subr.mxu0 0.0
    %1006 = vmatpush1.msra.mxu0 0.0
    %1007 = vmatprep.subr.mxu0 0.0
    %1008 = vmatpush1.msra.mxu0 0.0
    %1009 = vmatprep.subr.mxu0 0.0
    %1010 = vmatpush1.msra.mxu0 0.0
    %1011 = vmatprep.subr.mxu0 0.0
    %1012 = vmatpush1.msra.mxu0 0.0
    %1013 = vmatprep.mubr.f32.mxu0 0.0
    %1014 = vmatmul.mubr.f32.gmra.mrb[0].mxu0 %v947
    %v1015 = vpop.f32.mrb[0].mxu0
    %v1016 = vadd.f32 0.0, %v1015
    %v1017 = vpop.f32.mrb[0].mxu0
    %1018 = vdwg.mxu0
    %1021 = vrot.lane.b32.xlu0 %v411, 124
    %v1022 = vpop.permute.xlu0 %1021
    %1023 = vrot.lane.b32.xlu0 %v416, 124
    %v1024 = vpop.permute.xlu0 %1023
    %v1028 = vsel %vm580, %v937, 0
    %1030 = vmatprep.subr.mxu0 0.0
    %1031 = vmatpush1.msra.mxu0 %v1022
    %1032 = vmatprep.subr.mxu0 0.0
    %1033 = vmatpush1.msra.mxu0 %v1024
    %1034 = vmatprep.subr.mxu0 0.0
    %1035 = vmatpush1.msra.mxu0 0.0
    %1036 = vmatprep.subr.mxu0 0.0
    %1037 = vmatpush1.msra.mxu0 0.0
    %1038 = vmatprep.subr.mxu0 0.0
    %1039 = vmatpush1.msra.mxu0 0.0
    %1040 = vmatprep.subr.mxu0 0.0
    %1041 = vmatpush1.msra.mxu0 0.0
    %1042 = vmatprep.subr.mxu0 0.0
    %1043 = vmatpush1.msra.mxu0 0.0
    %1044 = vmatprep.subr.mxu0 0.0
    %1045 = vmatpush1.msra.mxu0 0.0
    %1046 = vmatprep.subr.mxu0 0.0
    %1047 = vmatpush1.msra.mxu0 0.0
    %1048 = vmatprep.subr.mxu0 0.0
    %1049 = vmatpush1.msra.mxu0 0.0
    %1050 = vmatprep.subr.mxu0 0.0
    %1051 = vmatpush1.msra.mxu0 0.0
    %1052 = vmatprep.subr.mxu0 0.0
    %1053 = vmatpush1.msra.mxu0 0.0
    %1054 = vmatprep.subr.mxu0 0.0
    %1055 = vmatpush1.msra.mxu0 0.0
    %1056 = vmatprep.subr.mxu0 0.0
    %1057 = vmatpush1.msra.mxu0 0.0
    %1058 = vmatprep.subr.mxu0 0.0
    %1059 = vmatpush1.msra.mxu0 0.0
    %1060 = vmatprep.subr.mxu0 0.0
    %1061 = vmatpush1.msra.mxu0 0.0
    %1062 = vmatprep.subr.mxu0 0.0
    %1063 = vmatpush1.msra.mxu0 0.0
    %1064 = vmatprep.subr.mxu0 0.0
    %1065 = vmatpush1.msra.mxu0 0.0
    %1066 = vmatprep.subr.mxu0 0.0
    %1067 = vmatpush1.msra.mxu0 0.0
    %1068 = vmatprep.subr.mxu0 0.0
    %1069 = vmatpush1.msra.mxu0 0.0
    %1070 = vmatprep.subr.mxu0 0.0
    %1071 = vmatpush1.msra.mxu0 0.0
    %1072 = vmatprep.subr.mxu0 0.0
    %1073 = vmatpush1.msra.mxu0 0.0
    %1074 = vmatprep.subr.mxu0 0.0
    %1075 = vmatpush1.msra.mxu0 0.0
    %1076 = vmatprep.subr.mxu0 0.0
    %1077 = vmatpush1.msra.mxu0 0.0
    %1078 = vmatprep.subr.mxu0 0.0
    %1079 = vmatpush1.msra.mxu0 0.0
    %1080 = vmatprep.subr.mxu0 0.0
    %1081 = vmatpush1.msra.mxu0 0.0
    %1082 = vmatprep.subr.mxu0 0.0
    %1083 = vmatpush1.msra.mxu0 0.0
    %1084 = vmatprep.subr.mxu0 0.0
    %1085 = vmatpush1.msra.mxu0 0.0
    %1086 = vmatprep.subr.mxu0 0.0
    %1087 = vmatpush1.msra.mxu0 0.0
    %1088 = vmatprep.subr.mxu0 0.0
    %1089 = vmatpush1.msra.mxu0 0.0
    %1090 = vmatprep.subr.mxu0 0.0
    %1091 = vmatpush1.msra.mxu0 0.0
    %1092 = vmatprep.subr.mxu0 0.0
    %1093 = vmatpush1.msra.mxu0 0.0
    %1094 = vmatprep.mubr.f32.mxu0 0.0
    %1095 = vmatmul.mubr.f32.gmra.mrb[0].mxu0 %v1028
    %v1096 = vpop.f32.mrb[0].mxu0
    %v1097 = vadd.f32 0.0, %v1096
    %v1098 = vpop.f32.mrb[0].mxu0
    %1099 = vdwg.mxu0
    %v1100 = vld [vmem:[#allocation11 + $0x4] sm:$0xf]
    %v1102 = vsel %vm419, %v1016, 0
    %v1105 = vsel %vm419, %v1097, 0
    %vm1107 = vcmask 1043456
    %v1109 = vsel %vm1107, %v1100, 0
    %1111 = vmatprep.subr.mxu0 0.0
    %1112 = vmatpush1.msra.mxu0 %v1109
    %1113 = vmatprep.subr.mxu0 0.0
    %1114 = vmatpush1.msra.mxu0 0.0
    %1115 = vmatprep.subr.mxu0 0.0
    %1116 = vmatpush1.msra.mxu0 0.0
    %1117 = vmatprep.subr.mxu0 0.0
    %1118 = vmatpush1.msra.mxu0 0.0
    %1119 = vmatprep.subr.mxu0 0.0
    %1120 = vmatpush1.msra.mxu0 0.0
    %1121 = vmatprep.subr.mxu0 0.0
    %1122 = vmatpush1.msra.mxu0 0.0
    %1123 = vmatprep.subr.mxu0 0.0
    %1124 = vmatpush1.msra.mxu0 0.0
    %1125 = vmatprep.subr.mxu0 0.0
    %1126 = vmatpush1.msra.mxu0 0.0
    %1127 = vmatprep.subr.mxu0 0.0
    %1128 = vmatpush1.msra.mxu0 0.0
    %1129 = vmatprep.subr.mxu0 0.0
    %1130 = vmatpush1.msra.mxu0 0.0
    %1131 = vmatprep.subr.mxu0 0.0
    %1132 = vmatpush1.msra.mxu0 0.0
    %1133 = vmatprep.subr.mxu0 0.0
    %1134 = vmatpush1.msra.mxu0 0.0
    %1135 = vmatprep.subr.mxu0 0.0
    %1136 = vmatpush1.msra.mxu0 0.0
    %1137 = vmatprep.subr.mxu0 0.0
    %1138 = vmatpush1.msra.mxu0 0.0
    %1139 = vmatprep.subr.mxu0 0.0
    %1140 = vmatpush1.msra.mxu0 0.0
    %1141 = vmatprep.subr.mxu0 0.0
    %1142 = vmatpush1.msra.mxu0 0.0
    %1143 = vmatprep.subr.mxu0 0.0
    %1144 = vmatpush1.msra.mxu0 0.0
    %1145 = vmatprep.subr.mxu0 0.0
    %1146 = vmatpush1.msra.mxu0 0.0
    %1147 = vmatprep.subr.mxu0 0.0
    %1148 = vmatpush1.msra.mxu0 0.0
    %1149 = vmatprep.subr.mxu0 0.0
    %1150 = vmatpush1.msra.mxu0 0.0
    %1151 = vmatprep.subr.mxu0 0.0
    %1152 = vmatpush1.msra.mxu0 0.0
    %1153 = vmatprep.subr.mxu0 0.0
    %1154 = vmatpush1.msra.mxu0 0.0
    %1155 = vmatprep.subr.mxu0 0.0
    %1156 = vmatpush1.msra.mxu0 0.0
    %1157 = vmatprep.subr.mxu0 0.0
    %1158 = vmatpush1.msra.mxu0 0.0
    %1159 = vmatprep.subr.mxu0 0.0
    %1160 = vmatpush1.msra.mxu0 0.0
    %1161 = vmatprep.subr.mxu0 0.0
    %1162 = vmatpush1.msra.mxu0 0.0
    %1163 = vmatprep.subr.mxu0 0.0
    %1164 = vmatpush1.msra.mxu0 0.0
    %1165 = vmatprep.subr.mxu0 0.0
    %1166 = vmatpush1.msra.mxu0 0.0
    %1167 = vmatprep.subr.mxu0 0.0
    %1168 = vmatpush1.msra.mxu0 0.0
    %1169 = vmatprep.subr.mxu0 0.0
    %1170 = vmatpush1.msra.mxu0 0.0
    %1171 = vmatprep.subr.mxu0 0.0
    %1172 = vmatpush1.msra.mxu0 0.0
    %1173 = vmatprep.subr.mxu0 0.0
    %1174 = vmatpush1.msra.mxu0 0.0
    %1175 = vmatprep.mubr.f32.mxu0 0.0
    %1176 = vmatmul.mubr.f32.gmra.mrb[0].mxu0 %v1102
    %v1177 = vpop.f32.mrb[0].mxu0
    %v1178 = vadd.f32 0.0, %v1177
    %v1179 = vpop.f32.mrb[0].mxu0
    %1180 = vmatprep.mubr.f32.mxu0 0.0
    %1181 = vmatmul.mubr.f32.gmra.mrb[0].mxu0 %v1105
    %v1182 = vpop.f32.mrb[0].mxu0
    %v1183 = vadd.f32 0.0, %v1182
    %v1184 = vpop.f32.mrb[0].mxu0
    %1185 = vdwg.mxu0
    %v1187 = vsel %vm419, %v673, 0
    %v1190 = vsel %vm419, %v746, 0
    %v1193 = vsel %vm1107, %v749, 0
    %1195 = vmatprep.subr.mxu0 0.0
    %1196 = vmatpush1.msra.mxu0 %v1193
    %1197 = vmatprep.subr.mxu0 0.0
    %1198 = vmatpush1.msra.mxu0 0.0
    %1199 = vmatprep.subr.mxu0 0.0
    %1200 = vmatpush1.msra.mxu0 0.0
    %1201 = vmatprep.subr.mxu0 0.0
    %1202 = vmatpush1.msra.mxu0 0.0
    %1203 = vmatprep.subr.mxu0 0.0
    %1204 = vmatpush1.msra.mxu0 0.0
    %1205 = vmatprep.subr.mxu0 0.0
    %1206 = vmatpush1.msra.mxu0 0.0
    %1207 = vmatprep.subr.mxu0 0.0
    %1208 = vmatpush1.msra.mxu0 0.0
    %1209 = vmatprep.subr.mxu0 0.0
    %1210 = vmatpush1.msra.mxu0 0.0
    %1211 = vmatprep.subr.mxu0 0.0
    %1212 = vmatpush1.msra.mxu0 0.0
    %1213 = vmatprep.subr.mxu0 0.0
    %1214 = vmatpush1.msra.mxu0 0.0
    %1215 = vmatprep.subr.mxu0 0.0
    %1216 = vmatpush1.msra.mxu0 0.0
    %1217 = vmatprep.subr.mxu0 0.0
    %1218 = vmatpush1.msra.mxu0 0.0
    %1219 = vmatprep.subr.mxu0 0.0
    %1220 = vmatpush1.msra.mxu0 0.0
    %1221 = vmatprep.subr.mxu0 0.0
    %1222 = vmatpush1.msra.mxu0 0.0
    %1223 = vmatprep.subr.mxu0 0.0
    %1224 = vmatpush1.msra.mxu0 0.0
    %1225 = vmatprep.subr.mxu0 0.0
    %1226 = vmatpush1.msra.mxu0 0.0
    %1227 = vmatprep.subr.mxu0 0.0
    %1228 = vmatpush1.msra.mxu0 0.0
    %1229 = vmatprep.subr.mxu0 0.0
    %1230 = vmatpush1.msra.mxu0 0.0
    %1231 = vmatprep.subr.mxu0 0.0
    %1232 = vmatpush1.msra.mxu0 0.0
    %1233 = vmatprep.subr.mxu0 0.0
    %1234 = vmatpush1.msra.mxu0 0.0
    %1235 = vmatprep.subr.mxu0 0.0
    %1236 = vmatpush1.msra.mxu0 0.0
    %1237 = vmatprep.subr.mxu0 0.0
    %1238 = vmatpush1.msra.mxu0 0.0
    %1239 = vmatprep.subr.mxu0 0.0
    %1240 = vmatpush1.msra.mxu0 0.0
    %1241 = vmatprep.subr.mxu0 0.0
    %1242 = vmatpush1.msra.mxu0 0.0
    %1243 = vmatprep.subr.mxu0 0.0
    %1244 = vmatpush1.msra.mxu0 0.0
    %1245 = vmatprep.subr.mxu0 0.0
    %1246 = vmatpush1.msra.mxu0 0.0
    %1247 = vmatprep.subr.mxu0 0.0
    %1248 = vmatpush1.msra.mxu0 0.0
    %1249 = vmatprep.subr.mxu0 0.0
    %1250 = vmatpush1.msra.mxu0 0.0
    %1251 = vmatprep.subr.mxu0 0.0
    %1252 = vmatpush1.msra.mxu0 0.0
    %1253 = vmatprep.subr.mxu0 0.0
    %1254 = vmatpush1.msra.mxu0 0.0
    %1255 = vmatprep.subr.mxu0 0.0
    %1256 = vmatpush1.msra.mxu0 0.0
    %1257 = vmatprep.subr.mxu0 0.0
    %1258 = vmatpush1.msra.mxu0 0.0
    %1259 = vmatprep.mubr.f32.mxu0 0.0
    %1260 = vmatmul.mubr.f32.gmra.mrb[0].mxu0 %v1187
    %v1261 = vpop.f32.mrb[0].mxu0
    %v1262 = vadd.f32 %v1178, %v1261
    %v1263 = vpop.f32.mrb[0].mxu0
    %1264 = vmatprep.mubr.f32.mxu0 0.0
    %1265 = vmatmul.mubr.f32.gmra.mrb[0].mxu0 %v1190
    %v1266 = vpop.f32.mrb[0].mxu0
    %v1267 = vadd.f32 %v1183, %v1266
    %v1268 = vpop.f32.mrb[0].mxu0
    %1269 = vdwg.mxu0
    %1270 = vrot.lane.b32.xlu0 %v209, 120
    %v1271 = vpop.permute.xlu0 %1270
    %1272 = vrot.lane.b32.xlu0 %v300, 120
    %v1273 = vpop.permute.xlu0 %1272
    %1274 = vrot.lane.b32.xlu0 %v305, 120
    %v1275 = vpop.permute.xlu0 %1274
    %v1276 = vsel %vm419, %v1271, 0
    %v1278 = vsel %vm419, %v1273, 0
    %v1280 = vsel %vm419, %v1275, 0
    %1282 = vmatprep.subr.mxu0 0.0
    %1283 = vmatpush1.xpose.msra.mxu0 %v1278
    %1284 = vmatprep.subr.mxu0 0.0
    %1285 = vmatpush1.xpose.msra.mxu0 %v1280
    %1286 = vmatprep.subr.mxu0 0.0
    %1287 = vmatpush1.xpose.msra.mxu0 0.0
    %1288 = vmatprep.subr.mxu0 0.0
    %1289 = vmatpush1.xpose.msra.mxu0 0.0
    %1290 = vmatprep.subr.mxu0 0.0
    %1291 = vmatpush1.xpose.msra.mxu0 0.0
    %1292 = vmatprep.subr.mxu0 0.0
    %1293 = vmatpush1.xpose.msra.mxu0 0.0
    %1294 = vmatprep.subr.mxu0 0.0
    %1295 = vmatpush1.xpose.msra.mxu0 0.0
    %1296 = vmatprep.subr.mxu0 0.0
    %1297 = vmatpush1.xpose.msra.mxu0 0.0
    %1298 = vmatprep.subr.mxu0 0.0
    %1299 = vmatpush1.xpose.msra.mxu0 0.0
    %1300 = vmatprep.subr.mxu0 0.0
    %1301 = vmatpush1.xpose.msra.mxu0 0.0
    %1302 = vmatprep.subr.mxu0 0.0
    %1303 = vmatpush1.xpose.msra.mxu0 0.0
    %1304 = vmatprep.subr.mxu0 0.0
    %1305 = vmatpush1.xpose.msra.mxu0 0.0
    %1306 = vmatprep.subr.mxu0 0.0
    %1307 = vmatpush1.xpose.msra.mxu0 0.0
    %1308 = vmatprep.subr.mxu0 0.0
    %1309 = vmatpush1.xpose.msra.mxu0 0.0
    %1310 = vmatprep.subr.mxu0 0.0
    %1311 = vmatpush1.xpose.msra.mxu0 0.0
    %1312 = vmatprep.subr.mxu0 0.0
    %1313 = vmatpush1.xpose.msra.mxu0 0.0
    %1314 = vmatprep.subr.mxu0 0.0
    %1315 = vmatpush1.xpose.msra.mxu0 0.0
    %1316 = vmatprep.subr.mxu0 0.0
    %1317 = vmatpush1.xpose.msra.mxu0 0.0
    %1318 = vmatprep.subr.mxu0 0.0
    %1319 = vmatpush1.xpose.msra.mxu0 0.0
    %1320 = vmatprep.subr.mxu0 0.0
    %1321 = vmatpush1.xpose.msra.mxu0 0.0
    %1322 = vmatprep.subr.mxu0 0.0
    %1323 = vmatpush1.xpose.msra.mxu0 0.0
    %1324 = vmatprep.subr.mxu0 0.0
    %1325 = vmatpush1.xpose.msra.mxu0 0.0
    %1326 = vmatprep.subr.mxu0 0.0
    %1327 = vmatpush1.xpose.msra.mxu0 0.0
    %1328 = vmatprep.subr.mxu0 0.0
    %1329 = vmatpush1.xpose.msra.mxu0 0.0
    %1330 = vmatprep.subr.mxu0 0.0
    %1331 = vmatpush1.xpose.msra.mxu0 0.0
    %1332 = vmatprep.subr.mxu0 0.0
    %1333 = vmatpush1.xpose.msra.mxu0 0.0
    %1334 = vmatprep.subr.mxu0 0.0
    %1335 = vmatpush1.xpose.msra.mxu0 0.0
    %1336 = vmatprep.subr.mxu0 0.0
    %1337 = vmatpush1.xpose.msra.mxu0 0.0
    %1338 = vmatprep.subr.mxu0 0.0
    %1339 = vmatpush1.xpose.msra.mxu0 0.0
    %1340 = vmatprep.subr.mxu0 0.0
    %1341 = vmatpush1.xpose.msra.mxu0 0.0
    %1342 = vmatprep.subr.mxu0 0.0
    %1343 = vmatpush1.xpose.msra.mxu0 0.0
    %1344 = vmatprep.subr.mxu0 0.0
    %1345 = vmatpush1.xpose.msra.mxu0 0.0
    %1346 = vmatprep.mubr.f32.mxu0 0.0
    %1347 = vmatmul.mubr.f32.gmra.mrb[0].mxu0 %v1276
    %v1348 = vpop.f32.mrb[0].mxu0
    %v1349 = vadd.f32 0.0, %v1348
    %v1350 = vpop.f32.mrb[0].mxu0
    %1351 = vdwg.mxu0
    %1352 = vrot.lane.b32.xlu0 %v214, 120
    %v1353 = vpop.permute.xlu0 %1352
    %1354 = vrot.lane.b32.xlu0 %v310, 120
    %v1355 = vpop.permute.xlu0 %1354
    %1356 = vrot.lane.b32.xlu0 %v315, 120
    %v1357 = vpop.permute.xlu0 %1356
    %v1358 = vsel %vm419, %v1353, 0
    %v1360 = vsel %vm419, %v1355, 0
    %v1362 = vsel %vm419, %v1357, 0
    %1364 = vmatprep.subr.mxu0 0.0
    %1365 = vmatpush1.xpose.msra.mxu0 %v1360
    %1366 = vmatprep.subr.mxu0 0.0
    %1367 = vmatpush1.xpose.msra.mxu0 %v1362
    %1368 = vmatprep.subr.mxu0 0.0
    %1369 = vmatpush1.xpose.msra.mxu0 0.0
    %1370 = vmatprep.subr.mxu0 0.0
    %1371 = vmatpush1.xpose.msra.mxu0 0.0
    %1372 = vmatprep.subr.mxu0 0.0
    %1373 = vmatpush1.xpose.msra.mxu0 0.0
    %1374 = vmatprep.subr.mxu0 0.0
    %1375 = vmatpush1.xpose.msra.mxu0 0.0
    %1376 = vmatprep.subr.mxu0 0.0
    %1377 = vmatpush1.xpose.msra.mxu0 0.0
    %1378 = vmatprep.subr.mxu0 0.0
    %1379 = vmatpush1.xpose.msra.mxu0 0.0
    %1380 = vmatprep.subr.mxu0 0.0
    %1381 = vmatpush1.xpose.msra.mxu0 0.0
    %1382 = vmatprep.subr.mxu0 0.0
    %1383 = vmatpush1.xpose.msra.mxu0 0.0
    %1384 = vmatprep.subr.mxu0 0.0
    %1385 = vmatpush1.xpose.msra.mxu0 0.0
    %1386 = vmatprep.subr.mxu0 0.0
    %1387 = vmatpush1.xpose.msra.mxu0 0.0
    %1388 = vmatprep.subr.mxu0 0.0
    %1389 = vmatpush1.xpose.msra.mxu0 0.0
    %1390 = vmatprep.subr.mxu0 0.0
    %1391 = vmatpush1.xpose.msra.mxu0 0.0
    %1392 = vmatprep.subr.mxu0 0.0
    %1393 = vmatpush1.xpose.msra.mxu0 0.0
    %1394 = vmatprep.subr.mxu0 0.0
    %1395 = vmatpush1.xpose.msra.mxu0 0.0
    %1396 = vmatprep.subr.mxu0 0.0
    %1397 = vmatpush1.xpose.msra.mxu0 0.0
    %1398 = vmatprep.subr.mxu0 0.0
    %1399 = vmatpush1.xpose.msra.mxu0 0.0
    %1400 = vmatprep.subr.mxu0 0.0
    %1401 = vmatpush1.xpose.msra.mxu0 0.0
    %1402 = vmatprep.subr.mxu0 0.0
    %1403 = vmatpush1.xpose.msra.mxu0 0.0
    %1404 = vmatprep.subr.mxu0 0.0
    %1405 = vmatpush1.xpose.msra.mxu0 0.0
    %1406 = vmatprep.subr.mxu0 0.0
    %1407 = vmatpush1.xpose.msra.mxu0 0.0
    %1408 = vmatprep.subr.mxu0 0.0
    %1409 = vmatpush1.xpose.msra.mxu0 0.0
    %1410 = vmatprep.subr.mxu0 0.0
    %1411 = vmatpush1.xpose.msra.mxu0 0.0
    %1412 = vmatprep.subr.mxu0 0.0
    %1413 = vmatpush1.xpose.msra.mxu0 0.0
    %1414 = vmatprep.subr.mxu0 0.0
    %1415 = vmatpush1.xpose.msra.mxu0 0.0
    %1416 = vmatprep.subr.mxu0 0.0
    %1417 = vmatpush1.xpose.msra.mxu0 0.0
    %1418 = vmatprep.subr.mxu0 0.0
    %1419 = vmatpush1.xpose.msra.mxu0 0.0
    %1420 = vmatprep.subr.mxu0 0.0
    %1421 = vmatpush1.xpose.msra.mxu0 0.0
    %1422 = vmatprep.subr.mxu0 0.0
    %1423 = vmatpush1.xpose.msra.mxu0 0.0
    %1424 = vmatprep.subr.mxu0 0.0
    %1425 = vmatpush1.xpose.msra.mxu0 0.0
    %1426 = vmatprep.subr.mxu0 0.0
    %1427 = vmatpush1.xpose.msra.mxu0 0.0
    %1428 = vmatprep.mubr.f32.mxu0 0.0
    %1429 = vmatmul.mubr.f32.gmra.mrb[0].mxu0 %v1358
    %v1430 = vpop.f32.mrb[0].mxu0
    %v1431 = vadd.f32 0.0, %v1430
    %v1432 = vpop.f32.mrb[0].mxu0
    %1433 = vdwg.mxu0
    %v1434 = vmul.f32 %v1349, 0.5
    %v1435 = vmul.f32 %v1431, 0.5
    %v1436 = vsel %vm580, %v1434, -inf
    %1437 = vmax.xlane.f32.xlu0 %v1436
    %v1438 = vpop.xlane.xlu0 %1437
    %v1439 = vsel %vm580, %v1435, -inf
    %1440 = vmax.xlane.f32.xlu0 %v1439
    %v1441 = vpop.xlane.xlu0 %1440
    %v1442 = vsub.f32 %v1434, %v1438
    %v1443 = vsub.f32 %v1435, %v1441
    %v1444 = vmul.f32 %v1442, 1.442695
    %v1445 = vpow.pop %v1444
    %v1446 = vmul.f32 %v1443, 1.442695
    %v1447 = vpow.pop %v1446
    %v1448 = vsel %vm580, %v1445, 0.0
    %1449 = vadd.xlane.f32.xlu0 %v1448
    %v1450 = vpop.xlane.xlu0 %1449
    %v1451 = vsel %vm580, %v1447, 0.0
    %1452 = vadd.xlane.f32.xlu0 %v1451
    %v1453 = vpop.xlane.xlu0 %1452
    %v1454 = vrcp.pop %v1450
    %v1455 = vrcp.pop %v1453
    %v1456 = vmul.f32 %v1445, %v1454
    %v1457 = vmul.f32 %v1447, %v1455
    %1458 = vrot.lane.b32.xlu0 %v401, 120
    %v1459 = vpop.permute.xlu0 %1458
    %1460 = vrot.lane.b32.xlu0 %v406, 120
    %v1461 = vpop.permute.xlu0 %1460
    %v1465 = vsel %vm580, %v1456, 0
    %1467 = vmatprep.subr.mxu0 0.0
    %1468 = vmatpush1.msra.mxu0 %v1459
    %1469 = vmatprep.subr.mxu0 0.0
    %1470 = vmatpush1.msra.mxu0 %v1461
    %1471 = vmatprep.subr.mxu0 0.0
    %1472 = vmatpush1.msra.mxu0 0.0
    %1473 = vmatprep.subr.mxu0 0.0
    %1474 = vmatpush1.msra.mxu0 0.0
    %1475 = vmatprep.subr.mxu0 0.0
    %1476 = vmatpush1.msra.mxu0 0.0
    %1477 = vmatprep.subr.mxu0 0.0
    %1478 = vmatpush1.msra.mxu0 0.0
    %1479 = vmatprep.subr.mxu0 0.0
    %1480 = vmatpush1.msra.mxu0 0.0
    %1481 = vmatprep.subr.mxu0 0.0
    %1482 = vmatpush1.msra.mxu0 0.0
    %1483 = vmatprep.subr.mxu0 0.0
    %1484 = vmatpush1.msra.mxu0 0.0
    %1485 = vmatprep.subr.mxu0 0.0
    %1486 = vmatpush1.msra.mxu0 0.0
    %1487 = vmatprep.subr.mxu0 0.0
    %1488 = vmatpush1.msra.mxu0 0.0
    %1489 = vmatprep.subr.mxu0 0.0
    %1490 = vmatpush1.msra.mxu0 0.0
    %1491 = vmatprep.subr.mxu0 0.0
    %1492 = vmatpush1.msra.mxu0 0.0
    %1493 = vmatprep.subr.mxu0 0.0
    %1494 = vmatpush1.msra.mxu0 0.0
    %1495 = vmatprep.subr.mxu0 0.0
    %1496 = vmatpush1.msra.mxu0 0.0
    %1497 = vmatprep.subr.mxu0 0.0
    %1498 = vmatpush1.msra.mxu0 0.0
    %1499 = vmatprep.subr.mxu0 0.0
    %1500 = vmatpush1.msra.mxu0 0.0
    %1501 = vmatprep.subr.mxu0 0.0
    %1502 = vmatpush1.msra.mxu0 0.0
    %1503 = vmatprep.subr.mxu0 0.0
    %1504 = vmatpush1.msra.mxu0 0.0
    %1505 = vmatprep.subr.mxu0 0.0
    %1506 = vmatpush1.msra.mxu0 0.0
    %1507 = vmatprep.subr.mxu0 0.0
    %1508 = vmatpush1.msra.mxu0 0.0
    %1509 = vmatprep.subr.mxu0 0.0
    %1510 = vmatpush1.msra.mxu0 0.0
    %1511 = vmatprep.subr.mxu0 0.0
    %1512 = vmatpush1.msra.mxu0 0.0
    %1513 = vmatprep.subr.mxu0 0.0
    %1514 = vmatpush1.msra.mxu0 0.0
    %1515 = vmatprep.subr.mxu0 0.0
    %1516 = vmatpush1.msra.mxu0 0.0
    %1517 = vmatprep.subr.mxu0 0.0
    %1518 = vmatpush1.msra.mxu0 0.0
    %1519 = vmatprep.subr.mxu0 0.0
    %1520 = vmatpush1.msra.mxu0 0.0
    %1521 = vmatprep.subr.mxu0 0.0
    %1522 = vmatpush1.msra.mxu0 0.0
    %1523 = vmatprep.subr.mxu0 0.0
    %1524 = vmatpush1.msra.mxu0 0.0
    %1525 = vmatprep.subr.mxu0 0.0
    %1526 = vmatpush1.msra.mxu0 0.0
    %1527 = vmatprep.subr.mxu0 0.0
    %1528 = vmatpush1.msra.mxu0 0.0
    %1529 = vmatprep.subr.mxu0 0.0
    %1530 = vmatpush1.msra.mxu0 0.0
    %1531 = vmatprep.mubr.f32.mxu0 0.0
    %1532 = vmatmul.mubr.f32.gmra.mrb[0].mxu0 %v1465
    %v1533 = vpop.f32.mrb[0].mxu0
    %v1534 = vadd.f32 0.0, %v1533
    %v1535 = vpop.f32.mrb[0].mxu0
    %1536 = vdwg.mxu0
    %1537 = vrot.lane.b32.xlu0 %v411, 120
    %v1538 = vpop.permute.xlu0 %1537
    %1539 = vrot.lane.b32.xlu0 %v416, 120
    %v1540 = vpop.permute.xlu0 %1539
    %v1544 = vsel %vm580, %v1457, 0
    %1546 = vmatprep.subr.mxu0 0.0
    %1547 = vmatpush1.msra.mxu0 %v1538
    %1548 = vmatprep.subr.mxu0 0.0
    %1549 = vmatpush1.msra.mxu0 %v1540
    %1550 = vmatprep.subr.mxu0 0.0
    %1551 = vmatpush1.msra.mxu0 0.0
    %1552 = vmatprep.subr.mxu0 0.0
    %1553 = vmatpush1.msra.mxu0 0.0
    %1554 = vmatprep.subr.mxu0 0.0
    %1555 = vmatpush1.msra.mxu0 0.0
    %1556 = vmatprep.subr.mxu0 0.0
    %1557 = vmatpush1.msra.mxu0 0.0
    %1558 = vmatprep.subr.mxu0 0.0
    %1559 = vmatpush1.msra.mxu0 0.0
    %1560 = vmatprep.subr.mxu0 0.0
    %1561 = vmatpush1.msra.mxu0 0.0
    %1562 = vmatprep.subr.mxu0 0.0
    %1563 = vmatpush1.msra.mxu0 0.0
    %1564 = vmatprep.subr.mxu0 0.0
    %1565 = vmatpush1.msra.mxu0 0.0
    %1566 = vmatprep.subr.mxu0 0.0
    %1567 = vmatpush1.msra.mxu0 0.0
    %1568 = vmatprep.subr.mxu0 0.0
    %1569 = vmatpush1.msra.mxu0 0.0
    %1570 = vmatprep.subr.mxu0 0.0
    %1571 = vmatpush1.msra.mxu0 0.0
    %1572 = vmatprep.subr.mxu0 0.0
    %1573 = vmatpush1.msra.mxu0 0.0
    %1574 = vmatprep.subr.mxu0 0.0
    %1575 = vmatpush1.msra.mxu0 0.0
    %1576 = vmatprep.subr.mxu0 0.0
    %1577 = vmatpush1.msra.mxu0 0.0
    %1578 = vmatprep.subr.mxu0 0.0
    %1579 = vmatpush1.msra.mxu0 0.0
    %1580 = vmatprep.subr.mxu0 0.0
    %1581 = vmatpush1.msra.mxu0 0.0
    %1582 = vmatprep.subr.mxu0 0.0
    %1583 = vmatpush1.msra.mxu0 0.0
    %1584 = vmatprep.subr.mxu0 0.0
    %1585 = vmatpush1.msra.mxu0 0.0
    %1586 = vmatprep.subr.mxu0 0.0
    %1587 = vmatpush1.msra.mxu0 0.0
    %1588 = vmatprep.subr.mxu0 0.0
    %1589 = vmatpush1.msra.mxu0 0.0
    %1590 = vmatprep.subr.mxu0 0.0
    %1591 = vmatpush1.msra.mxu0 0.0
    %1592 = vmatprep.subr.mxu0 0.0
    %1593 = vmatpush1.msra.mxu0 0.0
    %1594 = vmatprep.subr.mxu0 0.0
    %1595 = vmatpush1.msra.mxu0 0.0
    %1596 = vmatprep.subr.mxu0 0.0
    %1597 = vmatpush1.msra.mxu0 0.0
    %1598 = vmatprep.subr.mxu0 0.0
    %1599 = vmatpush1.msra.mxu0 0.0
    %1600 = vmatprep.subr.mxu0 0.0
    %1601 = vmatpush1.msra.mxu0 0.0
    %1602 = vmatprep.subr.mxu0 0.0
    %1603 = vmatpush1.msra.mxu0 0.0
    %1604 = vmatprep.subr.mxu0 0.0
    %1605 = vmatpush1.msra.mxu0 0.0
    %1606 = vmatprep.subr.mxu0 0.0
    %1607 = vmatpush1.msra.mxu0 0.0
    %1608 = vmatprep.subr.mxu0 0.0
    %1609 = vmatpush1.msra.mxu0 0.0
    %1610 = vmatprep.mubr.f32.mxu0 0.0
    %1611 = vmatmul.mubr.f32.gmra.mrb[0].mxu0 %v1544
    %v1612 = vpop.f32.mrb[0].mxu0
    %v1613 = vadd.f32 0.0, %v1612
    %v1614 = vpop.f32.mrb[0].mxu0
    %1615 = vdwg.mxu0
    %v1616 = vld [vmem:[#allocation11 + $0x8] sm:$0xf]
    %v1618 = vsel %vm419, %v1534, 0
    %v1621 = vsel %vm419, %v1613, 0
    %v1624 = vsel %vm1107, %v1616, 0
    %1626 = vmatprep.subr.mxu0 0.0
    %1627 = vmatpush1.msra.mxu0 %v1624
    %1628 = vmatprep.subr.mxu0 0.0
    %1629 = vmatpush1.msra.mxu0 0.0
    %1630 = vmatprep.subr.mxu0 0.0
    %1631 = vmatpush1.msra.mxu0 0.0
    %1632 = vmatprep.subr.mxu0 0.0
    %1633 = vmatpush1.msra.mxu0 0.0
    %1634 = vmatprep.subr.mxu0 0.0
    %1635 = vmatpush1.msra.mxu0 0.0
    %1636 = vmatprep.subr.mxu0 0.0
    %1637 = vmatpush1.msra.mxu0 0.0
    %1638 = vmatprep.subr.mxu0 0.0
    %1639 = vmatpush1.msra.mxu0 0.0
    %1640 = vmatprep.subr.mxu0 0.0
    %1641 = vmatpush1.msra.mxu0 0.0
    %1642 = vmatprep.subr.mxu0 0.0
    %1643 = vmatpush1.msra.mxu0 0.0
    %1644 = vmatprep.subr.mxu0 0.0
    %1645 = vmatpush1.msra.mxu0 0.0
    %1646 = vmatprep.subr.mxu0 0.0
    %1647 = vmatpush1.msra.mxu0 0.0
    %1648 = vmatprep.subr.mxu0 0.0
    %1649 = vmatpush1.msra.mxu0 0.0
    %1650 = vmatprep.subr.mxu0 0.0
    %1651 = vmatpush1.msra.mxu0 0.0
    %1652 = vmatprep.subr.mxu0 0.0
    %1653 = vmatpush1.msra.mxu0 0.0
    %1654 = vmatprep.subr.mxu0 0.0
    %1655 = vmatpush1.msra.mxu0 0.0
    %1656 = vmatprep.subr.mxu0 0.0
    %1657 = vmatpush1.msra.mxu0 0.0
    %1658 = vmatprep.subr.mxu0 0.0
    %1659 = vmatpush1.msra.mxu0 0.0
    %1660 = vmatprep.subr.mxu0 0.0
    %1661 = vmatpush1.msra.mxu0 0.0
    %1662 = vmatprep.subr.mxu0 0.0
    %1663 = vmatpush1.msra.mxu0 0.0
    %1664 = vmatprep.subr.mxu0 0.0
    %1665 = vmatpush1.msra.mxu0 0.0
    %1666 = vmatprep.subr.mxu0 0.0
    %1667 = vmatpush1.msra.mxu0 0.0
    %1668 = vmatprep.subr.mxu0 0.0
    %1669 = vmatpush1.msra.mxu0 0.0
    %1670 = vmatprep.subr.mxu0 0.0
    %1671 = vmatpush1.msra.mxu0 0.0
    %1672 = vmatprep.subr.mxu0 0.0
    %1673 = vmatpush1.msra.mxu0 0.0
    %1674 = vmatprep.subr.mxu0 0.0
    %1675 = vmatpush1.msra.mxu0 0.0
    %1676 = vmatprep.subr.mxu0 0.0
    %1677 = vmatpush1.msra.mxu0 0.0
    %1678 = vmatprep.subr.mxu0 0.0
    %1679 = vmatpush1.msra.mxu0 0.0
    %1680 = vmatprep.subr.mxu0 0.0
    %1681 = vmatpush1.msra.mxu0 0.0
    %1682 = vmatprep.subr.mxu0 0.0
    %1683 = vmatpush1.msra.mxu0 0.0
    %1684 = vmatprep.subr.mxu0 0.0
    %1685 = vmatpush1.msra.mxu0 0.0
    %1686 = vmatprep.subr.mxu0 0.0
    %1687 = vmatpush1.msra.mxu0 0.0
    %1688 = vmatprep.subr.mxu0 0.0
    %1689 = vmatpush1.msra.mxu0 0.0
    %1690 = vmatprep.mubr.f32.mxu0 0.0
    %1691 = vmatmul.mubr.f32.gmra.mrb[0].mxu0 %v1618
    %v1692 = vpop.f32.mrb[0].mxu0
    %v1693 = vadd.f32 0.0, %v1692
    %v1694 = vpop.f32.mrb[0].mxu0
    %1695 = vmatprep.mubr.f32.mxu0 0.0
    %1696 = vmatmul.mubr.f32.gmra.mrb[0].mxu0 %v1621
    %v1697 = vpop.f32.mrb[0].mxu0
    %v1698 = vadd.f32 0.0, %v1697
    %v1699 = vpop.f32.mrb[0].mxu0
    %1700 = vdwg.mxu0
    %v1701 = vadd.f32 %v1262, %v1693
    %v1702 = vadd.f32 %v1267, %v1698
    %1703 = vrot.lane.b32.xlu0 %v209, 116
    %v1704 = vpop.permute.xlu0 %1703
    %1705 = vrot.lane.b32.xlu0 %v300, 116
    %v1706 = vpop.permute.xlu0 %1705
    %1707 = vrot.lane.b32.xlu0 %v305, 116
    %v1708 = vpop.permute.xlu0 %1707
    %v1709 = vsel %vm419, %v1704, 0
    %v1711 = vsel %vm419, %v1706, 0
    %v1713 = vsel %vm419, %v1708, 0
    %1715 = vmatprep.subr.mxu0 0.0
    %1716 = vmatpush1.xpose.msra.mxu0 %v1711
    %1717 = vmatprep.subr.mxu0 0.0
    %1718 = vmatpush1.xpose.msra.mxu0 %v1713
    %1719 = vmatprep.subr.mxu0 0.0
    %1720 = vmatpush1.xpose.msra.mxu0 0.0
    %1721 = vmatprep.subr.mxu0 0.0
    %1722 = vmatpush1.xpose.msra.mxu0 0.0
    %1723 = vmatprep.subr.mxu0 0.0
    %1724 = vmatpush1.xpose.msra.mxu0 0.0
    %1725 = vmatprep.subr.mxu0 0.0
    %1726 = vmatpush1.xpose.msra.mxu0 0.0
    %1727 = vmatprep.subr.mxu0 0.0
    %1728 = vmatpush1.xpose.msra.mxu0 0.0
    %1729 = vmatprep.subr.mxu0 0.0
    %1730 = vmatpush1.xpose.msra.mxu0 0.0
    %1731 = vmatprep.subr.mxu0 0.0
    %1732 = vmatpush1.xpose.msra.mxu0 0.0
    %1733 = vmatprep.subr.mxu0 0.0
    %1734 = vmatpush1.xpose.msra.mxu0 0.0
    %1735 = vmatprep.subr.mxu0 0.0
    %1736 = vmatpush1.xpose.msra.mxu0 0.0
    %1737 = vmatprep.subr.mxu0 0.0
    %1738 = vmatpush1.xpose.msra.mxu0 0.0
    %1739 = vmatprep.subr.mxu0 0.0
    %1740 = vmatpush1.xpose.msra.mxu0 0.0
    %1741 = vmatprep.subr.mxu0 0.0
    %1742 = vmatpush1.xpose.msra.mxu0 0.0
    %1743 = vmatprep.subr.mxu0 0.0
    %1744 = vmatpush1.xpose.msra.mxu0 0.0
    %1745 = vmatprep.subr.mxu0 0.0
    %1746 = vmatpush1.xpose.msra.mxu0 0.0
    %1747 = vmatprep.subr.mxu0 0.0
    %1748 = vmatpush1.xpose.msra.mxu0 0.0
    %1749 = vmatprep.subr.mxu0 0.0
    %1750 = vmatpush1.xpose.msra.mxu0 0.0
    %1751 = vmatprep.subr.mxu0 0.0
    %1752 = vmatpush1.xpose.msra.mxu0 0.0
    %1753 = vmatprep.subr.mxu0 0.0
    %1754 = vmatpush1.xpose.msra.mxu0 0.0
    %1755 = vmatprep.subr.mxu0 0.0
    %1756 = vmatpush1.xpose.msra.mxu0 0.0
    %1757 = vmatprep.subr.mxu0 0.0
    %1758 = vmatpush1.xpose.msra.mxu0 0.0
    %1759 = vmatprep.subr.mxu0 0.0
    %1760 = vmatpush1.xpose.msra.mxu0 0.0
    %1761 = vmatprep.subr.mxu0 0.0
    %1762 = vmatpush1.xpose.msra.mxu0 0.0
    %1763 = vmatprep.subr.mxu0 0.0
    %1764 = vmatpush1.xpose.msra.mxu0 0.0
    %1765 = vmatprep.subr.mxu0 0.0
    %1766 = vmatpush1.xpose.msra.mxu0 0.0
    %1767 = vmatprep.subr.mxu0 0.0
    %1768 = vmatpush1.xpose.msra.mxu0 0.0
    %1769 = vmatprep.subr.mxu0 0.0
    %1770 = vmatpush1.xpose.msra.mxu0 0.0
    %1771 = vmatprep.subr.mxu0 0.0
    %1772 = vmatpush1.xpose.msra.mxu0 0.0
    %1773 = vmatprep.subr.mxu0 0.0
    %1774 = vmatpush1.xpose.msra.mxu0 0.0
    %1775 = vmatprep.subr.mxu0 0.0
    %1776 = vmatpush1.xpose.msra.mxu0 0.0
    %1777 = vmatprep.subr.mxu0 0.0
    %1778 = vmatpush1.xpose.msra.mxu0 0.0
    %1779 = vmatprep.mubr.f32.mxu0 0.0
    %1780 = vmatmul.mubr.f32.gmra.mrb[0].mxu0 %v1709
    %v1781 = vpop.f32.mrb[0].mxu0
    %v1782 = vadd.f32 0.0, %v1781
    %v1783 = vpop.f32.mrb[0].mxu0
    %1784 = vdwg.mxu0
    %1785 = vrot.lane.b32.xlu0 %v214, 116
    %v1786 = vpop.permute.xlu0 %1785
    %1787 = vrot.lane.b32.xlu0 %v310, 116
    %v1788 = vpop.permute.xlu0 %1787
    %1789 = vrot.lane.b32.xlu0 %v315, 116
    %v1790 = vpop.permute.xlu0 %1789
    %v1791 = vsel %vm419, %v1786, 0
    %v1793 = vsel %vm419, %v1788, 0
    %v1795 = vsel %vm419, %v1790, 0
    %1797 = vmatprep.subr.mxu0 0.0
    %1798 = vmatpush1.xpose.msra.mxu0 %v1793
    %1799 = vmatprep.subr.mxu0 0.0
    %1800 = vmatpush1.xpose.msra.mxu0 %v1795
    %1801 = vmatprep.subr.mxu0 0.0
    %1802 = vmatpush1.xpose.msra.mxu0 0.0
    %1803 = vmatprep.subr.mxu0 0.0
    %1804 = vmatpush1.xpose.msra.mxu0 0.0
    %1805 = vmatprep.subr.mxu0 0.0
    %1806 = vmatpush1.xpose.msra.mxu0 0.0
    %1807 = vmatprep.subr.mxu0 0.0
    %1808 = vmatpush1.xpose.msra.mxu0 0.0
    %1809 = vmatprep.subr.mxu0 0.0
    %1810 = vmatpush1.xpose.msra.mxu0 0.0
    %1811 = vmatprep.subr.mxu0 0.0
    %1812 = vmatpush1.xpose.msra.mxu0 0.0
    %1813 = vmatprep.subr.mxu0 0.0
    %1814 = vmatpush1.xpose.msra.mxu0 0.0
    %1815 = vmatprep.subr.mxu0 0.0
    %1816 = vmatpush1.xpose.msra.mxu0 0.0
    %1817 = vmatprep.subr.mxu0 0.0
    %1818 = vmatpush1.xpose.msra.mxu0 0.0
    %1819 = vmatprep.subr.mxu0 0.0
    %1820 = vmatpush1.xpose.msra.mxu0 0.0
    %1821 = vmatprep.subr.mxu0 0.0
    %1822 = vmatpush1.xpose.msra.mxu0 0.0
    %1823 = vmatprep.subr.mxu0 0.0
    %1824 = vmatpush1.xpose.msra.mxu0 0.0
    %1825 = vmatprep.subr.mxu0 0.0
    %1826 = vmatpush1.xpose.msra.mxu0 0.0
    %1827 = vmatprep.subr.mxu0 0.0
    %1828 = vmatpush1.xpose.msra.mxu0 0.0
    %1829 = vmatprep.subr.mxu0 0.0
    %1830 = vmatpush1.xpose.msra.mxu0 0.0
    %1831 = vmatprep.subr.mxu0 0.0
    %1832 = vmatpush1.xpose.msra.mxu0 0.0
    %1833 = vmatprep.subr.mxu0 0.0
    %1834 = vmatpush1.xpose.msra.mxu0 0.0
    %1835 = vmatprep.subr.mxu0 0.0
    %1836 = vmatpush1.xpose.msra.mxu0 0.0
    %1837 = vmatprep.subr.mxu0 0.0
    %1838 = vmatpush1.xpose.msra.mxu0 0.0
    %1839 = vmatprep.subr.mxu0 0.0
    %1840 = vmatpush1.xpose.msra.mxu0 0.0
    %1841 = vmatprep.subr.mxu0 0.0
    %1842 = vmatpush1.xpose.msra.mxu0 0.0
    %1843 = vmatprep.subr.mxu0 0.0
    %1844 = vmatpush1.xpose.msra.mxu0 0.0
    %1845 = vmatprep.subr.mxu0 0.0
    %1846 = vmatpush1.xpose.msra.mxu0 0.0
    %1847 = vmatprep.subr.mxu0 0.0
    %1848 = vmatpush1.xpose.msra.mxu0 0.0
    %1849 = vmatprep.subr.mxu0 0.0
    %1850 = vmatpush1.xpose.msra.mxu0 0.0
    %1851 = vmatprep.subr.mxu0 0.0
    %1852 = vmatpush1.xpose.msra.mxu0 0.0
    %1853 = vmatprep.subr.mxu0 0.0
    %1854 = vmatpush1.xpose.msra.mxu0 0.0
    %1855 = vmatprep.subr.mxu0 0.0
    %1856 = vmatpush1.xpose.msra.mxu0 0.0
    %1857 = vmatprep.subr.mxu0 0.0
    %1858 = vmatpush1.xpose.msra.mxu0 0.0
    %1859 = vmatprep.subr.mxu0 0.0
    %1860 = vmatpush1.xpose.msra.mxu0 0.0
    %1861 = vmatprep.mubr.f32.mxu0 0.0
    %1862 = vmatmul.mubr.f32.gmra.mrb[0].mxu0 %v1791
    %v1863 = vpop.f32.mrb[0].mxu0
    %v1864 = vadd.f32 0.0, %v1863
    %v1865 = vpop.f32.mrb[0].mxu0
    %1866 = vdwg.mxu0
    %v1867 = vmul.f32 %v1782, 0.5
    %v1868 = vmul.f32 %v1864, 0.5
    %v1869 = vsel %vm580, %v1867, -inf
    %1870 = vmax.xlane.f32.xlu0 %v1869
    %v1871 = vpop.xlane.xlu0 %1870
    %v1872 = vsel %vm580, %v1868, -inf
    %1873 = vmax.xlane.f32.xlu0 %v1872
    %v1874 = vpop.xlane.xlu0 %1873
    %v1875 = vsub.f32 %v1867, %v1871
    %v1876 = vsub.f32 %v1868, %v1874
    %v1877 = vmul.f32 %v1875, 1.442695
    %v1878 = vpow.pop %v1877
    %v1879 = vmul.f32 %v1876, 1.442695
    %v1880 = vpow.pop %v1879
    %v1881 = vsel %vm580, %v1878, 0.0
    %1882 = vadd.xlane.f32.xlu0 %v1881
    %v1883 = vpop.xlane.xlu0 %1882
    %v1884 = vsel %vm580, %v1880, 0.0
    %1885 = vadd.xlane.f32.xlu0 %v1884
    %v1886 = vpop.xlane.xlu0 %1885
    %v1887 = vrcp.pop %v1883
    %v1888 = vrcp.pop %v1886
    %v1889 = vmul.f32 %v1878, %v1887
    %v1890 = vmul.f32 %v1880, %v1888
    %1891 = vrot.lane.b32.xlu0 %v401, 116
    %v1892 = vpop.permute.xlu0 %1891
    %1893 = vrot.lane.b32.xlu0 %v406, 116
    %v1894 = vpop.permute.xlu0 %1893
    %v1898 = vsel %vm580, %v1889, 0
    %1900 = vmatprep.subr.mxu0 0.0
    %1901 = vmatpush1.msra.mxu0 %v1892
    %1902 = vmatprep.subr.mxu0 0.0
    %1903 = vmatpush1.msra.mxu0 %v1894
    %1904 = vmatprep.subr.mxu0 0.0
    %1905 = vmatpush1.msra.mxu0 0.0
    %1906 = vmatprep.subr.mxu0 0.0
    %1907 = vmatpush1.msra.mxu0 0.0
    %1908 = vmatprep.subr.mxu0 0.0
    %1909 = vmatpush1.msra.mxu0 0.0
    %1910 = vmatprep.subr.mxu0 0.0
    %1911 = vmatpush1.msra.mxu0 0.0
    %1912 = vmatprep.subr.mxu0 0.0
    %1913 = vmatpush1.msra.mxu0 0.0
    %1914 = vmatprep.subr.mxu0 0.0
    %1915 = vmatpush1.msra.mxu0 0.0
    %1916 = vmatprep.subr.mxu0 0.0
    %1917 = vmatpush1.msra.mxu0 0.0
    %1918 = vmatprep.subr.mxu0 0.0
    %1919 = vmatpush1.msra.mxu0 0.0
    %1920 = vmatprep.subr.mxu0 0.0
    %1921 = vmatpush1.msra.mxu0 0.0
    %1922 = vmatprep.subr.mxu0 0.0
    %1923 = vmatpush1.msra.mxu0 0.0
    %1924 = vmatprep.subr.mxu0 0.0
    %1925 = vmatpush1.msra.mxu0 0.0
    %1926 = vmatprep.subr.mxu0 0.0
    %1927 = vmatpush1.msra.mxu0 0.0
    %1928 = vmatprep.subr.mxu0 0.0
    %1929 = vmatpush1.msra.mxu0 0.0
    %1930 = vmatprep.subr.mxu0 0.0
    %1931 = vmatpush1.msra.mxu0 0.0
    %1932 = vmatprep.subr.mxu0 0.0
    %1933 = vmatpush1.msra.mxu0 0.0
    %1934 = vmatprep.subr.mxu0 0.0
    %1935 = vmatpush1.msra.mxu0 0.0
    %1936 = vmatprep.subr.mxu0 0.0
    %1937 = vmatpush1.msra.mxu0 0.0
    %1938 = vmatprep.subr.mxu0 0.0
    %1939 = vmatpush1.msra.mxu0 0.0
    %1940 = vmatprep.subr.mxu0 0.0
    %1941 = vmatpush1.msra.mxu0 0.0
    %1942 = vmatprep.subr.mxu0 0.0
    %1943 = vmatpush1.msra.mxu0 0.0
    %1944 = vmatprep.subr.mxu0 0.0
    %1945 = vmatpush1.msra.mxu0 0.0
    %1946 = vmatprep.subr.mxu0 0.0
    %1947 = vmatpush1.msra.mxu0 0.0
    %1948 = vmatprep.subr.mxu0 0.0
    %1949 = vmatpush1.msra.mxu0 0.0
    %1950 = vmatprep.subr.mxu0 0.0
    %1951 = vmatpush1.msra.mxu0 0.0
    %1952 = vmatprep.subr.mxu0 0.0
    %1953 = vmatpush1.msra.mxu0 0.0
    %1954 = vmatprep.subr.mxu0 0.0
    %1955 = vmatpush1.msra.mxu0 0.0
    %1956 = vmatprep.subr.mxu0 0.0
    %1957 = vmatpush1.msra.mxu0 0.0
    %1958 = vmatprep.subr.mxu0 0.0
    %1959 = vmatpush1.msra.mxu0 0.0
    %1960 = vmatprep.subr.mxu0 0.0
    %1961 = vmatpush1.msra.mxu0 0.0
    %1962 = vmatprep.subr.mxu0 0.0
    %1963 = vmatpush1.msra.mxu0 0.0
    %1964 = vmatprep.mubr.f32.mxu0 0.0
    %1965 = vmatmul.mubr.f32.gmra.mrb[0].mxu0 %v1898
    %v1966 = vpop.f32.mrb[0].mxu0
    %v1967 = vadd.f32 0.0, %v1966
    %v1968 = vpop.f32.mrb[0].mxu0
    %1969 = vdwg.mxu0
    %1970 = vrot.lane.b32.xlu0 %v411, 116
    %v1971 = vpop.permute.xlu0 %1970
    %1972 = vrot.lane.b32.xlu0 %v416, 116
    %v1973 = vpop.permute.xlu0 %1972
    %v1977 = vsel %vm580, %v1890, 0
    %1979 = vmatprep.subr.mxu0 0.0
    %1980 = vmatpush1.msra.mxu0 %v1971
    %1981 = vmatprep.subr.mxu0 0.0
    %1982 = vmatpush1.msra.mxu0 %v1973
    %1983 = vmatprep.subr.mxu0 0.0
    %1984 = vmatpush1.msra.mxu0 0.0
    %1985 = vmatprep.subr.mxu0 0.0
    %1986 = vmatpush1.msra.mxu0 0.0
    %1987 = vmatprep.subr.mxu0 0.0
    %1988 = vmatpush1.msra.mxu0 0.0
    %1989 = vmatprep.subr.mxu0 0.0
    %1990 = vmatpush1.msra.mxu0 0.0
    %1991 = vmatprep.subr.mxu0 0.0
    %1992 = vmatpush1.msra.mxu0 0.0
    %1993 = vmatprep.subr.mxu0 0.0
    %1994 = vmatpush1.msra.mxu0 0.0
    %1995 = vmatprep.subr.mxu0 0.0
    %1996 = vmatpush1.msra.mxu0 0.0
    %1997 = vmatprep.subr.mxu0 0.0
    %1998 = vmatpush1.msra.mxu0 0.0
    %1999 = vmatprep.subr.mxu0 0.0
    %2000 = vmatpush1.msra.mxu0 0.0
    %2001 = vmatprep.subr.mxu0 0.0
    %2002 = vmatpush1.msra.mxu0 0.0
    %2003 = vmatprep.subr.mxu0 0.0
    %2004 = vmatpush1.msra.mxu0 0.0
    %2005 = vmatprep.subr.mxu0 0.0
    %2006 = vmatpush1.msra.mxu0 0.0
    %2007 = vmatprep.subr.mxu0 0.0
    %2008 = vmatpush1.msra.mxu0 0.0
    %2009 = vmatprep.subr.mxu0 0.0
    %2010 = vmatpush1.msra.mxu0 0.0
    %2011 = vmatprep.subr.mxu0 0.0
    %2012 = vmatpush1.msra.mxu0 0.0
    %2013 = vmatprep.subr.mxu0 0.0
    %2014 = vmatpush1.msra.mxu0 0.0
    %2015 = vmatprep.subr.mxu0 0.0
    %2016 = vmatpush1.msra.mxu0 0.0
    %2017 = vmatprep.subr.mxu0 0.0
    %2018 = vmatpush1.msra.mxu0 0.0
    %2019 = vmatprep.subr.mxu0 0.0
    %2020 = vmatpush1.msra.mxu0 0.0
    %2021 = vmatprep.subr.mxu0 0.0
    %2022 = vmatpush1.msra.mxu0 0.0
    %2023 = vmatprep.subr.mxu0 0.0
    %2024 = vmatpush1.msra.mxu0 0.0
    %2025 = vmatprep.subr.mxu0 0.0
    %2026 = vmatpush1.msra.mxu0 0.0
    %2027 = vmatprep.subr.mxu0 0.0
    %2028 = vmatpush1.msra.mxu0 0.0
    %2029 = vmatprep.subr.mxu0 0.0
    %2030 = vmatpush1.msra.mxu0 0.0
    %2031 = vmatprep.subr.mxu0 0.0
    %2032 = vmatpush1.msra.mxu0 0.0
    %2033 = vmatprep.subr.mxu0 0.0
    %2034 = vmatpush1.msra.mxu0 0.0
    %2035 = vmatprep.subr.mxu0 0.0
    %2036 = vmatpush1.msra.mxu0 0.0
    %2037 = vmatprep.subr.mxu0 0.0
    %2038 = vmatpush1.msra.mxu0 0.0
    %2039 = vmatprep.subr.mxu0 0.0
    %2040 = vmatpush1.msra.mxu0 0.0
    %2041 = vmatprep.subr.mxu0 0.0
    %2042 = vmatpush1.msra.mxu0 0.0
    %2043 = vmatprep.mubr.f32.mxu0 0.0
    %2044 = vmatmul.mubr.f32.gmra.mrb[0].mxu0 %v1977
    %v2045 = vpop.f32.mrb[0].mxu0
    %v2046 = vadd.f32 0.0, %v2045
    %v2047 = vpop.f32.mrb[0].mxu0
    %2048 = vdwg.mxu0
    %v2049 = vld [vmem:[#allocation11 + $0xc] sm:$0xf]
    %v2051 = vsel %vm419, %v1967, 0
    %v2054 = vsel %vm419, %v2046, 0
    %v2057 = vsel %vm1107, %v2049, 0
    %2059 = vmatprep.subr.mxu0 0.0
    %2060 = vmatpush1.msra.mxu0 %v2057
    %2061 = vmatprep.subr.mxu0 0.0
    %2062 = vmatpush1.msra.mxu0 0.0
    %2063 = vmatprep.subr.mxu0 0.0
    %2064 = vmatpush1.msra.mxu0 0.0
    %2065 = vmatprep.subr.mxu0 0.0
    %2066 = vmatpush1.msra.mxu0 0.0
    %2067 = vmatprep.subr.mxu0 0.0
    %2068 = vmatpush1.msra.mxu0 0.0
    %2069 = vmatprep.subr.mxu0 0.0
    %2070 = vmatpush1.msra.mxu0 0.0
    %2071 = vmatprep.subr.mxu0 0.0
    %2072 = vmatpush1.msra.mxu0 0.0
    %2073 = vmatprep.subr.mxu0 0.0
    %2074 = vmatpush1.msra.mxu0 0.0
    %2075 = vmatprep.subr.mxu0 0.0
    %2076 = vmatpush1.msra.mxu0 0.0
    %2077 = vmatprep.subr.mxu0 0.0
    %2078 = vmatpush1.msra.mxu0 0.0
    %2079 = vmatprep.subr.mxu0 0.0
    %2080 = vmatpush1.msra.mxu0 0.0
    %2081 = vmatprep.subr.mxu0 0.0
    %2082 = vmatpush1.msra.mxu0 0.0
    %2083 = vmatprep.subr.mxu0 0.0
    %2084 = vmatpush1.msra.mxu0 0.0
    %2085 = vmatprep.subr.mxu0 0.0
    %2086 = vmatpush1.msra.mxu0 0.0
    %2087 = vmatprep.subr.mxu0 0.0
    %2088 = vmatpush1.msra.mxu0 0.0
    %2089 = vmatprep.subr.mxu0 0.0
    %2090 = vmatpush1.msra.mxu0 0.0
    %2091 = vmatprep.subr.mxu0 0.0
    %2092 = vmatpush1.msra.mxu0 0.0
    %2093 = vmatprep.subr.mxu0 0.0
    %2094 = vmatpush1.msra.mxu0 0.0
    %2095 = vmatprep.subr.mxu0 0.0
    %2096 = vmatpush1.msra.mxu0 0.0
    %2097 = vmatprep.subr.mxu0 0.0
    %2098 = vmatpush1.msra.mxu0 0.0
    %2099 = vmatprep.subr.mxu0 0.0
    %2100 = vmatpush1.msra.mxu0 0.0
    %2101 = vmatprep.subr.mxu0 0.0
    %2102 = vmatpush1.msra.mxu0 0.0
    %2103 = vmatprep.subr.mxu0 0.0
    %2104 = vmatpush1.msra.mxu0 0.0
    %2105 = vmatprep.subr.mxu0 0.0
    %2106 = vmatpush1.msra.mxu0 0.0
    %2107 = vmatprep.subr.mxu0 0.0
    %2108 = vmatpush1.msra.mxu0 0.0
    %2109 = vmatprep.subr.mxu0 0.0
    %2110 = vmatpush1.msra.mxu0 0.0
    %2111 = vmatprep.subr.mxu0 0.0
    %2112 = vmatpush1.msra.mxu0 0.0
    %2113 = vmatprep.subr.mxu0 0.0
    %2114 = vmatpush1.msra.mxu0 0.0
    %2115 = vmatprep.subr.mxu0 0.0
    %2116 = vmatpush1.msra.mxu0 0.0
    %2117 = vmatprep.subr.mxu0 0.0
    %2118 = vmatpush1.msra.mxu0 0.0
    %2119 = vmatprep.subr.mxu0 0.0
    %2120 = vmatpush1.msra.mxu0 0.0
    %2121 = vmatprep.subr.mxu0 0.0
    %2122 = vmatpush1.msra.mxu0 0.0
    %2123 = vmatprep.mubr.f32.mxu0 0.0
    %2124 = vmatmul.mubr.f32.gmra.mrb[0].mxu0 %v2051
    %v2125 = vpop.f32.mrb[0].mxu0
    %v2126 = vadd.f32 0.0, %v2125
    %v2127 = vpop.f32.mrb[0].mxu0
    %2128 = vmatprep.mubr.f32.mxu0 0.0
    %2129 = vmatmul.mubr.f32.gmra.mrb[0].mxu0 %v2054
    %v2130 = vpop.f32.mrb[0].mxu0
    %v2131 = vadd.f32 0.0, %v2130
    %v2132 = vpop.f32.mrb[0].mxu0
    %2133 = vdwg.mxu0
    %v2134 = vadd.f32 %v1701, %v2126
    %v2135 = vadd.f32 %v1702, %v2131
    %2136 = vrot.lane.b32.xlu0 %v209, 112
    %v2137 = vpop.permute.xlu0 %2136
    %2138 = vrot.lane.b32.xlu0 %v300, 112
    %v2139 = vpop.permute.xlu0 %2138
    %2140 = vrot.lane.b32.xlu0 %v305, 112
    %v2141 = vpop.permute.xlu0 %2140
    %v2142 = vsel %vm419, %v2137, 0
    %v2144 = vsel %vm419, %v2139, 0
    %v2146 = vsel %vm419, %v2141, 0
    %2148 = vmatprep.subr.mxu0 0.0
    %2149 = vmatpush1.xpose.msra.mxu0 %v2144
    %2150 = vmatprep.subr.mxu0 0.0
    %2151 = vmatpush1.xpose.msra.mxu0 %v2146
    %2152 = vmatprep.subr.mxu0 0.0
    %2153 = vmatpush1.xpose.msra.mxu0 0.0
    %2154 = vmatprep.subr.mxu0 0.0
    %2155 = vmatpush1.xpose.msra.mxu0 0.0
    %2156 = vmatprep.subr.mxu0 0.0
    %2157 = vmatpush1.xpose.msra.mxu0 0.0
    %2158 = vmatprep.subr.mxu0 0.0
    %2159 = vmatpush1.xpose.msra.mxu0 0.0
    %2160 = vmatprep.subr.mxu0 0.0
    %2161 = vmatpush1.xpose.msra.mxu0 0.0
    %2162 = vmatprep.subr.mxu0 0.0
    %2163 = vmatpush1.xpose.msra.mxu0 0.0
    %2164 = vmatprep.subr.mxu0 0.0
    %2165 = vmatpush1.xpose.msra.mxu0 0.0
    %2166 = vmatprep.subr.mxu0 0.0
    %2167 = vmatpush1.xpose.msra.mxu0 0.0
    %2168 = vmatprep.subr.mxu0 0.0
    %2169 = vmatpush1.xpose.msra.mxu0 0.0
    %2170 = vmatprep.subr.mxu0 0.0
    %2171 = vmatpush1.xpose.msra.mxu0 0.0
    %2172 = vmatprep.subr.mxu0 0.0
    %2173 = vmatpush1.xpose.msra.mxu0 0.0
    %2174 = vmatprep.subr.mxu0 0.0
    %2175 = vmatpush1.xpose.msra.mxu0 0.0
    %2176 = vmatprep.subr.mxu0 0.0
    %2177 = vmatpush1.xpose.msra.mxu0 0.0
    %2178 = vmatprep.subr.mxu0 0.0
    %2179 = vmatpush1.xpose.msra.mxu0 0.0
    %2180 = vmatprep.subr.mxu0 0.0
    %2181 = vmatpush1.xpose.msra.mxu0 0.0
    %2182 = vmatprep.subr.mxu0 0.0
    %2183 = vmatpush1.xpose.msra.mxu0 0.0
    %2184 = vmatprep.subr.mxu0 0.0
    %2185 = vmatpush1.xpose.msra.mxu0 0.0
    %2186 = vmatprep.subr.mxu0 0.0
    %2187 = vmatpush1.xpose.msra.mxu0 0.0
    %2188 = vmatprep.subr.mxu0 0.0
    %2189 = vmatpush1.xpose.msra.mxu0 0.0
    %2190 = vmatprep.subr.mxu0 0.0
    %2191 = vmatpush1.xpose.msra.mxu0 0.0
    %2192 = vmatprep.subr.mxu0 0.0
    %2193 = vmatpush1.xpose.msra.mxu0 0.0
    %2194 = vmatprep.subr.mxu0 0.0
    %2195 = vmatpush1.xpose.msra.mxu0 0.0
    %2196 = vmatprep.subr.mxu0 0.0
    %2197 = vmatpush1.xpose.msra.mxu0 0.0
    %2198 = vmatprep.subr.mxu0 0.0
    %2199 = vmatpush1.xpose.msra.mxu0 0.0
    %2200 = vmatprep.subr.mxu0 0.0
    %2201 = vmatpush1.xpose.msra.mxu0 0.0
    %2202 = vmatprep.subr.mxu0 0.0
    %2203 = vmatpush1.xpose.msra.mxu0 0.0
    %2204 = vmatprep.subr.mxu0 0.0
    %2205 = vmatpush1.xpose.msra.mxu0 0.0
    %2206 = vmatprep.subr.mxu0 0.0
    %2207 = vmatpush1.xpose.msra.mxu0 0.0
    %2208 = vmatprep.subr.mxu0 0.0
    %2209 = vmatpush1.xpose.msra.mxu0 0.0
    %2210 = vmatprep.subr.mxu0 0.0
    %2211 = vmatpush1.xpose.msra.mxu0 0.0
    %2212 = vmatprep.mubr.f32.mxu0 0.0
    %2213 = vmatmul.mubr.f32.gmra.mrb[0].mxu0 %v2142
    %v2214 = vpop.f32.mrb[0].mxu0
    %v2215 = vadd.f32 0.0, %v2214
    %v2216 = vpop.f32.mrb[0].mxu0
    %2217 = vdwg.mxu0
    %2218 = vrot.lane.b32.xlu0 %v214, 112
    %v2219 = vpop.permute.xlu0 %2218
    %2220 = vrot.lane.b32.xlu0 %v310, 112
    %v2221 = vpop.permute.xlu0 %2220
    %2222 = vrot.lane.b32.xlu0 %v315, 112
    %v2223 = vpop.permute.xlu0 %2222
    %v2224 = vsel %vm419, %v2219, 0
    %v2226 = vsel %vm419, %v2221, 0
    %v2228 = vsel %vm419, %v2223, 0
    %2230 = vmatprep.subr.mxu0 0.0
    %2231 = vmatpush1.xpose.msra.mxu0 %v2226
    %2232 = vmatprep.subr.mxu0 0.0
    %2233 = vmatpush1.xpose.msra.mxu0 %v2228
    %2234 = vmatprep.subr.mxu0 0.0
    %2235 = vmatpush1.xpose.msra.mxu0 0.0
    %2236 = vmatprep.subr.mxu0 0.0
    %2237 = vmatpush1.xpose.msra.mxu0 0.0
    %2238 = vmatprep.subr.mxu0 0.0
    %2239 = vmatpush1.xpose.msra.mxu0 0.0
    %2240 = vmatprep.subr.mxu0 0.0
    %2241 = vmatpush1.xpose.msra.mxu0 0.0
    %2242 = vmatprep.subr.mxu0 0.0
    %2243 = vmatpush1.xpose.msra.mxu0 0.0
    %2244 = vmatprep.subr.mxu0 0.0
    %2245 = vmatpush1.xpose.msra.mxu0 0.0
    %2246 = vmatprep.subr.mxu0 0.0
    %2247 = vmatpush1.xpose.msra.mxu0 0.0
    %2248 = vmatprep.subr.mxu0 0.0
    %2249 = vmatpush1.xpose.msra.mxu0 0.0
    %2250 = vmatprep.subr.mxu0 0.0
    %2251 = vmatpush1.xpose.msra.mxu0 0.0
    %2252 = vmatprep.subr.mxu0 0.0
    %2253 = vmatpush1.xpose.msra.mxu0 0.0
    %2254 = vmatprep.subr.mxu0 0.0
    %2255 = vmatpush1.xpose.msra.mxu0 0.0
    %2256 = vmatprep.subr.mxu0 0.0
    %2257 = vmatpush1.xpose.msra.mxu0 0.0
    %2258 = vmatprep.subr.mxu0 0.0
    %2259 = vmatpush1.xpose.msra.mxu0 0.0
    %2260 = vmatprep.subr.mxu0 0.0
    %2261 = vmatpush1.xpose.msra.mxu0 0.0
    %2262 = vmatprep.subr.mxu0 0.0
    %2263 = vmatpush1.xpose.msra.mxu0 0.0
    %2264 = vmatprep.subr.mxu0 0.0
    %2265 = vmatpush1.xpose.msra.mxu0 0.0
    %2266 = vmatprep.subr.mxu0 0.0
    %2267 = vmatpush1.xpose.msra.mxu0 0.0
    %2268 = vmatprep.subr.mxu0 0.0
    %2269 = vmatpush1.xpose.msra.mxu0 0.0
    %2270 = vmatprep.subr.mxu0 0.0
    %2271 = vmatpush1.xpose.msra.mxu0 0.0
    %2272 = vmatprep.subr.mxu0 0.0
    %2273 = vmatpush1.xpose.msra.mxu0 0.0
    %2274 = vmatprep.subr.mxu0 0.0
    %2275 = vmatpush1.xpose.msra.mxu0 0.0
    %2276 = vmatprep.subr.mxu0 0.0
    %2277 = vmatpush1.xpose.msra.mxu0 0.0
    %2278 = vmatprep.subr.mxu0 0.0
    %2279 = vmatpush1.xpose.msra.mxu0 0.0
    %2280 = vmatprep.subr.mxu0 0.0
    %2281 = vmatpush1.xpose.msra.mxu0 0.0
    %2282 = vmatprep.subr.mxu0 0.0
    %2283 = vmatpush1.xpose.msra.mxu0 0.0
    %2284 = vmatprep.subr.mxu0 0.0
    %2285 = vmatpush1.xpose.msra.mxu0 0.0
    %2286 = vmatprep.subr.mxu0 0.0
    %2287 = vmatpush1.xpose.msra.mxu0 0.0
    %2288 = vmatprep.subr.mxu0 0.0
    %2289 = vmatpush1.xpose.msra.mxu0 0.0
    %2290 = vmatprep.subr.mxu0 0.0
    %2291 = vmatpush1.xpose.msra.mxu0 0.0
    %2292 = vmatprep.subr.mxu0 0.0
    %2293 = vmatpush1.xpose.msra.mxu0 0.0
    %2294 = vmatprep.mubr.f32.mxu0 0.0
    %2295 = vmatmul.mubr.f32.gmra.mrb[0].mxu0 %v2224
    %v2296 = vpop.f32.mrb[0].mxu0
    %v2297 = vadd.f32 0.0, %v2296
    %v2298 = vpop.f32.mrb[0].mxu0
    %2299 = vdwg.mxu0
    %v2300 = vmul.f32 %v2215, 0.5
    %v2301 = vmul.f32 %v2297, 0.5
    %v2302 = vsel %vm580, %v2300, -inf
    %2303 = vmax.xlane.f32.xlu0 %v2302
    %v2304 = vpop.xlane.xlu0 %2303
    %v2305 = vsel %vm580, %v2301, -inf
    %2306 = vmax.xlane.f32.xlu0 %v2305
    %v2307 = vpop.xlane.xlu0 %2306
    %v2308 = vsub.f32 %v2300, %v2304
    %v2309 = vsub.f32 %v2301, %v2307
    %v2310 = vmul.f32 %v2308, 1.442695
    %v2311 = vpow.pop %v2310
    %v2312 = vmul.f32 %v2309, 1.442695
    %v2313 = vpow.pop %v2312
    %v2314 = vsel %vm580, %v2311, 0.0
    %2315 = vadd.xlane.f32.xlu0 %v2314
    %v2316 = vpop.xlane.xlu0 %2315
    %v2317 = vsel %vm580, %v2313, 0.0
    %2318 = vadd.xlane.f32.xlu0 %v2317
    %v2319 = vpop.xlane.xlu0 %2318
    %v2320 = vrcp.pop %v2316
    %v2321 = vrcp.pop %v2319
    %v2322 = vmul.f32 %v2311, %v2320
    %v2323 = vmul.f32 %v2313, %v2321
    %2324 = vrot.lane.b32.xlu0 %v401, 112
    %v2325 = vpop.permute.xlu0 %2324
    %2326 = vrot.lane.b32.xlu0 %v406, 112
    %v2327 = vpop.permute.xlu0 %2326
    %v2331 = vsel %vm580, %v2322, 0
    %2333 = vmatprep.subr.mxu0 0.0
    %2334 = vmatpush1.msra.mxu0 %v2325
    %2335 = vmatprep.subr.mxu0 0.0
    %2336 = vmatpush1.msra.mxu0 %v2327
    %2337 = vmatprep.subr.mxu0 0.0
    %2338 = vmatpush1.msra.mxu0 0.0
    %2339 = vmatprep.subr.mxu0 0.0
    %2340 = vmatpush1.msra.mxu0 0.0
    %2341 = vmatprep.subr.mxu0 0.0
    %2342 = vmatpush1.msra.mxu0 0.0
    %2343 = vmatprep.subr.mxu0 0.0
    %2344 = vmatpush1.msra.mxu0 0.0
    %2345 = vmatprep.subr.mxu0 0.0
    %2346 = vmatpush1.msra.mxu0 0.0
    %2347 = vmatprep.subr.mxu0 0.0
    %2348 = vmatpush1.msra.mxu0 0.0
    %2349 = vmatprep.subr.mxu0 0.0
    %2350 = vmatpush1.msra.mxu0 0.0
    %2351 = vmatprep.subr.mxu0 0.0
    %2352 = vmatpush1.msra.mxu0 0.0
    %2353 = vmatprep.subr.mxu0 0.0
    %2354 = vmatpush1.msra.mxu0 0.0
    %2355 = vmatprep.subr.mxu0 0.0
    %2356 = vmatpush1.msra.mxu0 0.0
    %2357 = vmatprep.subr.mxu0 0.0
    %2358 = vmatpush1.msra.mxu0 0.0
    %2359 = vmatprep.subr.mxu0 0.0
    %2360 = vmatpush1.msra.mxu0 0.0
    %2361 = vmatprep.subr.mxu0 0.0
    %2362 = vmatpush1.msra.mxu0 0.0
    %2363 = vmatprep.subr.mxu0 0.0
    %2364 = vmatpush1.msra.mxu0 0.0
    %2365 = vmatprep.subr.mxu0 0.0
    %2366 = vmatpush1.msra.mxu0 0.0
    %2367 = vmatprep.subr.mxu0 0.0
    %2368 = vmatpush1.msra.mxu0 0.0
    %2369 = vmatprep.subr.mxu0 0.0
    %2370 = vmatpush1.msra.mxu0 0.0
    %2371 = vmatprep.subr.mxu0 0.0
    %2372 = vmatpush1.msra.mxu0 0.0
    %2373 = vmatprep.subr.mxu0 0.0
    %2374 = vmatpush1.msra.mxu0 0.0
    %2375 = vmatprep.subr.mxu0 0.0
    %2376 = vmatpush1.msra.mxu0 0.0
    %2377 = vmatprep.subr.mxu0 0.0
    %2378 = vmatpush1.msra.mxu0 0.0
    %2379 = vmatprep.subr.mxu0 0.0
    %2380 = vmatpush1.msra.mxu0 0.0
    %2381 = vmatprep.subr.mxu0 0.0
    %2382 = vmatpush1.msra.mxu0 0.0
    %2383 = vmatprep.subr.mxu0 0.0
    %2384 = vmatpush1.msra.mxu0 0.0
    %2385 = vmatprep.subr.mxu0 0.0
    %2386 = vmatpush1.msra.mxu0 0.0
    %2387 = vmatprep.subr.mxu0 0.0
    %2388 = vmatpush1.msra.mxu0 0.0
    %2389 = vmatprep.subr.mxu0 0.0
    %2390 = vmatpush1.msra.mxu0 0.0
    %2391 = vmatprep.subr.mxu0 0.0
    %2392 = vmatpush1.msra.mxu0 0.0
    %2393 = vmatprep.subr.mxu0 0.0
    %2394 = vmatpush1.msra.mxu0 0.0
    %2395 = vmatprep.subr.mxu0 0.0
    %2396 = vmatpush1.msra.mxu0 0.0
    %2397 = vmatprep.mubr.f32.mxu0 0.0
    %2398 = vmatmul.mubr.f32.gmra.mrb[0].mxu0 %v2331
    %v2399 = vpop.f32.mrb[0].mxu0
    %v2400 = vadd.f32 0.0, %v2399
    %v2401 = vpop.f32.mrb[0].mxu0
    %2402 = vdwg.mxu0
    %2403 = vrot.lane.b32.xlu0 %v411, 112
    %v2404 = vpop.permute.xlu0 %2403
    %2405 = vrot.lane.b32.xlu0 %v416, 112
    %v2406 = vpop.permute.xlu0 %2405
    %v2410 = vsel %vm580, %v2323, 0
    %2412 = vmatprep.subr.mxu0 0.0
    %2413 = vmatpush1.msra.mxu0 %v2404
    %2414 = vmatprep.subr.mxu0 0.0
    %2415 = vmatpush1.msra.mxu0 %v2406
    %2416 = vmatprep.subr.mxu0 0.0
    %2417 = vmatpush1.msra.mxu0 0.0
    %2418 = vmatprep.subr.mxu0 0.0
    %2419 = vmatpush1.msra.mxu0 0.0
    %2420 = vmatprep.subr.mxu0 0.0
    %2421 = vmatpush1.msra.mxu0 0.0
    %2422 = vmatprep.subr.mxu0 0.0
    %2423 = vmatpush1.msra.mxu0 0.0
    %2424 = vmatprep.subr.mxu0 0.0
    %2425 = vmatpush1.msra.mxu0 0.0
    %2426 = vmatprep.subr.mxu0 0.0
    %2427 = vmatpush1.msra.mxu0 0.0
    %2428 = vmatprep.subr.mxu0 0.0
    %2429 = vmatpush1.msra.mxu0 0.0
    %2430 = vmatprep.subr.mxu0 0.0
    %2431 = vmatpush1.msra.mxu0 0.0
    %2432 = vmatprep.subr.mxu0 0.0
    %2433 = vmatpush1.msra.mxu0 0.0
    %2434 = vmatprep.subr.mxu0 0.0
    %2435 = vmatpush1.msra.mxu0 0.0
    %2436 = vmatprep.subr.mxu0 0.0
    %2437 = vmatpush1.msra.mxu0 0.0
    %2438 = vmatprep.subr.mxu0 0.0
    %2439 = vmatpush1.msra.mxu0 0.0
    %2440 = vmatprep.subr.mxu0 0.0
    %2441 = vmatpush1.msra.mxu0 0.0
    %2442 = vmatprep.subr.mxu0 0.0
    %2443 = vmatpush1.msra.mxu0 0.0
    %2444 = vmatprep.subr.mxu0 0.0
    %2445 = vmatpush1.msra.mxu0 0.0
    %2446 = vmatprep.subr.mxu0 0.0
    %2447 = vmatpush1.msra.mxu0 0.0
    %2448 = vmatprep.subr.mxu0 0.0
    %2449 = vmatpush1.msra.mxu0 0.0
    %2450 = vmatprep.subr.mxu0 0.0
    %2451 = vmatpush1.msra.mxu0 0.0
    %2452 = vmatprep.subr.mxu0 0.0
    %2453 = vmatpush1.msra.mxu0 0.0
    %2454 = vmatprep.subr.mxu0 0.0
    %2455 = vmatpush1.msra.mxu0 0.0
    %2456 = vmatprep.subr.mxu0 0.0
    %2457 = vmatpush1.msra.mxu0 0.0
    %2458 = vmatprep.subr.mxu0 0.0
    %2459 = vmatpush1.msra.mxu0 0.0
    %2460 = vmatprep.subr.mxu0 0.0
    %2461 = vmatpush1.msra.mxu0 0.0
    %2462 = vmatprep.subr.mxu0 0.0
    %2463 = vmatpush1.msra.mxu0 0.0
    %2464 = vmatprep.subr.mxu0 0.0
    %2465 = vmatpush1.msra.mxu0 0.0
    %2466 = vmatprep.subr.mxu0 0.0
    %2467 = vmatpush1.msra.mxu0 0.0
    %2468 = vmatprep.subr.mxu0 0.0
    %2469 = vmatpush1.msra.mxu0 0.0
    %2470 = vmatprep.subr.mxu0 0.0
    %2471 = vmatpush1.msra.mxu0 0.0
    %2472 = vmatprep.subr.mxu0 0.0
    %2473 = vmatpush1.msra.mxu0 0.0
    %2474 = vmatprep.subr.mxu0 0.0
    %2475 = vmatpush1.msra.mxu0 0.0
    %2476 = vmatprep.mubr.f32.mxu0 0.0
    %2477 = vmatmul.mubr.f32.gmra.mrb[0].mxu0 %v2410
    %v2478 = vpop.f32.mrb[0].mxu0
    %v2479 = vadd.f32 0.0, %v2478
    %v2480 = vpop.f32.mrb[0].mxu0
    %2481 = vdwg.mxu0
    %v2482 = vld [vmem:[#allocation11 + $0x10] sm:$0xf]
    %v2484 = vsel %vm419, %v2400, 0
    %v2487 = vsel %vm419, %v2479, 0
    %v2490 = vsel %vm1107, %v2482, 0
    %2492 = vmatprep.subr.mxu0 0.0
    %2493 = vmatpush1.msra.mxu0 %v2490
    %2494 = vmatprep.subr.mxu0 0.0
    %2495 = vmatpush1.msra.mxu0 0.0
    %2496 = vmatprep.subr.mxu0 0.0
    %2497 = vmatpush1.msra.mxu0 0.0
    %2498 = vmatprep.subr.mxu0 0.0
    %2499 = vmatpush1.msra.mxu0 0.0
    %2500 = vmatprep.subr.mxu0 0.0
    %2501 = vmatpush1.msra.mxu0 0.0
    %2502 = vmatprep.subr.mxu0 0.0
    %2503 = vmatpush1.msra.mxu0 0.0
    %2504 = vmatprep.subr.mxu0 0.0
    %2505 = vmatpush1.msra.mxu0 0.0
    %2506 = vmatprep.subr.mxu0 0.0
    %2507 = vmatpush1.msra.mxu0 0.0
    %2508 = vmatprep.subr.mxu0 0.0
    %2509 = vmatpush1.msra.mxu0 0.0
    %2510 = vmatprep.subr.mxu0 0.0
    %2511 = vmatpush1.msra.mxu0 0.0
    %2512 = vmatprep.subr.mxu0 0.0
    %2513 = vmatpush1.msra.mxu0 0.0
    %2514 = vmatprep.subr.mxu0 0.0
    %2515 = vmatpush1.msra.mxu0 0.0
    %2516 = vmatprep.subr.mxu0 0.0
    %2517 = vmatpush1.msra.mxu0 0.0
    %2518 = vmatprep.subr.mxu0 0.0
    %2519 = vmatpush1.msra.mxu0 0.0
    %2520 = vmatprep.subr.mxu0 0.0
    %2521 = vmatpush1.msra.mxu0 0.0
    %2522 = vmatprep.subr.mxu0 0.0
    %2523 = vmatpush1.msra.mxu0 0.0
    %2524 = vmatprep.subr.mxu0 0.0
    %2525 = vmatpush1.msra.mxu0 0.0
    %2526 = vmatprep.subr.mxu0 0.0
    %2527 = vmatpush1.msra.mxu0 0.0
    %2528 = vmatprep.subr.mxu0 0.0
    %2529 = vmatpush1.msra.mxu0 0.0
    %2530 = vmatprep.subr.mxu0 0.0
    %2531 = vmatpush1.msra.mxu0 0.0
    %2532 = vmatprep.subr.mxu0 0.0
    %2533 = vmatpush1.msra.mxu0 0.0
    %2534 = vmatprep.subr.mxu0 0.0
    %2535 = vmatpush1.msra.mxu0 0.0
    %2536 = vmatprep.subr.mxu0 0.0
    %2537 = vmatpush1.msra.mxu0 0.0
    %2538 = vmatprep.subr.mxu0 0.0
    %2539 = vmatpush1.msra.mxu0 0.0
    %2540 = vmatprep.subr.mxu0 0.0
    %2541 = vmatpush1.msra.mxu0 0.0
    %2542 = vmatprep.subr.mxu0 0.0
    %2543 = vmatpush1.msra.mxu0 0.0
    %2544 = vmatprep.subr.mxu0 0.0
    %2545 = vmatpush1.msra.mxu0 0.0
    %2546 = vmatprep.subr.mxu0 0.0
    %2547 = vmatpush1.msra.mxu0 0.0
    %2548 = vmatprep.subr.mxu0 0.0
    %2549 = vmatpush1.msra.mxu0 0.0
    %2550 = vmatprep.subr.mxu0 0.0
    %2551 = vmatpush1.msra.mxu0 0.0
    %2552 = vmatprep.subr.mxu0 0.0
    %2553 = vmatpush1.msra.mxu0 0.0
    %2554 = vmatprep.subr.mxu0 0.0
    %2555 = vmatpush1.msra.mxu0 0.0
    %2556 = vmatprep.mubr.f32.mxu0 0.0
    %2557 = vmatmul.mubr.f32.gmra.mrb[0].mxu0 %v2484
    %v2558 = vpop.f32.mrb[0].mxu0
    %v2559 = vadd.f32 0.0, %v2558
    %v2560 = vpop.f32.mrb[0].mxu0
    %2561 = vmatprep.mubr.f32.mxu0 0.0
    %2562 = vmatmul.mubr.f32.gmra.mrb[0].mxu0 %v2487
    %v2563 = vpop.f32.mrb[0].mxu0
    %v2564 = vadd.f32 0.0, %v2563
    %v2565 = vpop.f32.mrb[0].mxu0
    %2566 = vdwg.mxu0
    %v2567 = vadd.f32 %v2134, %v2559
    %v2568 = vadd.f32 %v2135, %v2564
    %2569 = vrot.lane.b32.xlu0 %v209, 108
    %v2570 = vpop.permute.xlu0 %2569
    %2571 = vrot.lane.b32.xlu0 %v300, 108
    %v2572 = vpop.permute.xlu0 %2571
    %2573 = vrot.lane.b32.xlu0 %v305, 108
    %v2574 = vpop.permute.xlu0 %2573
    %v2575 = vsel %vm419, %v2570, 0
    %v2577 = vsel %vm419, %v2572, 0
    %v2579 = vsel %vm419, %v2574, 0
    %2581 = vmatprep.subr.mxu0 0.0
    %2582 = vmatpush1.xpose.msra.mxu0 %v2577
    %2583 = vmatprep.subr.mxu0 0.0
    %2584 = vmatpush1.xpose.msra.mxu0 %v2579
    %2585 = vmatprep.subr.mxu0 0.0
    %2586 = vmatpush1.xpose.msra.mxu0 0.0
    %2587 = vmatprep.subr.mxu0 0.0
    %2588 = vmatpush1.xpose.msra.mxu0 0.0
    %2589 = vmatprep.subr.mxu0 0.0
    %2590 = vmatpush1.xpose.msra.mxu0 0.0
    %2591 = vmatprep.subr.mxu0 0.0
    %2592 = vmatpush1.xpose.msra.mxu0 0.0
    %2593 = vmatprep.subr.mxu0 0.0
    %2594 = vmatpush1.xpose.msra.mxu0 0.0
    %2595 = vmatprep.subr.mxu0 0.0
    %2596 = vmatpush1.xpose.msra.mxu0 0.0
    %2597 = vmatprep.subr.mxu0 0.0
    %2598 = vmatpush1.xpose.msra.mxu0 0.0
    %2599 = vmatprep.subr.mxu0 0.0
    %2600 = vmatpush1.xpose.msra.mxu0 0.0
    %2601 = vmatprep.subr.mxu0 0.0
    %2602 = vmatpush1.xpose.msra.mxu0 0.0
    %2603 = vmatprep.subr.mxu0 0.0
    %2604 = vmatpush1.xpose.msra.mxu0 0.0
    %2605 = vmatprep.subr.mxu0 0.0
    %2606 = vmatpush1.xpose.msra.mxu0 0.0
    %2607 = vmatprep.subr.mxu0 0.0
    %2608 = vmatpush1.xpose.msra.mxu0 0.0
    %2609 = vmatprep.subr.mxu0 0.0
    %2610 = vmatpush1.xpose.msra.mxu0 0.0
    %2611 = vmatprep.subr.mxu0 0.0
    %2612 = vmatpush1.xpose.msra.mxu0 0.0
    %2613 = vmatprep.subr.mxu0 0.0
    %2614 = vmatpush1.xpose.msra.mxu0 0.0
    %2615 = vmatprep.subr.mxu0 0.0
    %2616 = vmatpush1.xpose.msra.mxu0 0.0
    %2617 = vmatprep.subr.mxu0 0.0
    %2618 = vmatpush1.xpose.msra.mxu0 0.0
    %2619 = vmatprep.subr.mxu0 0.0
    %2620 = vmatpush1.xpose.msra.mxu0 0.0
    %2621 = vmatprep.subr.mxu0 0.0
    %2622 = vmatpush1.xpose.msra.mxu0 0.0
    %2623 = vmatprep.subr.mxu0 0.0
    %2624 = vmatpush1.xpose.msra.mxu0 0.0
    %2625 = vmatprep.subr.mxu0 0.0
    %2626 = vmatpush1.xpose.msra.mxu0 0.0
    %2627 = vmatprep.subr.mxu0 0.0
    %2628 = vmatpush1.xpose.msra.mxu0 0.0
    %2629 = vmatprep.subr.mxu0 0.0
    %2630 = vmatpush1.xpose.msra.mxu0 0.0
    %2631 = vmatprep.subr.mxu0 0.0
    %2632 = vmatpush1.xpose.msra.mxu0 0.0
    %2633 = vmatprep.subr.mxu0 0.0
    %2634 = vmatpush1.xpose.msra.mxu0 0.0
    %2635 = vmatprep.subr.mxu0 0.0
    %2636 = vmatpush1.xpose.msra.mxu0 0.0
    %2637 = vmatprep.subr.mxu0 0.0
    %2638 = vmatpush1.xpose.msra.mxu0 0.0
    %2639 = vmatprep.subr.mxu0 0.0
    %2640 = vmatpush1.xpose.msra.mxu0 0.0
    %2641 = vmatprep.subr.mxu0 0.0
    %2642 = vmatpush1.xpose.msra.mxu0 0.0
    %2643 = vmatprep.subr.mxu0 0.0
    %2644 = vmatpush1.xpose.msra.mxu0 0.0
    %2645 = vmatprep.mubr.f32.mxu0 0.0
    %2646 = vmatmul.mubr.f32.gmra.mrb[0].mxu0 %v2575
    %v2647 = vpop.f32.mrb[0].mxu0
    %v2648 = vadd.f32 0.0, %v2647
    %v2649 = vpop.f32.mrb[0].mxu0
    %2650 = vdwg.mxu0
    %2651 = vrot.lane.b32.xlu0 %v214, 108
    %v2652 = vpop.permute.xlu0 %2651
    %2653 = vrot.lane.b32.xlu0 %v310, 108
    %v2654 = vpop.permute.xlu0 %2653
    %2655 = vrot.lane.b32.xlu0 %v315, 108
    %v2656 = vpop.permute.xlu0 %2655
    %v2657 = vsel %vm419, %v2652, 0
    %v2659 = vsel %vm419, %v2654, 0
    %v2661 = vsel %vm419, %v2656, 0
    %2663 = vmatprep.subr.mxu0 0.0
    %2664 = vmatpush1.xpose.msra.mxu0 %v2659
    %2665 = vmatprep.subr.mxu0 0.0
    %2666 = vmatpush1.xpose.msra.mxu0 %v2661
    %2667 = vmatprep.subr.mxu0 0.0
    %2668 = vmatpush1.xpose.msra.mxu0 0.0
    %2669 = vmatprep.subr.mxu0 0.0
    %2670 = vmatpush1.xpose.msra.mxu0 0.0
    %2671 = vmatprep.subr.mxu0 0.0
    %2672 = vmatpush1.xpose.msra.mxu0 0.0
    %2673 = vmatprep.subr.mxu0 0.0
    %2674 = vmatpush1.xpose.msra.mxu0 0.0
    %2675 = vmatprep.subr.mxu0 0.0
    %2676 = vmatpush1.xpose.msra.mxu0 0.0
    %2677 = vmatprep.subr.mxu0 0.0
    %2678 = vmatpush1.xpose.msra.mxu0 0.0
    %2679 = vmatprep.subr.mxu0 0.0
    %2680 = vmatpush1.xpose.msra.mxu0 0.0
    %2681 = vmatprep.subr.mxu0 0.0
    %2682 = vmatpush1.xpose.msra.mxu0 0.0
    %2683 = vmatprep.subr.mxu0 0.0
    %2684 = vmatpush1.xpose.msra.mxu0 0.0
    %2685 = vmatprep.subr.mxu0 0.0
    %2686 = vmatpush1.xpose.msra.mxu0 0.0
    %2687 = vmatprep.subr.mxu0 0.0
    %2688 = vmatpush1.xpose.msra.mxu0 0.0
    %2689 = vmatprep.subr.mxu0 0.0
    %2690 = vmatpush1.xpose.msra.mxu0 0.0
    %2691 = vmatprep.subr.mxu0 0.0
    %2692 = vmatpush1.xpose.msra.mxu0 0.0
    %2693 = vmatprep.subr.mxu0 0.0
    %2694 = vmatpush1.xpose.msra.mxu0 0.0
    %2695 = vmatprep.subr.mxu0 0.0
    %2696 = vmatpush1.xpose.msra.mxu0 0.0
    %2697 = vmatprep.subr.mxu0 0.0
    %2698 = vmatpush1.xpose.msra.mxu0 0.0
    %2699 = vmatprep.subr.mxu0 0.0
    %2700 = vmatpush1.xpose.msra.mxu0 0.0
    %2701 = vmatprep.subr.mxu0 0.0
    %2702 = vmatpush1.xpose.msra.mxu0 0.0
    %2703 = vmatprep.subr.mxu0 0.0
    %2704 = vmatpush1.xpose.msra.mxu0 0.0
    %2705 = vmatprep.subr.mxu0 0.0
    %2706 = vmatpush1.xpose.msra.mxu0 0.0
    %2707 = vmatprep.subr.mxu0 0.0
    %2708 = vmatpush1.xpose.msra.mxu0 0.0
    %2709 = vmatprep.subr.mxu0 0.0
    %2710 = vmatpush1.xpose.msra.mxu0 0.0
    %2711 = vmatprep.subr.mxu0 0.0
    %2712 = vmatpush1.xpose.msra.mxu0 0.0
    %2713 = vmatprep.subr.mxu0 0.0
    %2714 = vmatpush1.xpose.msra.mxu0 0.0
    %2715 = vmatprep.subr.mxu0 0.0
    %2716 = vmatpush1.xpose.msra.mxu0 0.0
    %2717 = vmatprep.subr.mxu0 0.0
    %2718 = vmatpush1.xpose.msra.mxu0 0.0
    %2719 = vmatprep.subr.mxu0 0.0
    %2720 = vmatpush1.xpose.msra.mxu0 0.0
    %2721 = vmatprep.subr.mxu0 0.0
    %2722 = vmatpush1.xpose.msra.mxu0 0.0
    %2723 = vmatprep.subr.mxu0 0.0
    %2724 = vmatpush1.xpose.msra.mxu0 0.0
    %2725 = vmatprep.subr.mxu0 0.0
    %2726 = vmatpush1.xpose.msra.mxu0 0.0
    %2727 = vmatprep.mubr.f32.mxu0 0.0
    %2728 = vmatmul.mubr.f32.gmra.mrb[0].mxu0 %v2657
    %v2729 = vpop.f32.mrb[0].mxu0
    %v2730 = vadd.f32 0.0, %v2729
    %v2731 = vpop.f32.mrb[0].mxu0
    %2732 = vdwg.mxu0
    %v2733 = vmul.f32 %v2648, 0.5
    %v2734 = vmul.f32 %v2730, 0.5
    %v2735 = vsel %vm580, %v2733, -inf
    %2736 = vmax.xlane.f32.xlu0 %v2735
    %v2737 = vpop.xlane.xlu0 %2736
    %v2738 = vsel %vm580, %v2734, -inf
    %2739 = vmax.xlane.f32.xlu0 %v2738
    %v2740 = vpop.xlane.xlu0 %2739
    %v2741 = vsub.f32 %v2733, %v2737
    %v2742 = vsub.f32 %v2734, %v2740
    %v2743 = vmul.f32 %v2741, 1.442695
    %v2744 = vpow.pop %v2743
    %v2745 = vmul.f32 %v2742, 1.442695
    %v2746 = vpow.pop %v2745
    %v2747 = vsel %vm580, %v2744, 0.0
    %2748 = vadd.xlane.f32.xlu0 %v2747
    %v2749 = vpop.xlane.xlu0 %2748
    %v2750 = vsel %vm580, %v2746, 0.0
    %2751 = vadd.xlane.f32.xlu0 %v2750
    %v2752 = vpop.xlane.xlu0 %2751
    %v2753 = vrcp.pop %v2749
    %v2754 = vrcp.pop %v2752
    %v2755 = vmul.f32 %v2744, %v2753
    %v2756 = vmul.f32 %v2746, %v2754
    %2757 = vrot.lane.b32.xlu0 %v401, 108
    %v2758 = vpop.permute.xlu0 %2757
    %2759 = vrot.lane.b32.xlu0 %v406, 108
    %v2760 = vpop.permute.xlu0 %2759
    %v2764 = vsel %vm580, %v2755, 0
    %2766 = vmatprep.subr.mxu0 0.0
    %2767 = vmatpush1.msra.mxu0 %v2758
    %2768 = vmatprep.subr.mxu0 0.0
    %2769 = vmatpush1.msra.mxu0 %v2760
    %2770 = vmatprep.subr.mxu0 0.0
    %2771 = vmatpush1.msra.mxu0 0.0
    %2772 = vmatprep.subr.mxu0 0.0
    %2773 = vmatpush1.msra.mxu0 0.0
    %2774 = vmatprep.subr.mxu0 0.0
    %2775 = vmatpush1.msra.mxu0 0.0
    %2776 = vmatprep.subr.mxu0 0.0
    %2777 = vmatpush1.msra.mxu0 0.0
    %2778 = vmatprep.subr.mxu0 0.0
    %2779 = vmatpush1.msra.mxu0 0.0
    %2780 = vmatprep.subr.mxu0 0.0
    %2781 = vmatpush1.msra.mxu0 0.0
    %2782 = vmatprep.subr.mxu0 0.0
    %2783 = vmatpush1.msra.mxu0 0.0
    %2784 = vmatprep.subr.mxu0 0.0
    %2785 = vmatpush1.msra.mxu0 0.0
    %2786 = vmatprep.subr.mxu0 0.0
    %2787 = vmatpush1.msra.mxu0 0.0
    %2788 = vmatprep.subr.mxu0 0.0
    %2789 = vmatpush1.msra.mxu0 0.0
    %2790 = vmatprep.subr.mxu0 0.0
    %2791 = vmatpush1.msra.mxu0 0.0
    %2792 = vmatprep.subr.mxu0 0.0
    %2793 = vmatpush1.msra.mxu0 0.0
    %2794 = vmatprep.subr.mxu0 0.0
    %2795 = vmatpush1.msra.mxu0 0.0
    %2796 = vmatprep.subr.mxu0 0.0
    %2797 = vmatpush1.msra.mxu0 0.0
    %2798 = vmatprep.subr.mxu0 0.0
    %2799 = vmatpush1.msra.mxu0 0.0
    %2800 = vmatprep.subr.mxu0 0.0
    %2801 = vmatpush1.msra.mxu0 0.0
    %2802 = vmatprep.subr.mxu0 0.0
    %2803 = vmatpush1.msra.mxu0 0.0
    %2804 = vmatprep.subr.mxu0 0.0
    %2805 = vmatpush1.msra.mxu0 0.0
    %2806 = vmatprep.subr.mxu0 0.0
    %2807 = vmatpush1.msra.mxu0 0.0
    %2808 = vmatprep.subr.mxu0 0.0
    %2809 = vmatpush1.msra.mxu0 0.0
    %2810 = vmatprep.subr.mxu0 0.0
    %2811 = vmatpush1.msra.mxu0 0.0
    %2812 = vmatprep.subr.mxu0 0.0
    %2813 = vmatpush1.msra.mxu0 0.0
    %2814 = vmatprep.subr.mxu0 0.0
    %2815 = vmatpush1.msra.mxu0 0.0
    %2816 = vmatprep.subr.mxu0 0.0
    %2817 = vmatpush1.msra.mxu0 0.0
    %2818 = vmatprep.subr.mxu0 0.0
    %2819 = vmatpush1.msra.mxu0 0.0
    %2820 = vmatprep.subr.mxu0 0.0
    %2821 = vmatpush1.msra.mxu0 0.0
    %2822 = vmatprep.subr.mxu0 0.0
    %2823 = vmatpush1.msra.mxu0 0.0
    %2824 = vmatprep.subr.mxu0 0.0
    %2825 = vmatpush1.msra.mxu0 0.0
    %2826 = vmatprep.subr.mxu0 0.0
    %2827 = vmatpush1.msra.mxu0 0.0
    %2828 = vmatprep.subr.mxu0 0.0
    %2829 = vmatpush1.msra.mxu0 0.0
    %2830 = vmatprep.mubr.f32.mxu0 0.0
    %2831 = vmatmul.mubr.f32.gmra.mrb[0].mxu0 %v2764
    %v2832 = vpop.f32.mrb[0].mxu0
    %v2833 = vadd.f32 0.0, %v2832
    %v2834 = vpop.f32.mrb[0].mxu0
    %2835 = vdwg.mxu0
    %2836 = vrot.lane.b32.xlu0 %v411, 108
    %v2837 = vpop.permute.xlu0 %2836
    %2838 = vrot.lane.b32.xlu0 %v416, 108
    %v2839 = vpop.permute.xlu0 %2838
    %v2843 = vsel %vm580, %v2756, 0
    %2845 = vmatprep.subr.mxu0 0.0
    %2846 = vmatpush1.msra.mxu0 %v2837
    %2847 = vmatprep.subr.mxu0 0.0
    %2848 = vmatpush1.msra.mxu0 %v2839
    %2849 = vmatprep.subr.mxu0 0.0
    %2850 = vmatpush1.msra.mxu0 0.0
    %2851 = vmatprep.subr.mxu0 0.0
    %2852 = vmatpush1.msra.mxu0 0.0
    %2853 = vmatprep.subr.mxu0 0.0
    %2854 = vmatpush1.msra.mxu0 0.0
    %2855 = vmatprep.subr.mxu0 0.0
    %2856 = vmatpush1.msra.mxu0 0.0
    %2857 = vmatprep.subr.mxu0 0.0
    %2858 = vmatpush1.msra.mxu0 0.0
    %2859 = vmatprep.subr.mxu0 0.0
    %2860 = vmatpush1.msra.mxu0 0.0
    %2861 = vmatprep.subr.mxu0 0.0
    %2862 = vmatpush1.msra.mxu0 0.0
    %2863 = vmatprep.subr.mxu0 0.0
    %2864 = vmatpush1.msra.mxu0 0.0
    %2865 = vmatprep.subr.mxu0 0.0
    %2866 = vmatpush1.msra.mxu0 0.0
    %2867 = vmatprep.subr.mxu0 0.0
    %2868 = vmatpush1.msra.mxu0 0.0
    %2869 = vmatprep.subr.mxu0 0.0
    %2870 = vmatpush1.msra.mxu0 0.0
    %2871 = vmatprep.subr.mxu0 0.0
    %2872 = vmatpush1.msra.mxu0 0.0
    %2873 = vmatprep.subr.mxu0 0.0
    %2874 = vmatpush1.msra.mxu0 0.0
    %2875 = vmatprep.subr.mxu0 0.0
    %2876 = vmatpush1.msra.mxu0 0.0
    %2877 = vmatprep.subr.mxu0 0.0
    %2878 = vmatpush1.msra.mxu0 0.0
    %2879 = vmatprep.subr.mxu0 0.0
    %2880 = vmatpush1.msra.mxu0 0.0
    %2881 = vmatprep.subr.mxu0 0.0
    %2882 = vmatpush1.msra.mxu0 0.0
    %2883 = vmatprep.subr.mxu0 0.0
    %2884 = vmatpush1.msra.mxu0 0.0
    %2885 = vmatprep.subr.mxu0 0.0
    %2886 = vmatpush1.msra.mxu0 0.0
    %2887 = vmatprep.subr.mxu0 0.0
    %2888 = vmatpush1.msra.mxu0 0.0
    %2889 = vmatprep.subr.mxu0 0.0
    %2890 = vmatpush1.msra.mxu0 0.0
    %2891 = vmatprep.subr.mxu0 0.0
    %2892 = vmatpush1.msra.mxu0 0.0
    %2893 = vmatprep.subr.mxu0 0.0
    %2894 = vmatpush1.msra.mxu0 0.0
    %2895 = vmatprep.subr.mxu0 0.0
    %2896 = vmatpush1.msra.mxu0 0.0
    %2897 = vmatprep.subr.mxu0 0.0
    %2898 = vmatpush1.msra.mxu0 0.0
    %2899 = vmatprep.subr.mxu0 0.0
    %2900 = vmatpush1.msra.mxu0 0.0
    %2901 = vmatprep.subr.mxu0 0.0
    %2902 = vmatpush1.msra.mxu0 0.0
    %2903 = vmatprep.subr.mxu0 0.0
    %2904 = vmatpush1.msra.mxu0 0.0
    %2905 = vmatprep.subr.mxu0 0.0
    %2906 = vmatpush1.msra.mxu0 0.0
    %2907 = vmatprep.subr.mxu0 0.0
    %2908 = vmatpush1.msra.mxu0 0.0
    %2909 = vmatprep.mubr.f32.mxu0 0.0
    %2910 = vmatmul.mubr.f32.gmra.mrb[0].mxu0 %v2843
    %v2911 = vpop.f32.mrb[0].mxu0
    %v2912 = vadd.f32 0.0, %v2911
    %v2913 = vpop.f32.mrb[0].mxu0
    %2914 = vdwg.mxu0
    %v2915 = vld [vmem:[#allocation11 + $0x14] sm:$0xf]
    %v2917 = vsel %vm419, %v2833, 0
    %v2920 = vsel %vm419, %v2912, 0
    %v2923 = vsel %vm1107, %v2915, 0
    %2925 = vmatprep.subr.mxu0 0.0
    %2926 = vmatpush1.msra.mxu0 %v2923
    %2927 = vmatprep.subr.mxu0 0.0
    %2928 = vmatpush1.msra.mxu0 0.0
    %2929 = vmatprep.subr.mxu0 0.0
    %2930 = vmatpush1.msra.mxu0 0.0
    %2931 = vmatprep.subr.mxu0 0.0
    %2932 = vmatpush1.msra.mxu0 0.0
    %2933 = vmatprep.subr.mxu0 0.0
    %2934 = vmatpush1.msra.mxu0 0.0
    %2935 = vmatprep.subr.mxu0 0.0
    %2936 = vmatpush1.msra.mxu0 0.0
    %2937 = vmatprep.subr.mxu0 0.0
    %2938 = vmatpush1.msra.mxu0 0.0
    %2939 = vmatprep.subr.mxu0 0.0
    %2940 = vmatpush1.msra.mxu0 0.0
    %2941 = vmatprep.subr.mxu0 0.0
    %2942 = vmatpush1.msra.mxu0 0.0
    %2943 = vmatprep.subr.mxu0 0.0
    %2944 = vmatpush1.msra.mxu0 0.0
    %2945 = vmatprep.subr.mxu0 0.0
    %2946 = vmatpush1.msra.mxu0 0.0
    %2947 = vmatprep.subr.mxu0 0.0
    %2948 = vmatpush1.msra.mxu0 0.0
    %2949 = vmatprep.subr.mxu0 0.0
    %2950 = vmatpush1.msra.mxu0 0.0
    %2951 = vmatprep.subr.mxu0 0.0
    %2952 = vmatpush1.msra.mxu0 0.0
    %2953 = vmatprep.subr.mxu0 0.0
    %2954 = vmatpush1.msra.mxu0 0.0
    %2955 = vmatprep.subr.mxu0 0.0
    %2956 = vmatpush1.msra.mxu0 0.0
    %2957 = vmatprep.subr.mxu0 0.0
    %2958 = vmatpush1.msra.mxu0 0.0
    %2959 = vmatprep.subr.mxu0 0.0
    %2960 = vmatpush1.msra.mxu0 0.0
    %2961 = vmatprep.subr.mxu0 0.0
    %2962 = vmatpush1.msra.mxu0 0.0
    %2963 = vmatprep.subr.mxu0 0.0
    %2964 = vmatpush1.msra.mxu0 0.0
    %2965 = vmatprep.subr.mxu0 0.0
    %2966 = vmatpush1.msra.mxu0 0.0
    %2967 = vmatprep.subr.mxu0 0.0
    %2968 = vmatpush1.msra.mxu0 0.0
    %2969 = vmatprep.subr.mxu0 0.0
    %2970 = vmatpush1.msra.mxu0 0.0
    %2971 = vmatprep.subr.mxu0 0.0
    %2972 = vmatpush1.msra.mxu0 0.0
    %2973 = vmatprep.subr.mxu0 0.0
    %2974 = vmatpush1.msra.mxu0 0.0
    %2975 = vmatprep.subr.mxu0 0.0
    %2976 = vmatpush1.msra.mxu0 0.0
    %2977 = vmatprep.subr.mxu0 0.0
    %2978 = vmatpush1.msra.mxu0 0.0
    %2979 = vmatprep.subr.mxu0 0.0
    %2980 = vmatpush1.msra.mxu0 0.0
    %2981 = vmatprep.subr.mxu0 0.0
    %2982 = vmatpush1.msra.mxu0 0.0
    %2983 = vmatprep.subr.mxu0 0.0
    %2984 = vmatpush1.msra.mxu0 0.0
    %2985 = vmatprep.subr.mxu0 0.0
    %2986 = vmatpush1.msra.mxu0 0.0
    %2987 = vmatprep.subr.mxu0 0.0
    %2988 = vmatpush1.msra.mxu0 0.0
    %2989 = vmatprep.mubr.f32.mxu0 0.0
    %2990 = vmatmul.mubr.f32.gmra.mrb[0].mxu0 %v2917
    %v2991 = vpop.f32.mrb[0].mxu0
    %v2992 = vadd.f32 0.0, %v2991
    %v2993 = vpop.f32.mrb[0].mxu0
    %2994 = vmatprep.mubr.f32.mxu0 0.0
    %2995 = vmatmul.mubr.f32.gmra.mrb[0].mxu0 %v2920
    %v2996 = vpop.f32.mrb[0].mxu0
    %v2997 = vadd.f32 0.0, %v2996
    %v2998 = vpop.f32.mrb[0].mxu0
    %2999 = vdwg.mxu0
    %v3000 = vadd.f32 %v2567, %v2992
    %v3001 = vadd.f32 %v2568, %v2997
    %3002 = vrot.lane.b32.xlu0 %v209, 104
    %v3003 = vpop.permute.xlu0 %3002
    %3004 = vrot.lane.b32.xlu0 %v300, 104
    %v3005 = vpop.permute.xlu0 %3004
    %3006 = vrot.lane.b32.xlu0 %v305, 104
    %v3007 = vpop.permute.xlu0 %3006
    %v3008 = vsel %vm419, %v3003, 0
    %v3010 = vsel %vm419, %v3005, 0
    %v3012 = vsel %vm419, %v3007, 0
    %3014 = vmatprep.subr.mxu0 0.0
    %3015 = vmatpush1.xpose.msra.mxu0 %v3010
    %3016 = vmatprep.subr.mxu0 0.0
    %3017 = vmatpush1.xpose.msra.mxu0 %v3012
    %3018 = vmatprep.subr.mxu0 0.0
    %3019 = vmatpush1.xpose.msra.mxu0 0.0
    %3020 = vmatprep.subr.mxu0 0.0
    %3021 = vmatpush1.xpose.msra.mxu0 0.0
    %3022 = vmatprep.subr.mxu0 0.0
    %3023 = vmatpush1.xpose.msra.mxu0 0.0
    %3024 = vmatprep.subr.mxu0 0.0
    %3025 = vmatpush1.xpose.msra.mxu0 0.0
    %3026 = vmatprep.subr.mxu0 0.0
    %3027 = vmatpush1.xpose.msra.mxu0 0.0
    %3028 = vmatprep.subr.mxu0 0.0
    %3029 = vmatpush1.xpose.msra.mxu0 0.0
    %3030 = vmatprep.subr.mxu0 0.0
    %3031 = vmatpush1.xpose.msra.mxu0 0.0
    %3032 = vmatprep.subr.mxu0 0.0
    %3033 = vmatpush1.xpose.msra.mxu0 0.0
    %3034 = vmatprep.subr.mxu0 0.0
    %3035 = vmatpush1.xpose.msra.mxu0 0.0
    %3036 = vmatprep.subr.mxu0 0.0
    %3037 = vmatpush1.xpose.msra.mxu0 0.0
    %3038 = vmatprep.subr.mxu0 0.0
    %3039 = vmatpush1.xpose.msra.mxu0 0.0
    %3040 = vmatprep.subr.mxu0 0.0
    %3041 = vmatpush1.xpose.msra.mxu0 0.0
    %3042 = vmatprep.subr.mxu0 0.0
    %3043 = vmatpush1.xpose.msra.mxu0 0.0
    %3044 = vmatprep.subr.mxu0 0.0
    %3045 = vmatpush1.xpose.msra.mxu0 0.0
    %3046 = vmatprep.subr.mxu0 0.0
    %3047 = vmatpush1.xpose.msra.mxu0 0.0
    %3048 = vmatprep.subr.mxu0 0.0
    %3049 = vmatpush1.xpose.msra.mxu0 0.0
    %3050 = vmatprep.subr.mxu0 0.0
    %3051 = vmatpush1.xpose.msra.mxu0 0.0
    %3052 = vmatprep.subr.mxu0 0.0
    %3053 = vmatpush1.xpose.msra.mxu0 0.0
    %3054 = vmatprep.subr.mxu0 0.0
    %3055 = vmatpush1.xpose.msra.mxu0 0.0
    %3056 = vmatprep.subr.mxu0 0.0
    %3057 = vmatpush1.xpose.msra.mxu0 0.0
    %3058 = vmatprep.subr.mxu0 0.0
    %3059 = vmatpush1.xpose.msra.mxu0 0.0
    %3060 = vmatprep.subr.mxu0 0.0
    %3061 = vmatpush1.xpose.msra.mxu0 0.0
    %3062 = vmatprep.subr.mxu0 0.0
    %3063 = vmatpush1.xpose.msra.mxu0 0.0
    %3064 = vmatprep.subr.mxu0 0.0
    %3065 = vmatpush1.xpose.msra.mxu0 0.0
    %3066 = vmatprep.subr.mxu0 0.0
    %3067 = vmatpush1.xpose.msra.mxu0 0.0
    %3068 = vmatprep.subr.mxu0 0.0
    %3069 = vmatpush1.xpose.msra.mxu0 0.0
    %3070 = vmatprep.subr.mxu0 0.0
    %3071 = vmatpush1.xpose.msra.mxu0 0.0
    %3072 = vmatprep.subr.mxu0 0.0
    %3073 = vmatpush1.xpose.msra.mxu0 0.0
    %3074 = vmatprep.subr.mxu0 0.0
    %3075 = vmatpush1.xpose.msra.mxu0 0.0
    %3076 = vmatprep.subr.mxu0 0.0
    %3077 = vmatpush1.xpose.msra.mxu0 0.0
    %3078 = vmatprep.mubr.f32.mxu0 0.0
    %3079 = vmatmul.mubr.f32.gmra.mrb[0].mxu0 %v3008
    %v3080 = vpop.f32.mrb[0].mxu0
    %v3081 = vadd.f32 0.0, %v3080
    %v3082 = vpop.f32.mrb[0].mxu0
    %3083 = vdwg.mxu0
    %3084 = vrot.lane.b32.xlu0 %v214, 104
    %v3085 = vpop.permute.xlu0 %3084
    %3086 = vrot.lane.b32.xlu0 %v310, 104
    %v3087 = vpop.permute.xlu0 %3086
    %3088 = vrot.lane.b32.xlu0 %v315, 104
    %v3089 = vpop.permute.xlu0 %3088
    %v3090 = vsel %vm419, %v3085, 0
    %v3092 = vsel %vm419, %v3087, 0
    %v3094 = vsel %vm419, %v3089, 0
    %3096 = vmatprep.subr.mxu0 0.0
    %3097 = vmatpush1.xpose.msra.mxu0 %v3092
    %3098 = vmatprep.subr.mxu0 0.0
    %3099 = vmatpush1.xpose.msra.mxu0 %v3094
    %3100 = vmatprep.subr.mxu0 0.0
    %3101 = vmatpush1.xpose.msra.mxu0 0.0
    %3102 = vmatprep.subr.mxu0 0.0
    %3103 = vmatpush1.xpose.msra.mxu0 0.0
    %3104 = vmatprep.subr.mxu0 0.0
    %3105 = vmatpush1.xpose.msra.mxu0 0.0
    %3106 = vmatprep.subr.mxu0 0.0
    %3107 = vmatpush1.xpose.msra.mxu0 0.0
    %3108 = vmatprep.subr.mxu0 0.0
    %3109 = vmatpush1.xpose.msra.mxu0 0.0
    %3110 = vmatprep.subr.mxu0 0.0
    %3111 = vmatpush1.xpose.msra.mxu0 0.0
    %3112 = vmatprep.subr.mxu0 0.0
    %3113 = vmatpush1.xpose.msra.mxu0 0.0
    %3114 = vmatprep.subr.mxu0 0.0
    %3115 = vmatpush1.xpose.msra.mxu0 0.0
    %3116 = vmatprep.subr.mxu0 0.0
    %3117 = vmatpush1.xpose.msra.mxu0 0.0
    %3118 = vmatprep.subr.mxu0 0.0
    %3119 = vmatpush1.xpose.msra.mxu0 0.0
    %3120 = vmatprep.subr.mxu0 0.0
    %3121 = vmatpush1.xpose.msra.mxu0 0.0
    %3122 = vmatprep.subr.mxu0 0.0
    %3123 = vmatpush1.xpose.msra.mxu0 0.0
    %3124 = vmatprep.subr.mxu0 0.0
    %3125 = vmatpush1.xpose.msra.mxu0 0.0
    %3126 = vmatprep.subr.mxu0 0.0
    %3127 = vmatpush1.xpose.msra.mxu0 0.0
    %3128 = vmatprep.subr.mxu0 0.0
    %3129 = vmatpush1.xpose.msra.mxu0 0.0
    %3130 = vmatprep.subr.mxu0 0.0
    %3131 = vmatpush1.xpose.msra.mxu0 0.0
    %3132 = vmatprep.subr.mxu0 0.0
    %3133 = vmatpush1.xpose.msra.mxu0 0.0
    %3134 = vmatprep.subr.mxu0 0.0
    %3135 = vmatpush1.xpose.msra.mxu0 0.0
    %3136 = vmatprep.subr.mxu0 0.0
    %3137 = vmatpush1.xpose.msra.mxu0 0.0
    %3138 = vmatprep.subr.mxu0 0.0
    %3139 = vmatpush1.xpose.msra.mxu0 0.0
    %3140 = vmatprep.subr.mxu0 0.0
    %3141 = vmatpush1.xpose.msra.mxu0 0.0
    %3142 = vmatprep.subr.mxu0 0.0
    %3143 = vmatpush1.xpose.msra.mxu0 0.0
    %3144 = vmatprep.subr.mxu0 0.0
    %3145 = vmatpush1.xpose.msra.mxu0 0.0
    %3146 = vmatprep.subr.mxu0 0.0
    %3147 = vmatpush1.xpose.msra.mxu0 0.0
    %3148 = vmatprep.subr.mxu0 0.0
    %3149 = vmatpush1.xpose.msra.mxu0 0.0
    %3150 = vmatprep.subr.mxu0 0.0
    %3151 = vmatpush1.xpose.msra.mxu0 0.0
    %3152 = vmatprep.subr.mxu0 0.0
    %3153 = vmatpush1.xpose.msra.mxu0 0.0
    %3154 = vmatprep.subr.mxu0 0.0
    %3155 = vmatpush1.xpose.msra.mxu0 0.0
    %3156 = vmatprep.subr.mxu0 0.0
    %3157 = vmatpush1.xpose.msra.mxu0 0.0
    %3158 = vmatprep.subr.mxu0 0.0
    %3159 = vmatpush1.xpose.msra.mxu0 0.0
    %3160 = vmatprep.mubr.f32.mxu0 0.0
    %3161 = vmatmul.mubr.f32.gmra.mrb[0].mxu0 %v3090
    %v3162 = vpop.f32.mrb[0].mxu0
    %v3163 = vadd.f32 0.0, %v3162
    %v3164 = vpop.f32.mrb[0].mxu0
    %3165 = vdwg.mxu0
    %v3166 = vmul.f32 %v3081, 0.5
    %v3167 = vmul.f32 %v3163, 0.5
    %v3168 = vsel %vm580, %v3166, -inf
    %3169 = vmax.xlane.f32.xlu0 %v3168
    %v3170 = vpop.xlane.xlu0 %3169
    %v3171 = vsel %vm580, %v3167, -inf
    %3172 = vmax.xlane.f32.xlu0 %v3171
    %v3173 = vpop.xlane.xlu0 %3172
    %v3174 = vsub.f32 %v3166, %v3170
    %v3175 = vsub.f32 %v3167, %v3173
    %v3176 = vmul.f32 %v3174, 1.442695
    %v3177 = vpow.pop %v3176
    %v3178 = vmul.f32 %v3175, 1.442695
    %v3179 = vpow.pop %v3178
    %v3180 = vsel %vm580, %v3177, 0.0
    %3181 = vadd.xlane.f32.xlu0 %v3180
    %v3182 = vpop.xlane.xlu0 %3181
    %v3183 = vsel %vm580, %v3179, 0.0
    %3184 = vadd.xlane.f32.xlu0 %v3183
    %v3185 = vpop.xlane.xlu0 %3184
    %v3186 = vrcp.pop %v3182
    %v3187 = vrcp.pop %v3185
    %v3188 = vmul.f32 %v3177, %v3186
    %v3189 = vmul.f32 %v3179, %v3187
    %3190 = vrot.lane.b32.xlu0 %v401, 104
    %v3191 = vpop.permute.xlu0 %3190
    %3192 = vrot.lane.b32.xlu0 %v406, 104
    %v3193 = vpop.permute.xlu0 %3192
    %v3197 = vsel %vm580, %v3188, 0
    %3199 = vmatprep.subr.mxu0 0.0
    %3200 = vmatpush1.msra.mxu0 %v3191
    %3201 = vmatprep.subr.mxu0 0.0
    %3202 = vmatpush1.msra.mxu0 %v3193
    %3203 = vmatprep.subr.mxu0 0.0
    %3204 = vmatpush1.msra.mxu0 0.0
    %3205 = vmatprep.subr.mxu0 0.0
    %3206 = vmatpush1.msra.mxu0 0.0
    %3207 = vmatprep.subr.mxu0 0.0
    %3208 = vmatpush1.msra.mxu0 0.0
    %3209 = vmatprep.subr.mxu0 0.0
    %3210 = vmatpush1.msra.mxu0 0.0
    %3211 = vmatprep.subr.mxu0 0.0
    %3212 = vmatpush1.msra.mxu0 0.0
    %3213 = vmatprep.subr.mxu0 0.0
    %3214 = vmatpush1.msra.mxu0 0.0
    %3215 = vmatprep.subr.mxu0 0.0
    %3216 = vmatpush1.msra.mxu0 0.0
    %3217 = vmatprep.subr.mxu0 0.0
    %3218 = vmatpush1.msra.mxu0 0.0
    %3219 = vmatprep.subr.mxu0 0.0
    %3220 = vmatpush1.msra.mxu0 0.0
    %3221 = vmatprep.subr.mxu0 0.0
    %3222 = vmatpush1.msra.mxu0 0.0
    %3223 = vmatprep.subr.mxu0 0.0
    %3224 = vmatpush1.msra.mxu0 0.0
    %3225 = vmatprep.subr.mxu0 0.0
    %3226 = vmatpush1.msra.mxu0 0.0
    %3227 = vmatprep.subr.mxu0 0.0
    %3228 = vmatpush1.msra.mxu0 0.0
    %3229 = vmatprep.subr.mxu0 0.0
    %3230 = vmatpush1.msra.mxu0 0.0
    %3231 = vmatprep.subr.mxu0 0.0
    %3232 = vmatpush1.msra.mxu0 0.0
    %3233 = vmatprep.subr.mxu0 0.0
    %3234 = vmatpush1.msra.mxu0 0.0
    %3235 = vmatprep.subr.mxu0 0.0
    %3236 = vmatpush1.msra.mxu0 0.0
    %3237 = vmatprep.subr.mxu0 0.0
    %3238 = vmatpush1.msra.mxu0 0.0
    %3239 = vmatprep.subr.mxu0 0.0
    %3240 = vmatpush1.msra.mxu0 0.0
    %3241 = vmatprep.subr.mxu0 0.0
    %3242 = vmatpush1.msra.mxu0 0.0
    %3243 = vmatprep.subr.mxu0 0.0
    %3244 = vmatpush1.msra.mxu0 0.0
    %3245 = vmatprep.subr.mxu0 0.0
    %3246 = vmatpush1.msra.mxu0 0.0
    %3247 = vmatprep.subr.mxu0 0.0
    %3248 = vmatpush1.msra.mxu0 0.0
    %3249 = vmatprep.subr.mxu0 0.0
    %3250 = vmatpush1.msra.mxu0 0.0
    %3251 = vmatprep.subr.mxu0 0.0
    %3252 = vmatpush1.msra.mxu0 0.0
    %3253 = vmatprep.subr.mxu0 0.0
    %3254 = vmatpush1.msra.mxu0 0.0
    %3255 = vmatprep.subr.mxu0 0.0
    %3256 = vmatpush1.msra.mxu0 0.0
    %3257 = vmatprep.subr.mxu0 0.0
    %3258 = vmatpush1.msra.mxu0 0.0
    %3259 = vmatprep.subr.mxu0 0.0
    %3260 = vmatpush1.msra.mxu0 0.0
    %3261 = vmatprep.subr.mxu0 0.0
    %3262 = vmatpush1.msra.mxu0 0.0
    %3263 = vmatprep.mubr.f32.mxu0 0.0
    %3264 = vmatmul.mubr.f32.gmra.mrb[0].mxu0 %v3197
    %v3265 = vpop.f32.mrb[0].mxu0
    %v3266 = vadd.f32 0.0, %v3265
    %v3267 = vpop.f32.mrb[0].mxu0
    %3268 = vdwg.mxu0
    %3269 = vrot.lane.b32.xlu0 %v411, 104
    %v3270 = vpop.permute.xlu0 %3269
    %3271 = vrot.lane.b32.xlu0 %v416, 104
    %v3272 = vpop.permute.xlu0 %3271
    %v3276 = vsel %vm580, %v3189, 0
    %3278 = vmatprep.subr.mxu0 0.0
    %3279 = vmatpush1.msra.mxu0 %v3270
    %3280 = vmatprep.subr.mxu0 0.0
    %3281 = vmatpush1.msra.mxu0 %v3272
    %3282 = vmatprep.subr.mxu0 0.0
    %3283 = vmatpush1.msra.mxu0 0.0
    %3284 = vmatprep.subr.mxu0 0.0
    %3285 = vmatpush1.msra.mxu0 0.0
    %3286 = vmatprep.subr.mxu0 0.0
    %3287 = vmatpush1.msra.mxu0 0.0
    %3288 = vmatprep.subr.mxu0 0.0
    %3289 = vmatpush1.msra.mxu0 0.0
    %3290 = vmatprep.subr.mxu0 0.0
    %3291 = vmatpush1.msra.mxu0 0.0
    %3292 = vmatprep.subr.mxu0 0.0
    %3293 = vmatpush1.msra.mxu0 0.0
    %3294 = vmatprep.subr.mxu0 0.0
    %3295 = vmatpush1.msra.mxu0 0.0
    %3296 = vmatprep.subr.mxu0 0.0
    %3297 = vmatpush1.msra.mxu0 0.0
    %3298 = vmatprep.subr.mxu0 0.0
    %3299 = vmatpush1.msra.mxu0 0.0
    %3300 = vmatprep.subr.mxu0 0.0
    %3301 = vmatpush1.msra.mxu0 0.0
    %3302 = vmatprep.subr.mxu0 0.0
    %3303 = vmatpush1.msra.mxu0 0.0
    %3304 = vmatprep.subr.mxu0 0.0
    %3305 = vmatpush1.msra.mxu0 0.0
    %3306 = vmatprep.subr.mxu0 0.0
    %3307 = vmatpush1.msra.mxu0 0.0
    %3308 = vmatprep.subr.mxu0 0.0
    %3309 = vmatpush1.msra.mxu0 0.0
    %3310 = vmatprep.subr.mxu0 0.0
    %3311 = vmatpush1.msra.mxu0 0.0
    %3312 = vmatprep.subr.mxu0 0.0
    %3313 = vmatpush1.msra.mxu0 0.0
    %3314 = vmatprep.subr.mxu0 0.0
    %3315 = vmatpush1.msra.mxu0 0.0
    %3316 = vmatprep.subr.mxu0 0.0
    %3317 = vmatpush1.msra.mxu0 0.0
    %3318 = vmatprep.subr.mxu0 0.0
    %3319 = vmatpush1.msra.mxu0 0.0
    %3320 = vmatprep.subr.mxu0 0.0
    %3321 = vmatpush1.msra.mxu0 0.0
    %3322 = vmatprep.subr.mxu0 0.0
    %3323 = vmatpush1.msra.mxu0 0.0
    %3324 = vmatprep.subr.mxu0 0.0
    %3325 = vmatpush1.msra.mxu0 0.0
    %3326 = vmatprep.subr.mxu0 0.0
    %3327 = vmatpush1.msra.mxu0 0.0
    %3328 = vmatprep.subr.mxu0 0.0
    %3329 = vmatpush1.msra.mxu0 0.0
    %3330 = vmatprep.subr.mxu0 0.0
    %3331 = vmatpush1.msra.mxu0 0.0
    %3332 = vmatprep.subr.mxu0 0.0
    %3333 = vmatpush1.msra.mxu0 0.0
    %3334 = vmatprep.subr.mxu0 0.0
    %3335 = vmatpush1.msra.mxu0 0.0
    %3336 = vmatprep.subr.mxu0 0.0
    %3337 = vmatpush1.msra.mxu0 0.0
    %3338 = vmatprep.subr.mxu0 0.0
    %3339 = vmatpush1.msra.mxu0 0.0
    %3340 = vmatprep.subr.mxu0 0.0
    %3341 = vmatpush1.msra.mxu0 0.0
    %3342 = vmatprep.mubr.f32.mxu0 0.0
    %3343 = vmatmul.mubr.f32.gmra.mrb[0].mxu0 %v3276
    %v3344 = vpop.f32.mrb[0].mxu0
    %v3345 = vadd.f32 0.0, %v3344
    %v3346 = vpop.f32.mrb[0].mxu0
    %3347 = vdwg.mxu0
    %v3348 = vld [vmem:[#allocation11 + $0x18] sm:$0xf]
    %v3350 = vsel %vm419, %v3266, 0
    %v3353 = vsel %vm419, %v3345, 0
    %v3356 = vsel %vm1107, %v3348, 0
    %3358 = vmatprep.subr.mxu0 0.0
    %3359 = vmatpush1.msra.mxu0 %v3356
    %3360 = vmatprep.subr.mxu0 0.0
    %3361 = vmatpush1.msra.mxu0 0.0
    %3362 = vmatprep.subr.mxu0 0.0
    %3363 = vmatpush1.msra.mxu0 0.0
    %3364 = vmatprep.subr.mxu0 0.0
    %3365 = vmatpush1.msra.mxu0 0.0
    %3366 = vmatprep.subr.mxu0 0.0
    %3367 = vmatpush1.msra.mxu0 0.0
    %3368 = vmatprep.subr.mxu0 0.0
    %3369 = vmatpush1.msra.mxu0 0.0
    %3370 = vmatprep.subr.mxu0 0.0
    %3371 = vmatpush1.msra.mxu0 0.0
    %3372 = vmatprep.subr.mxu0 0.0
    %3373 = vmatpush1.msra.mxu0 0.0
    %3374 = vmatprep.subr.mxu0 0.0
    %3375 = vmatpush1.msra.mxu0 0.0
    %3376 = vmatprep.subr.mxu0 0.0
    %3377 = vmatpush1.msra.mxu0 0.0
    %3378 = vmatprep.subr.mxu0 0.0
    %3379 = vmatpush1.msra.mxu0 0.0
    %3380 = vmatprep.subr.mxu0 0.0
    %3381 = vmatpush1.msra.mxu0 0.0
    %3382 = vmatprep.subr.mxu0 0.0
    %3383 = vmatpush1.msra.mxu0 0.0
    %3384 = vmatprep.subr.mxu0 0.0
    %3385 = vmatpush1.msra.mxu0 0.0
    %3386 = vmatprep.subr.mxu0 0.0
    %3387 = vmatpush1.msra.mxu0 0.0
    %3388 = vmatprep.subr.mxu0 0.0
    %3389 = vmatpush1.msra.mxu0 0.0
    %3390 = vmatprep.subr.mxu0 0.0
    %3391 = vmatpush1.msra.mxu0 0.0
    %3392 = vmatprep.subr.mxu0 0.0
    %3393 = vmatpush1.msra.mxu0 0.0
    %3394 = vmatprep.subr.mxu0 0.0
    %3395 = vmatpush1.msra.mxu0 0.0
    %3396 = vmatprep.subr.mxu0 0.0
    %3397 = vmatpush1.msra.mxu0 0.0
    %3398 = vmatprep.subr.mxu0 0.0
    %3399 = vmatpush1.msra.mxu0 0.0
    %3400 = vmatprep.subr.mxu0 0.0
    %3401 = vmatpush1.msra.mxu0 0.0
    %3402 = vmatprep.subr.mxu0 0.0
    %3403 = vmatpush1.msra.mxu0 0.0
    %3404 = vmatprep.subr.mxu0 0.0
    %3405 = vmatpush1.msra.mxu0 0.0
    %3406 = vmatprep.subr.mxu0 0.0
    %3407 = vmatpush1.msra.mxu0 0.0
    %3408 = vmatprep.subr.mxu0 0.0
    %3409 = vmatpush1.msra.mxu0 0.0
    %3410 = vmatprep.subr.mxu0 0.0
    %3411 = vmatpush1.msra.mxu0 0.0
    %3412 = vmatprep.subr.mxu0 0.0
    %3413 = vmatpush1.msra.mxu0 0.0
    %3414 = vmatprep.subr.mxu0 0.0
    %3415 = vmatpush1.msra.mxu0 0.0
    %3416 = vmatprep.subr.mxu0 0.0
    %3417 = vmatpush1.msra.mxu0 0.0
    %3418 = vmatprep.subr.mxu0 0.0
    %3419 = vmatpush1.msra.mxu0 0.0
    %3420 = vmatprep.subr.mxu0 0.0
    %3421 = vmatpush1.msra.mxu0 0.0
    %3422 = vmatprep.mubr.f32.mxu0 0.0
    %3423 = vmatmul.mubr.f32.gmra.mrb[0].mxu0 %v3350
    %v3424 = vpop.f32.mrb[0].mxu0
    %v3425 = vadd.f32 0.0, %v3424
    %v3426 = vpop.f32.mrb[0].mxu0
    %3427 = vmatprep.mubr.f32.mxu0 0.0
    %3428 = vmatmul.mubr.f32.gmra.mrb[0].mxu0 %v3353
    %v3429 = vpop.f32.mrb[0].mxu0
    %v3430 = vadd.f32 0.0, %v3429
    %v3431 = vpop.f32.mrb[0].mxu0
    %3432 = vdwg.mxu0
    %v3433 = vadd.f32 %v3000, %v3425
    %v3434 = vadd.f32 %v3001, %v3430
    %3435 = vrot.lane.b32.xlu0 %v209, 100
    %v3436 = vpop.permute.xlu0 %3435
    %3437 = vrot.lane.b32.xlu0 %v300, 100
    %v3438 = vpop.permute.xlu0 %3437
    %3439 = vrot.lane.b32.xlu0 %v305, 100
    %v3440 = vpop.permute.xlu0 %3439
    %v3441 = vsel %vm419, %v3436, 0
    %v3443 = vsel %vm419, %v3438, 0
    %v3445 = vsel %vm419, %v3440, 0
    %3447 = vmatprep.subr.mxu0 0.0
    %3448 = vmatpush1.xpose.msra.mxu0 %v3443
    %3449 = vmatprep.subr.mxu0 0.0
    %3450 = vmatpush1.xpose.msra.mxu0 %v3445
    %3451 = vmatprep.subr.mxu0 0.0
    %3452 = vmatpush1.xpose.msra.mxu0 0.0
    %3453 = vmatprep.subr.mxu0 0.0
    %3454 = vmatpush1.xpose.msra.mxu0 0.0
    %3455 = vmatprep.subr.mxu0 0.0
    %3456 = vmatpush1.xpose.msra.mxu0 0.0
    %3457 = vmatprep.subr.mxu0 0.0
    %3458 = vmatpush1.xpose.msra.mxu0 0.0
    %3459 = vmatprep.subr.mxu0 0.0
    %3460 = vmatpush1.xpose.msra.mxu0 0.0
    %3461 = vmatprep.subr.mxu0 0.0
    %3462 = vmatpush1.xpose.msra.mxu0 0.0
    %3463 = vmatprep.subr.mxu0 0.0
    %3464 = vmatpush1.xpose.msra.mxu0 0.0
    %3465 = vmatprep.subr.mxu0 0.0
    %3466 = vmatpush1.xpose.msra.mxu0 0.0
    %3467 = vmatprep.subr.mxu0 0.0
    %3468 = vmatpush1.xpose.msra.mxu0 0.0
    %3469 = vmatprep.subr.mxu0 0.0
    %3470 = vmatpush1.xpose.msra.mxu0 0.0
    %3471 = vmatprep.subr.mxu0 0.0
    %3472 = vmatpush1.xpose.msra.mxu0 0.0
    %3473 = vmatprep.subr.mxu0 0.0
    %3474 = vmatpush1.xpose.msra.mxu0 0.0
    %3475 = vmatprep.subr.mxu0 0.0
    %3476 = vmatpush1.xpose.msra.mxu0 0.0
    %3477 = vmatprep.subr.mxu0 0.0
    %3478 = vmatpush1.xpose.msra.mxu0 0.0
    %3479 = vmatprep.subr.mxu0 0.0
    %3480 = vmatpush1.xpose.msra.mxu0 0.0
    %3481 = vmatprep.subr.mxu0 0.0
    %3482 = vmatpush1.xpose.msra.mxu0 0.0
    %3483 = vmatprep.subr.mxu0 0.0
    %3484 = vmatpush1.xpose.msra.mxu0 0.0
    %3485 = vmatprep.subr.mxu0 0.0
    %3486 = vmatpush1.xpose.msra.mxu0 0.0
    %3487 = vmatprep.subr.mxu0 0.0
    %3488 = vmatpush1.xpose.msra.mxu0 0.0
    %3489 = vmatprep.subr.mxu0 0.0
    %3490 = vmatpush1.xpose.msra.mxu0 0.0
    %3491 = vmatprep.subr.mxu0 0.0
    %3492 = vmatpush1.xpose.msra.mxu0 0.0
    %3493 = vmatprep.subr.mxu0 0.0
    %3494 = vmatpush1.xpose.msra.mxu0 0.0
    %3495 = vmatprep.subr.mxu0 0.0
    %3496 = vmatpush1.xpose.msra.mxu0 0.0
    %3497 = vmatprep.subr.mxu0 0.0
    %3498 = vmatpush1.xpose.msra.mxu0 0.0
    %3499 = vmatprep.subr.mxu0 0.0
    %3500 = vmatpush1.xpose.msra.mxu0 0.0
    %3501 = vmatprep.subr.mxu0 0.0
    %3502 = vmatpush1.xpose.msra.mxu0 0.0
    %3503 = vmatprep.subr.mxu0 0.0
    %3504 = vmatpush1.xpose.msra.mxu0 0.0
    %3505 = vmatprep.subr.mxu0 0.0
    %3506 = vmatpush1.xpose.msra.mxu0 0.0
    %3507 = vmatprep.subr.mxu0 0.0
    %3508 = vmatpush1.xpose.msra.mxu0 0.0
    %3509 = vmatprep.subr.mxu0 0.0
    %3510 = vmatpush1.xpose.msra.mxu0 0.0
    %3511 = vmatprep.mubr.f32.mxu0 0.0
    %3512 = vmatmul.mubr.f32.gmra.mrb[0].mxu0 %v3441
    %v3513 = vpop.f32.mrb[0].mxu0
    %v3514 = vadd.f32 0.0, %v3513
    %v3515 = vpop.f32.mrb[0].mxu0
    %3516 = vdwg.mxu0
    %3517 = vrot.lane.b32.xlu0 %v214, 100
    %v3518 = vpop.permute.xlu0 %3517
    %3519 = vrot.lane.b32.xlu0 %v310, 100
    %v3520 = vpop.permute.xlu0 %3519
    %3521 = vrot.lane.b32.xlu0 %v315, 100
    %v3522 = vpop.permute.xlu0 %3521
    %v3523 = vsel %vm419, %v3518, 0
    %v3525 = vsel %vm419, %v3520, 0
    %v3527 = vsel %vm419, %v3522, 0
    %3529 = vmatprep.subr.mxu0 0.0
    %3530 = vmatpush1.xpose.msra.mxu0 %v3525
    %3531 = vmatprep.subr.mxu0 0.0
    %3532 = vmatpush1.xpose.msra.mxu0 %v3527
    %3533 = vmatprep.subr.mxu0 0.0
    %3534 = vmatpush1.xpose.msra.mxu0 0.0
    %3535 = vmatprep.subr.mxu0 0.0
    %3536 = vmatpush1.xpose.msra.mxu0 0.0
    %3537 = vmatprep.subr.mxu0 0.0
    %3538 = vmatpush1.xpose.msra.mxu0 0.0
    %3539 = vmatprep.subr.mxu0 0.0
    %3540 = vmatpush1.xpose.msra.mxu0 0.0
    %3541 = vmatprep.subr.mxu0 0.0
    %3542 = vmatpush1.xpose.msra.mxu0 0.0
    %3543 = vmatprep.subr.mxu0 0.0
    %3544 = vmatpush1.xpose.msra.mxu0 0.0
    %3545 = vmatprep.subr.mxu0 0.0
    %3546 = vmatpush1.xpose.msra.mxu0 0.0
    %3547 = vmatprep.subr.mxu0 0.0
    %3548 = vmatpush1.xpose.msra.mxu0 0.0
    %3549 = vmatprep.subr.mxu0 0.0
    %3550 = vmatpush1.xpose.msra.mxu0 0.0
    %3551 = vmatprep.subr.mxu0 0.0
    %3552 = vmatpush1.xpose.msra.mxu0 0.0
    %3553 = vmatprep.subr.mxu0 0.0
    %3554 = vmatpush1.xpose.msra.mxu0 0.0
    %3555 = vmatprep.subr.mxu0 0.0
    %3556 = vmatpush1.xpose.msra.mxu0 0.0
    %3557 = vmatprep.subr.mxu0 0.0
    %3558 = vmatpush1.xpose.msra.mxu0 0.0
    %3559 = vmatprep.subr.mxu0 0.0
    %3560 = vmatpush1.xpose.msra.mxu0 0.0
    %3561 = vmatprep.subr.mxu0 0.0
    %3562 = vmatpush1.xpose.msra.mxu0 0.0
    %3563 = vmatprep.subr.mxu0 0.0
    %3564 = vmatpush1.xpose.msra.mxu0 0.0
    %3565 = vmatprep.subr.mxu0 0.0
    %3566 = vmatpush1.xpose.msra.mxu0 0.0
    %3567 = vmatprep.subr.mxu0 0.0
    %3568 = vmatpush1.xpose.msra.mxu0 0.0
    %3569 = vmatprep.subr.mxu0 0.0
    %3570 = vmatpush1.xpose.msra.mxu0 0.0
    %3571 = vmatprep.subr.mxu0 0.0
    %3572 = vmatpush1.xpose.msra.mxu0 0.0
    %3573 = vmatprep.subr.mxu0 0.0
    %3574 = vmatpush1.xpose.msra.mxu0 0.0
    %3575 = vmatprep.subr.mxu0 0.0
    %3576 = vmatpush1.xpose.msra.mxu0 0.0
    %3577 = vmatprep.subr.mxu0 0.0
    %3578 = vmatpush1.xpose.msra.mxu0 0.0
    %3579 = vmatprep.subr.mxu0 0.0
    %3580 = vmatpush1.xpose.msra.mxu0 0.0
    %3581 = vmatprep.subr.mxu0 0.0
    %3582 = vmatpush1.xpose.msra.mxu0 0.0
    %3583 = vmatprep.subr.mxu0 0.0
    %3584 = vmatpush1.xpose.msra.mxu0 0.0
    %3585 = vmatprep.subr.mxu0 0.0
    %3586 = vmatpush1.xpose.msra.mxu0 0.0
    %3587 = vmatprep.subr.mxu0 0.0
    %3588 = vmatpush1.xpose.msra.mxu0 0.0
    %3589 = vmatprep.subr.mxu0 0.0
    %3590 = vmatpush1.xpose.msra.mxu0 0.0
    %3591 = vmatprep.subr.mxu0 0.0
    %3592 = vmatpush1.xpose.msra.mxu0 0.0
    %3593 = vmatprep.mubr.f32.mxu0 0.0
    %3594 = vmatmul.mubr.f32.gmra.mrb[0].mxu0 %v3523
    %v3595 = vpop.f32.mrb[0].mxu0
    %v3596 = vadd.f32 0.0, %v3595
    %v3597 = vpop.f32.mrb[0].mxu0
    %3598 = vdwg.mxu0
    %v3599 = vmul.f32 %v3514, 0.5
    %v3600 = vmul.f32 %v3596, 0.5
    %v3601 = vsel %vm580, %v3599, -inf
    %3602 = vmax.xlane.f32.xlu0 %v3601
    %v3603 = vpop.xlane.xlu0 %3602
    %v3604 = vsel %vm580, %v3600, -inf
    %3605 = vmax.xlane.f32.xlu0 %v3604
    %v3606 = vpop.xlane.xlu0 %3605
    %v3607 = vsub.f32 %v3599, %v3603
    %v3608 = vsub.f32 %v3600, %v3606
    %v3609 = vmul.f32 %v3607, 1.442695
    %v3610 = vpow.pop %v3609
    %v3611 = vmul.f32 %v3608, 1.442695
    %v3612 = vpow.pop %v3611
    %v3613 = vsel %vm580, %v3610, 0.0
    %3614 = vadd.xlane.f32.xlu0 %v3613
    %v3615 = vpop.xlane.xlu0 %3614
    %v3616 = vsel %vm580, %v3612, 0.0
    %3617 = vadd.xlane.f32.xlu0 %v3616
    %v3618 = vpop.xlane.xlu0 %3617
    %v3619 = vrcp.pop %v3615
    %v3620 = vrcp.pop %v3618
    %v3621 = vmul.f32 %v3610, %v3619
    %v3622 = vmul.f32 %v3612, %v3620
    %3623 = vrot.lane.b32.xlu0 %v401, 100
    %v3624 = vpop.permute.xlu0 %3623
    %3625 = vrot.lane.b32.xlu0 %v406, 100
    %v3626 = vpop.permute.xlu0 %3625
    %v3630 = vsel %vm580, %v3621, 0
    %3632 = vmatprep.subr.mxu0 0.0
    %3633 = vmatpush1.msra.mxu0 %v3624
    %3634 = vmatprep.subr.mxu0 0.0
    %3635 = vmatpush1.msra.mxu0 %v3626
    %3636 = vmatprep.subr.mxu0 0.0
    %3637 = vmatpush1.msra.mxu0 0.0
    %3638 = vmatprep.subr.mxu0 0.0
    %3639 = vmatpush1.msra.mxu0 0.0
    %3640 = vmatprep.subr.mxu0 0.0
    %3641 = vmatpush1.msra.mxu0 0.0
    %3642 = vmatprep.subr.mxu0 0.0
    %3643 = vmatpush1.msra.mxu0 0.0
    %3644 = vmatprep.subr.mxu0 0.0
    %3645 = vmatpush1.msra.mxu0 0.0
    %3646 = vmatprep.subr.mxu0 0.0
    %3647 = vmatpush1.msra.mxu0 0.0
    %3648 = vmatprep.subr.mxu0 0.0
    %3649 = vmatpush1.msra.mxu0 0.0
    %3650 = vmatprep.subr.mxu0 0.0
    %3651 = vmatpush1.msra.mxu0 0.0
    %3652 = vmatprep.subr.mxu0 0.0
    %3653 = vmatpush1.msra.mxu0 0.0
    %3654 = vmatprep.subr.mxu0 0.0
    %3655 = vmatpush1.msra.mxu0 0.0
    %3656 = vmatprep.subr.mxu0 0.0
    %3657 = vmatpush1.msra.mxu0 0.0
    %3658 = vmatprep.subr.mxu0 0.0
    %3659 = vmatpush1.msra.mxu0 0.0
    %3660 = vmatprep.subr.mxu0 0.0
    %3661 = vmatpush1.msra.mxu0 0.0
    %3662 = vmatprep.subr.mxu0 0.0
    %3663 = vmatpush1.msra.mxu0 0.0
    %3664 = vmatprep.subr.mxu0 0.0
    %3665 = vmatpush1.msra.mxu0 0.0
    %3666 = vmatprep.subr.mxu0 0.0
    %3667 = vmatpush1.msra.mxu0 0.0
    %3668 = vmatprep.subr.mxu0 0.0
    %3669 = vmatpush1.msra.mxu0 0.0
    %3670 = vmatprep.subr.mxu0 0.0
    %3671 = vmatpush1.msra.mxu0 0.0
    %3672 = vmatprep.subr.mxu0 0.0
    %3673 = vmatpush1.msra.mxu0 0.0
    %3674 = vmatprep.subr.mxu0 0.0
    %3675 = vmatpush1.msra.mxu0 0.0
    %3676 = vmatprep.subr.mxu0 0.0
    %3677 = vmatpush1.msra.mxu0 0.0
    %3678 = vmatprep.subr.mxu0 0.0
    %3679 = vmatpush1.msra.mxu0 0.0
    %3680 = vmatprep.subr.mxu0 0.0
    %3681 = vmatpush1.msra.mxu0 0.0
    %3682 = vmatprep.subr.mxu0 0.0
    %3683 = vmatpush1.msra.mxu0 0.0
    %3684 = vmatprep.subr.mxu0 0.0
    %3685 = vmatpush1.msra.mxu0 0.0
    %3686 = vmatprep.subr.mxu0 0.0
    %3687 = vmatpush1.msra.mxu0 0.0
    %3688 = vmatprep.subr.mxu0 0.0
    %3689 = vmatpush1.msra.mxu0 0.0
    %3690 = vmatprep.subr.mxu0 0.0
    %3691 = vmatpush1.msra.mxu0 0.0
    %3692 = vmatprep.subr.mxu0 0.0
    %3693 = vmatpush1.msra.mxu0 0.0
    %3694 = vmatprep.subr.mxu0 0.0
    %3695 = vmatpush1.msra.mxu0 0.0
    %3696 = vmatprep.mubr.f32.mxu0 0.0
    %3697 = vmatmul.mubr.f32.gmra.mrb[0].mxu0 %v3630
    %v3698 = vpop.f32.mrb[0].mxu0
    %v3699 = vadd.f32 0.0, %v3698
    %v3700 = vpop.f32.mrb[0].mxu0
    %3701 = vdwg.mxu0
    %3702 = vrot.lane.b32.xlu0 %v411, 100
    %v3703 = vpop.permute.xlu0 %3702
    %3704 = vrot.lane.b32.xlu0 %v416, 100
    %v3705 = vpop.permute.xlu0 %3704
    %v3709 = vsel %vm580, %v3622, 0
    %3711 = vmatprep.subr.mxu0 0.0
    %3712 = vmatpush1.msra.mxu0 %v3703
    %3713 = vmatprep.subr.mxu0 0.0
    %3714 = vmatpush1.msra.mxu0 %v3705
    %3715 = vmatprep.subr.mxu0 0.0
    %3716 = vmatpush1.msra.mxu0 0.0
    %3717 = vmatprep.subr.mxu0 0.0
    %3718 = vmatpush1.msra.mxu0 0.0
    %3719 = vmatprep.subr.mxu0 0.0
    %3720 = vmatpush1.msra.mxu0 0.0
    %3721 = vmatprep.subr.mxu0 0.0
    %3722 = vmatpush1.msra.mxu0 0.0
    %3723 = vmatprep.subr.mxu0 0.0
    %3724 = vmatpush1.msra.mxu0 0.0
    %3725 = vmatprep.subr.mxu0 0.0
    %3726 = vmatpush1.msra.mxu0 0.0
    %3727 = vmatprep.subr.mxu0 0.0
    %3728 = vmatpush1.msra.mxu0 0.0
    %3729 = vmatprep.subr.mxu0 0.0
    %3730 = vmatpush1.msra.mxu0 0.0
    %3731 = vmatprep.subr.mxu0 0.0
    %3732 = vmatpush1.msra.mxu0 0.0
    %3733 = vmatprep.subr.mxu0 0.0
    %3734 = vmatpush1.msra.mxu0 0.0
    %3735 = vmatprep.subr.mxu0 0.0
    %3736 = vmatpush1.msra.mxu0 0.0
    %3737 = vmatprep.subr.mxu0 0.0
    %3738 = vmatpush1.msra.mxu0 0.0
    %3739 = vmatprep.subr.mxu0 0.0
    %3740 = vmatpush1.msra.mxu0 0.0
    %3741 = vmatprep.subr.mxu0 0.0
    %3742 = vmatpush1.msra.mxu0 0.0
    %3743 = vmatprep.subr.mxu0 0.0
    %3744 = vmatpush1.msra.mxu0 0.0
    %3745 = vmatprep.subr.mxu0 0.0
    %3746 = vmatpush1.msra.mxu0 0.0
    %3747 = vmatprep.subr.mxu0 0.0
    %3748 = vmatpush1.msra.mxu0 0.0
    %3749 = vmatprep.subr.mxu0 0.0
    %3750 = vmatpush1.msra.mxu0 0.0
    %3751 = vmatprep.subr.mxu0 0.0
    %3752 = vmatpush1.msra.mxu0 0.0
    %3753 = vmatprep.subr.mxu0 0.0
    %3754 = vmatpush1.msra.mxu0 0.0
    %3755 = vmatprep.subr.mxu0 0.0
    %3756 = vmatpush1.msra.mxu0 0.0
    %3757 = vmatprep.subr.mxu0 0.0
    %3758 = vmatpush1.msra.mxu0 0.0
    %3759 = vmatprep.subr.mxu0 0.0
    %3760 = vmatpush1.msra.mxu0 0.0
    %3761 = vmatprep.subr.mxu0 0.0
    %3762 = vmatpush1.msra.mxu0 0.0
    %3763 = vmatprep.subr.mxu0 0.0
    %3764 = vmatpush1.msra.mxu0 0.0
    %3765 = vmatprep.subr.mxu0 0.0
    %3766 = vmatpush1.msra.mxu0 0.0
    %3767 = vmatprep.subr.mxu0 0.0
    %3768 = vmatpush1.msra.mxu0 0.0
    %3769 = vmatprep.subr.mxu0 0.0
    %3770 = vmatpush1.msra.mxu0 0.0
    %3771 = vmatprep.subr.mxu0 0.0
    %3772 = vmatpush1.msra.mxu0 0.0
    %3773 = vmatprep.subr.mxu0 0.0
    %3774 = vmatpush1.msra.mxu0 0.0
    %3775 = vmatprep.mubr.f32.mxu0 0.0
    %3776 = vmatmul.mubr.f32.gmra.mrb[0].mxu0 %v3709
    %v3777 = vpop.f32.mrb[0].mxu0
    %v3778 = vadd.f32 0.0, %v3777
    %v3779 = vpop.f32.mrb[0].mxu0
    %3780 = vdwg.mxu0
    %v3781 = vld [vmem:[#allocation11 + $0x1c] sm:$0xf]
    %v3783 = vsel %vm419, %v3699, 0
    %v3786 = vsel %vm419, %v3778, 0
    %v3789 = vsel %vm1107, %v3781, 0
    %3791 = vmatprep.subr.mxu0 0.0
    %3792 = vmatpush1.msra.mxu0 %v3789
    %3793 = vmatprep.subr.mxu0 0.0
    %3794 = vmatpush1.msra.mxu0 0.0
    %3795 = vmatprep.subr.mxu0 0.0
    %3796 = vmatpush1.msra.mxu0 0.0
    %3797 = vmatprep.subr.mxu0 0.0
    %3798 = vmatpush1.msra.mxu0 0.0
    %3799 = vmatprep.subr.mxu0 0.0
    %3800 = vmatpush1.msra.mxu0 0.0
    %3801 = vmatprep.subr.mxu0 0.0
    %3802 = vmatpush1.msra.mxu0 0.0
    %3803 = vmatprep.subr.mxu0 0.0
    %3804 = vmatpush1.msra.mxu0 0.0
    %3805 = vmatprep.subr.mxu0 0.0
    %3806 = vmatpush1.msra.mxu0 0.0
    %3807 = vmatprep.subr.mxu0 0.0
    %3808 = vmatpush1.msra.mxu0 0.0
    %3809 = vmatprep.subr.mxu0 0.0
    %3810 = vmatpush1.msra.mxu0 0.0
    %3811 = vmatprep.subr.mxu0 0.0
    %3812 = vmatpush1.msra.mxu0 0.0
    %3813 = vmatprep.subr.mxu0 0.0
    %3814 = vmatpush1.msra.mxu0 0.0
    %3815 = vmatprep.subr.mxu0 0.0
    %3816 = vmatpush1.msra.mxu0 0.0
    %3817 = vmatprep.subr.mxu0 0.0
    %3818 = vmatpush1.msra.mxu0 0.0
    %3819 = vmatprep.subr.mxu0 0.0
    %3820 = vmatpush1.msra.mxu0 0.0
    %3821 = vmatprep.subr.mxu0 0.0
    %3822 = vmatpush1.msra.mxu0 0.0
    %3823 = vmatprep.subr.mxu0 0.0
    %3824 = vmatpush1.msra.mxu0 0.0
    %3825 = vmatprep.subr.mxu0 0.0
    %3826 = vmatpush1.msra.mxu0 0.0
    %3827 = vmatprep.subr.mxu0 0.0
    %3828 = vmatpush1.msra.mxu0 0.0
    %3829 = vmatprep.subr.mxu0 0.0
    %3830 = vmatpush1.msra.mxu0 0.0
    %3831 = vmatprep.subr.mxu0 0.0
    %3832 = vmatpush1.msra.mxu0 0.0
    %3833 = vmatprep.subr.mxu0 0.0
    %3834 = vmatpush1.msra.mxu0 0.0
    %3835 = vmatprep.subr.mxu0 0.0
    %3836 = vmatpush1.msra.mxu0 0.0
    %3837 = vmatprep.subr.mxu0 0.0
    %3838 = vmatpush1.msra.mxu0 0.0
    %3839 = vmatprep.subr.mxu0 0.0
    %3840 = vmatpush1.msra.mxu0 0.0
    %3841 = vmatprep.subr.mxu0 0.0
    %3842 = vmatpush1.msra.mxu0 0.0
    %3843 = vmatprep.subr.mxu0 0.0
    %3844 = vmatpush1.msra.mxu0 0.0
    %3845 = vmatprep.subr.mxu0 0.0
    %3846 = vmatpush1.msra.mxu0 0.0
    %3847 = vmatprep.subr.mxu0 0.0
    %3848 = vmatpush1.msra.mxu0 0.0
    %3849 = vmatprep.subr.mxu0 0.0
    %3850 = vmatpush1.msra.mxu0 0.0
    %3851 = vmatprep.subr.mxu0 0.0
    %3852 = vmatpush1.msra.mxu0 0.0
    %3853 = vmatprep.subr.mxu0 0.0
    %3854 = vmatpush1.msra.mxu0 0.0
    %3855 = vmatprep.mubr.f32.mxu0 0.0
    %3856 = vmatmul.mubr.f32.gmra.mrb[0].mxu0 %v3783
    %v3857 = vpop.f32.mrb[0].mxu0
    %v3858 = vadd.f32 0.0, %v3857
    %v3859 = vpop.f32.mrb[0].mxu0
    %3860 = vmatprep.mubr.f32.mxu0 0.0
    %3861 = vmatmul.mubr.f32.gmra.mrb[0].mxu0 %v3786
    %v3862 = vpop.f32.mrb[0].mxu0
    %v3863 = vadd.f32 0.0, %v3862
    %v3864 = vpop.f32.mrb[0].mxu0
    %3865 = vdwg.mxu0
    %v3866 = vadd.f32 %v3433, %v3858
    %v3867 = vadd.f32 %v3434, %v3863
    %v3868 = vld [vmem:[#allocation13] sm:$0x1]
    %v3870 = vlaneseq
    %v3871 = vshrl.u32 %v3870, 7
    %v3872 = vsub.s32 0, %v3871
    %v3873 = vrot.slane %v3868, %v3872
    %v3875 = vadd.f32 %v3866, %v3873
    %v3876 = vadd.f32 %v3867, %v3873
    %3877 = vst [vmem:[#allocation14] sm:$0xff] %v3875
    %3878 = vst [vmem:[#allocation14 + $0x8] sm:$0xff] %v3876
    // Predicated region
    $region58: #{tpu_custom_call.1} parent=1 // pred_check
      _
    $region59: #{tpu_custom_call.1} parent=1 // pred_check_branch
      %3880 = sbr.rel (0) target = $region61
    $region60: #{tpu_custom_call.1} parent=1 // pred_region
      %s3882 = ssub.s32 256, 256
      %3883 = vsyncadd [#allocation4], %s3882
      %s3884 = sshll.u32 [#allocation14], 4
      %s3885 = int_to_ptr.vmem [resolvable:$true] %s3884
      %3890 = dma.vmem_to_hbm [thread:$0]  %s3885, 256, %s7, [#allocation4], 128, 128, 8
    $region61: #{tpu_custom_call.1} parent=1 // pred_fallthru
      _
    // Predicated region
    $region62: #{tpu_custom_call.1} parent=1 // pred_check
      _
    $region63: #{tpu_custom_call.1} parent=1 // pred_check_branch
      %3892 = sbr.rel (0) target = $region65
    $region64: #{tpu_custom_call.1} parent=1 // pred_region
      %3893 = dma.done [#allocation4], 256
    $region65: #{tpu_custom_call.1} parent=1 // pred_fallthru
      _
    %3894 = vsyncpa [#allocation3], 1
    %3895 = vsyncpa [#allocation6], 1
    %3896 = vsyncpa [#allocation9], 1
    %3897 = vsyncpa [#allocation12], 1
    %3898 = vsyncpa [#allocation4], 1

</llo_original>
